<compile_context>
chip_gen: v6e
topology: v6e:2x2x1
jax: 0.10.0
libtpu: 0.0.40
codegen_flags: <defaults>
</compile_context>

<pallas_src>
import math
import numpy as np
import jax
import jax.numpy as jnp
from jax import lax
from jax.experimental import pallas as pl
from jax.experimental.pallas import tpu as pltpu


# ---------------------------------------------------------------------------------
# Kaiser-windowed sinc anti-alias filter (matches torch.kaiser_window / torch.sinc)
# ---------------------------------------------------------------------------------
def kaiser_sinc_filter1d(cutoff, half_width, kernel_size):
    even = kernel_size % 2 == 0
    half_size = kernel_size // 2
    delta_f = 4 * half_width
    A = 2.285 * (half_size - 1) * math.pi * delta_f + 7.95
    if A > 50.0:
        beta = 0.1102 * (A - 8.7)
    elif A >= 21.0:
        beta = 0.5842 * (A - 21) ** 0.4 + 0.07886 * (A - 21.0)
    else:
        beta = 0.0
    window = np.kaiser(kernel_size, beta)  # == torch.kaiser_window(..., periodic=False)
    if even:
        time = np.arange(-half_size, half_size) + 0.5
    else:
        time = np.arange(kernel_size) - half_size
    if cutoff == 0:
        filt = np.zeros_like(time, dtype=np.float64)
    else:
        filt = 2 * cutoff * window * np.sinc(2 * cutoff * time)  # np.sinc == torch.sinc
        filt = filt / filt.sum()
    return filt.astype(np.float32)  # (kernel_size,)


# ---------------------------------------------------------------------------------
# helpers
# ---------------------------------------------------------------------------------
def _round_up(n, m):
    return ((n + m - 1) // m) * m


def _vmem_budget():
    # per-generation scoped-VMEM budget: ~3/4 of physical (=> ~48MiB v7x, ~96MiB v5e/v6e)
    try:
        cap = int(pltpu.get_tpu_info().vmem_capacity_bytes)
    except Exception:
        cap = 64 << 20  # conservative (v7x-sized) fallback
    return max(16 << 20, (cap * 3) // 4)


def _row_block(rows, row_bytes, budget, limit=512):
    """Largest multiple-of-8 row tile fitting the VMEM budget, with >=2 grid steps
    when the row count allows (v7x megacore)."""
    if rows <= 8 or rows % 8 != 0:
        return rows
    fit = max(8, (budget // max(1, row_bytes)) // 8 * 8)
    br = min(rows, limit, fit)
    if br >= rows:
        br = max(8, _round_up(pl.cdiv(rows, 2), 8))
    return min(br, rows)


def _cout_block(c):
    if c < 16 or c % 8 != 0:
        return c
    return min(256, _round_up(pl.cdiv(c, 2), 8))


# ---------------------------------------------------------------------------------
# Kernel A: fused Activation1d = 2x polyphase upsample -> SnakeBeta -> stride-2 lowpass
# ---------------------------------------------------------------------------------
def _make_act1d_kernel(ce, co, gev, god, t_out, T, eps):
    # ce[j] = 2*f[11-2j], co[j] = 2*f[10-2j]   (upsample polyphase taps, ratio-scaled)
    # gev[j] = f[2j+1], god[j] = f[2j]          (downsample polyphase taps)
    # Input column i of x_ref holds x_clamp[i-8] (replicate-extended input).
    # Intermediate frame: column c of the phase arrays corresponds to phase index m = c-4.
    Wm = t_out + 8

    def kernel(x_ref, alpha_ref, beta_ref, o_ref):
        xv = x_ref[...]                                  # (br, t_out + 16)
        alpha = alpha_ref[...]                           # (br, 1) per-channel
        inv_beta = 1.0 / (beta_ref[...] + eps)

        # 7 shifted views of the input, shared by the two upsample phases
        xs = [xv[:, d: d + Wm] for d in range(1, 8)]

        ev = jnp.zeros((xv.shape[0], Wm), jnp.float32)
        od = jnp.zeros((xv.shape[0], Wm), jnp.float32)
        for j in range(6):                               # static 6-tap unroll per phase
            ev = ev + ce[j] * xs[j]                      # uses x_clamp[m + j - 3]
            od = od + co[j] * xs[j + 1]                  # uses x_clamp[m + j - 2]

        # SnakeBeta fused on both phases (x + 1/b * sin^2(a*x))
        sev = ev + inv_beta * jnp.sin(ev * alpha) ** 2
        sod = od + inv_beta * jnp.sin(od * alpha) ** 2

        # Replicate padding of the 2x-rate signal crosses phases at the edges:
        #   sample index < 0    -> s[0]      = sev(m=0)    (column 4)
        #   sample index >= 2T  -> s[2T-1]   = sod(m=T-1)  (column T+3)
        lane = lax.broadcasted_iota(jnp.int32, (1, Wm), 1)
        left = sev[:, 4:5]
        right = sod[:, T + 3: T + 4]
        sev = jnp.where(lane < 4, left, jnp.where(lane >= T + 4, right, sev))
        sod = jnp.where(lane < 4, left, jnp.where(lane >= T + 4, right, sod))

        # stride-2 anti-alias low-pass: y[t] = sum_j f[2j+1]*sev(t+j-2) + f[2j]*sod(t+j-3)
        acc = jnp.zeros(o_ref.shape, jnp.float32)
        for j in range(6):
            acc = acc + gev[j] * sev[:, j + 2: j + 2 + t_out]
            acc = acc + god[j] * sod[:, j + 1: j + 1 + t_out]
        o_ref[...] = acc.astype(o_ref.dtype)

    return kernel


def activation1d_snakebeta(x, alpha, beta, filt, *, alpha_logscale=False, eps=1e-9):
    """Activation1d: UpSample1d(2) -> SnakeBeta -> DownSample1d(2), one fused kernel."""
    B, C, T = x.shape
    rows = B * C
    if alpha_logscale:
        alpha = jnp.exp(alpha)
        beta = jnp.exp(beta)
    alpha_rows = jnp.tile(alpha, (B,)).reshape(rows, 1).astype(jnp.float32)
    beta_rows = jnp.tile(beta, (B,)).reshape(rows, 1).astype(jnp.float32)

    t_out = _round_up(T, 128)            # lane-dense output width
    Wx = t_out + 16                      # 8-sample replicate halo on each side (+ lane pad)
    # single jnp.pad per call: replicate halo + lane-density pad in one HBM materialization
    xp = jnp.pad(x.reshape(rows, T), ((0, 0), (8, Wx - T - 8)), mode="edge")

    ce = tuple(float(2.0 * filt[11 - 2 * j]) for j in range(6))
    co = tuple(float(2.0 * filt[10 - 2 * j]) for j in range(6))
    gev = tuple(float(filt[2 * j + 1]) for j in range(6))
    god = tuple(float(filt[2 * j]) for j in range(6))

    budget = _vmem_budget()
    # per-row VMEM estimate: double-buffered I/O + ~14 live full-width temporaries
    row_bytes = 4 * (2 * (Wx + t_out + 2) + 14 * (t_out + 8))
    br = _row_block(rows, row_bytes, budget)
    grid = (pl.cdiv(rows, br),)

    out = pl.pallas_call(
        _make_act1d_kernel(ce, co, gev, god, t_out, T, eps),
        out_shape=jax.ShapeDtypeStruct((rows, t_out), x.dtype),
        grid=grid,
        in_specs=[pl.BlockSpec((br, Wx), lambda i: (i, 0)),
                  pl.BlockSpec((br, 1), lambda i: (i, 0)),
                  pl.BlockSpec((br, 1), lambda i: (i, 0))],
        out_specs=pl.BlockSpec((br, t_out), lambda i: (i, 0)),
        compiler_params=pltpu.CompilerParams(
            dimension_semantics=("parallel",),
            vmem_limit_bytes=budget),
    )(xp, alpha_rows, beta_rows)
    return out[:, :T].reshape(B, C, T)


# ---------------------------------------------------------------------------------
# Kernel C: dense dilated Conv1d (k=3), taps folded into one K=3C MXU matmul,
#           bias (and optional residual) fused.
# ---------------------------------------------------------------------------------
def _make_conv1d_kernel(dilation, t_out, with_residual):
    def kernel(*refs):
        if with_residual:
            x_ref, w_ref, b_ref, r_ref, o_ref = refs
        else:
            x_ref, w_ref, b_ref, o_ref = refs
        xv = x_ref[0]                                           # (C_in, t_in)
        # stack the 3 dilation-shifted windows on sublanes -> (3*C_in, t_out)
        slab = jnp.concatenate(
            [xv[:, k * dilation: k * dilation + t_out] for k in range(3)], axis=0)
        slab = slab.astype(w_ref.dtype)
        acc = jnp.dot(w_ref[...], slab, preferred_element_type=jnp.float32)
        acc = acc + b_ref[...]                                  # (C_out_blk, 1) broadcast
        if with_residual:
            acc = acc + r_ref[0]
        o_ref[0] = acc.astype(o_ref.dtype)
    return kernel


def conv1d_weightnorm(x, v, g, b, *, dilation, residual=None, compute_dtype=jnp.float32):
    """F.conv1d(x, weight_norm(v, g), bias=b, dilation=d, padding=d) (+ optional residual)."""
    B, C, T = x.shape
    # weight-norm reparameterization (thin XLA glue): w = g * v / ||v||_(in,k)
    norm = jnp.sqrt(jnp.sum(v * v, axis=(1, 2), keepdims=True))
    w = g.reshape(-1, 1, 1) * v / norm                           # (C_out, C_in, 3)
    # contraction layout: W2[co, k*C_in + ci] = w[co, ci, k]
    w2 = jnp.transpose(w, (0, 2, 1)).reshape(C, 3 * C).astype(compute_dtype)

    t_out = _round_up(T, 128)
    t_in = t_out + 2 * dilation
    # zero padding (module pads by `dilation`) + lane padding in one jnp.pad
    xp = jnp.pad(x, ((0, 0), (0, 0), (dilation, t_in - T - dilation))).astype(compute_dtype)
    bias2 = b.reshape(C, 1).astype(jnp.float32)

    co_blk = _cout_block(C)
    n_co = pl.cdiv(C, co_blk)
    budget = _vmem_budget()

    args = [xp, w2, bias2]
    in_specs = [pl.BlockSpec((1, C, t_in), lambda i, j: (i, 0, 0)),
                pl.BlockSpec((co_blk, 3 * C), lambda i, j: (j, 0)),
                pl.BlockSpec((co_blk, 1), lambda i, j: (j, 0))]
    with_res = residual is not None
    if with_res:
        r = jnp.pad(residual, ((0, 0), (0, 0), (0, t_out - T)))
        args.append(r)
        in_specs.append(pl.BlockSpec((1, co_blk, t_out), lambda i, j: (i, j, 0)))

    out = pl.pallas_call(
        _make_conv1d_kernel(dilation, t_out, with_res),
        out_shape=jax.ShapeDtypeStruct((B, C, t_out), x.dtype),
        grid=(B, n_co),
        in_specs=in_specs,
        out_specs=pl.BlockSpec((1, co_blk, t_out), lambda i, j: (i, j, 0)),
        compiler_params=pltpu.CompilerParams(
            dimension_semantics=("parallel", "parallel"),
            vmem_limit_bytes=budget),
    )(*args)
    return out[:, :, :T]


# ---------------------------------------------------------------------------------
# AMPBlock1 forward (activation='snakebeta'); residual add fused into convs2 kernel
# ---------------------------------------------------------------------------------
def amp_block1_forward(x, params, filt, *, dilations=(1, 3, 5), alpha_logscale=False):
    for l in range(len(dilations)):
        al1, bt1 = params["acts"][2 * l]
        al2, bt2 = params["acts"][2 * l + 1]
        v1, g1, b1 = params["convs1"][l]
        v2, g2, b2 = params["convs2"][l]
        xt = activation1d_snakebeta(x, al1, bt1, filt, alpha_logscale=alpha_logscale)
        xt = conv1d_weightnorm(xt, v1, g1, b1, dilation=dilations[l])
        xt = activation1d_snakebeta(xt, al2, bt2, filt, alpha_logscale=alpha_logscale)
        x = conv1d_weightnorm(xt, v2, g2, b2, dilation=1, residual=x)
    return x


# ---------------------------------------------------------------------------------
# pure-JAX reference (mirrors the PyTorch forward with lax convolutions)
# ---------------------------------------------------------------------------------
def _ref_snakebeta(x, alpha, beta, alpha_logscale=False, eps=1e-9):
    a = alpha.reshape(1, -1, 1)
    bt = beta.reshape(1, -1, 1)
    if alpha_logscale:
        a = jnp.exp(a)
        bt = jnp.exp(bt)
    return x + (1.0 / (bt + eps)) * jnp.sin(x * a) ** 2


def _ref_upsample2x(x, filt):
    B, C, T = x.shape
    K = filt.shape[0]
    f = jnp.asarray(filt)
    xp = jnp.pad(x, ((0, 0), (0, 0), (5, 5)), mode="edge")
    # conv_transpose1d(stride=2) == lhs-dilated cross-correlation with flipped kernel
    w = jnp.broadcast_to(f[::-1].reshape(1, 1, K), (C, 1, K))
    y = lax.conv_general_dilated(
        xp, w, window_strides=(1,), padding=[(K - 1, K - 1)], lhs_dilation=(2,),
        dimension_numbers=("NCH", "OIH", "NCH"), feature_group_count=C,
        precision=lax.Precision.HIGHEST)
    y = 2.0 * y
    return y[..., 15:-15]


def _ref_downsample2x(x, filt):
    B, C, _ = x.shape
    K = filt.shape[0]
    f = jnp.asarray(filt)
    xp = jnp.pad(x, ((0, 0), (0, 0), (5, 6)), mode="edge")
    w = jnp.broadcast_to(f.reshape(1, 1, K), (C, 1, K))
    return lax.conv_general_dilated(
        xp, w, window_strides=(2,), padding="VALID",
        dimension_numbers=("NCH", "OIH", "NCH"), feature_group_count=C,
        precision=lax.Precision.HIGHEST)


def _ref_conv1d(x, v, g, b, dilation):
    norm = jnp.sqrt(jnp.sum(v * v, axis=(1, 2), keepdims=True))
    w = g.reshape(-1, 1, 1) * v / norm
    y = lax.conv_general_dilated(
        x, w, window_strides=(1,), padding=[(dilation, dilation)],
        rhs_dilation=(dilation,), dimension_numbers=("NCH", "OIH", "NCH"),
        precision=lax.Precision.HIGHEST)
    return y + b.reshape(1, -1, 1)


def _ref_amp_block1(x, params, filt, dilations, alpha_logscale):
    for l in range(len(dilations)):
        al1, bt1 = params["acts"][2 * l]
        al2, bt2 = params["acts"][2 * l + 1]
        v1, g1, b1 = params["convs1"][l]
        v2, g2, b2 = params["convs2"][l]
        xt = _ref_downsample2x(
            _ref_snakebeta(_ref_upsample2x(x, filt), al1, bt1, alpha_logscale), filt)
        xt = _ref_conv1d(xt, v1, g1, b1, dilations[l])
        xt = _ref_downsample2x(
            _ref_snakebeta(_ref_upsample2x(xt, filt), al2, bt2, alpha_logscale), filt)
        xt = _ref_conv1d(xt, v2, g2, b2, 1)
        x = xt + x
    return x


# ---------------------------------------------------------------------------------
if __name__ == "__main__":
    B, C, T = 2, 32, 16
    dilations = (1, 3, 5)
    alpha_logscale = False  # h.snake_logscale

    # shared anti-alias filter for UpSample1d(2)/DownSample1d(2): cutoff 0.25, hw 0.3, K=12
    filt = kaiser_sinc_filter1d(0.25, 0.3, 12)

    key = jax.random.PRNGKey(0)
    ks = iter(jax.random.split(key, 40))
    x = jax.random.normal(next(ks), (B, C, T), dtype=jnp.float32)

    def mk_conv(k):
        k1, k2, k3 = jax.random.split(k, 3)
        v = 0.01 * jax.random.normal(k1, (C, C, 3), dtype=jnp.float32)   # init_weights std
        g = 0.5 + jax.random.uniform(k2, (C,), dtype=jnp.float32)        # weight_norm gain
        b = 0.1 * jax.random.normal(k3, (C,), dtype=jnp.float32)
        return v, g, b

    def mk_act(k):
        k1, k2 = jax.random.split(k, 2)
        alpha = 0.5 + jax.random.uniform(k1, (C,), dtype=jnp.float32)
        beta = 0.5 + jax.random.uniform(k2, (C,), dtype=jnp.float32)
        return alpha, beta

    params = {
        "convs1": [mk_conv(next(ks)) for _ in range(3)],
        "convs2": [mk_conv(next(ks)) for _ in range(3)],
        "acts": [mk_act(next(ks)) for _ in range(6)],
    }

    out = amp_block1_forward(x, params, filt, dilations=dilations,
                             alpha_logscale=alpha_logscale)
    out = jax.block_until_ready(out)

    ref = _ref_amp_block1(x, params, filt, dilations, alpha_logscale)
    assert out.shape == (B, C, T), out.shape
    err = float(jnp.max(jnp.abs(out - ref)))
    # tolerance covers MXU f32 matmul vs HIGHEST-precision lax reference
    assert jnp.allclose(out, ref, atol=2e-2, rtol=2e-2), err

    print("KERNEL_OK")
</pallas_src>

<mosaic_0001>
module attributes {stable_mosaic.version = 11 : i64} {
  func.func @kernel(%arg0: i32, %arg1: memref<32x144xf32, #tpu.memory_space<vmem>>, %arg2: memref<32x1xf32, #tpu.memory_space<vmem>>, %arg3: memref<32x1xf32, #tpu.memory_space<vmem>>, %arg4: memref<32x128xf32, #tpu.memory_space<vmem>>) attributes {dimension_semantics = [#tpu.dimension_semantics<parallel>], iteration_bounds = array<i64: 2>, scalar_prefetch = 0 : i64, scratch_operands = 0 : i64, tpu.core_type = #tpu.core_type<tc>, window_params = [{transform_indices = @transform_0, window_bounds = array<i64: 32, 144>}, {transform_indices = @transform_1, window_bounds = array<i64: 32, 1>}, {transform_indices = @transform_2, window_bounds = array<i64: 32, 1>}, {transform_indices = @transform_3, window_bounds = array<i64: 32, 128>}]} {
    %c0 = arith.constant 0 : index
    %c0_0 = arith.constant 0 : index
    %0 = vector.load %arg1[%c0, %c0_0] : memref<32x144xf32, #tpu.memory_space<vmem>>, vector<32x144xf32>
    %c0_1 = arith.constant 0 : index
    %c0_2 = arith.constant 0 : index
    %1 = vector.load %arg2[%c0_1, %c0_2] : memref<32x1xf32, #tpu.memory_space<vmem>>, vector<32x1xf32>
    %c0_3 = arith.constant 0 : index
    %c0_4 = arith.constant 0 : index
    %2 = vector.load %arg3[%c0_3, %c0_4] : memref<32x1xf32, #tpu.memory_space<vmem>>, vector<32x1xf32>
    %cst = arith.constant 9.99999971E-10 : f32
    %3 = vector.broadcast %cst : f32 to vector<32x1xf32>
    %4 = arith.addf %2, %3 : vector<32x1xf32>
    %cst_5 = arith.constant 1.000000e+00 : f32
    %5 = vector.broadcast %cst_5 : f32 to vector<32x1xf32>
    %6 = arith.divf %5, %4 : vector<32x1xf32>
    %7 = vector.extract_strided_slice %0 {offsets = [0, 1], sizes = [32, 136], strides = [1, 1]} : vector<32x144xf32> to vector<32x136xf32>
    %8 = vector.extract_strided_slice %0 {offsets = [0, 2], sizes = [32, 136], strides = [1, 1]} : vector<32x144xf32> to vector<32x136xf32>
    %9 = vector.extract_strided_slice %0 {offsets = [0, 3], sizes = [32, 136], strides = [1, 1]} : vector<32x144xf32> to vector<32x136xf32>
    %10 = vector.extract_strided_slice %0 {offsets = [0, 4], sizes = [32, 136], strides = [1, 1]} : vector<32x144xf32> to vector<32x136xf32>
    %11 = vector.extract_strided_slice %0 {offsets = [0, 5], sizes = [32, 136], strides = [1, 1]} : vector<32x144xf32> to vector<32x136xf32>
    %12 = vector.extract_strided_slice %0 {offsets = [0, 6], sizes = [32, 136], strides = [1, 1]} : vector<32x144xf32> to vector<32x136xf32>
    %13 = vector.extract_strided_slice %0 {offsets = [0, 7], sizes = [32, 136], strides = [1, 1]} : vector<32x144xf32> to vector<32x136xf32>
    %cst_6 = arith.constant 0.000000e+00 : f32
    %14 = vector.broadcast %cst_6 : f32 to vector<32x136xf32>
    %cst_7 = arith.constant 0.000000e+00 : f32
    %15 = vector.broadcast %cst_7 : f32 to vector<32x136xf32>
    %cst_8 = arith.constant 0.00405793311 : f32
    %16 = vector.broadcast %cst_8 : f32 to vector<32x136xf32>
    %17 = arith.mulf %16, %7 : vector<32x136xf32>
    %18 = arith.addf %14, %17 : vector<32x136xf32>
    %cst_9 = arith.constant 0.0187789276 : f32
    %19 = vector.broadcast %cst_9 : f32 to vector<32x136xf32>
    %20 = arith.mulf %19, %8 : vector<32x136xf32>
    %21 = arith.addf %15, %20 : vector<32x136xf32>
    %cst_10 = arith.constant -0.0510869287 : f32
    %22 = vector.broadcast %cst_10 : f32 to vector<32x136xf32>
    %23 = arith.mulf %22, %8 : vector<32x136xf32>
    %24 = arith.addf %18, %23 : vector<32x136xf32>
    %cst_11 = arith.constant -0.115314752 : f32
    %25 = vector.broadcast %cst_11 : f32 to vector<32x136xf32>
    %26 = arith.mulf %25, %9 : vector<32x136xf32>
    %27 = arith.addf %21, %26 : vector<32x136xf32>
    %cst_12 = arith.constant 0.257145226 : f32
    %28 = vector.broadcast %cst_12 : f32 to vector<32x136xf32>
    %29 = arith.mulf %28, %9 : vector<32x136xf32>
    %30 = arith.addf %24, %29 : vector<32x136xf32>
    %cst_13 = arith.constant 0.886419594 : f32
    %31 = vector.broadcast %cst_13 : f32 to vector<32x136xf32>
    %32 = arith.mulf %31, %10 : vector<32x136xf32>
    %33 = arith.addf %27, %32 : vector<32x136xf32>
    %cst_14 = arith.constant 0.886419594 : f32
    %34 = vector.broadcast %cst_14 : f32 to vector<32x136xf32>
    %35 = arith.mulf %34, %10 : vector<32x136xf32>
    %36 = arith.addf %30, %35 : vector<32x136xf32>
    %cst_15 = arith.constant 0.257145226 : f32
    %37 = vector.broadcast %cst_15 : f32 to vector<32x136xf32>
    %38 = arith.mulf %37, %11 : vector<32x136xf32>
    %39 = arith.addf %33, %38 : vector<32x136xf32>
    %cst_16 = arith.constant -0.115314752 : f32
    %40 = vector.broadcast %cst_16 : f32 to vector<32x136xf32>
    %41 = arith.mulf %40, %11 : vector<32x136xf32>
    %42 = arith.addf %36, %41 : vector<32x136xf32>
    %cst_17 = arith.constant -0.0510869287 : f32
    %43 = vector.broadcast %cst_17 : f32 to vector<32x136xf32>
    %44 = arith.mulf %43, %12 : vector<32x136xf32>
    %45 = arith.addf %39, %44 : vector<32x136xf32>
    %cst_18 = arith.constant 0.0187789276 : f32
    %46 = vector.broadcast %cst_18 : f32 to vector<32x136xf32>
    %47 = arith.mulf %46, %12 : vector<32x136xf32>
    %48 = arith.addf %42, %47 : vector<32x136xf32>
    %cst_19 = arith.constant 0.00405793311 : f32
    %49 = vector.broadcast %cst_19 : f32 to vector<32x136xf32>
    %50 = arith.mulf %49, %13 : vector<32x136xf32>
    %51 = arith.addf %45, %50 : vector<32x136xf32>
    %52 = vector.broadcast %1 : vector<32x1xf32> to vector<32x136xf32>
    %53 = arith.mulf %48, %52 : vector<32x136xf32>
    %54 = math.sin %53 : vector<32x136xf32>
    %55 = arith.mulf %54, %54 : vector<32x136xf32>
    %56 = vector.broadcast %6 : vector<32x1xf32> to vector<32x136xf32>
    %57 = arith.mulf %56, %55 : vector<32x136xf32>
    %58 = arith.addf %48, %57 : vector<32x136xf32>
    %59 = vector.broadcast %1 : vector<32x1xf32> to vector<32x136xf32>
    %60 = arith.mulf %51, %59 : vector<32x136xf32>
    %61 = math.sin %60 : vector<32x136xf32>
    %62 = arith.mulf %61, %61 : vector<32x136xf32>
    %63 = vector.broadcast %6 : vector<32x1xf32> to vector<32x136xf32>
    %64 = arith.mulf %63, %62 : vector<32x136xf32>
    %65 = arith.addf %51, %64 : vector<32x136xf32>
    %66 = tpu.iota {dimensions = array<i32: 1>} : vector<1x136xi32>
    %67 = vector.extract_strided_slice %58 {offsets = [0, 4], sizes = [32, 1], strides = [1, 1]} : vector<32x136xf32> to vector<32x1xf32>
    %68 = vector.extract_strided_slice %65 {offsets = [0, 19], sizes = [32, 1], strides = [1, 1]} : vector<32x136xf32> to vector<32x1xf32>
    %c4_i32 = arith.constant 4 : i32
    %69 = vector.broadcast %c4_i32 : i32 to vector<1x136xi32>
    %70 = arith.cmpi slt, %66, %69 : vector<1x136xi32>
    %c20_i32 = arith.constant 20 : i32
    %71 = vector.broadcast %c20_i32 : i32 to vector<1x136xi32>
    %72 = arith.cmpi sge, %66, %71 : vector<1x136xi32>
    %73 = vector.shape_cast %72 : vector<1x136xi1> to vector<1x136xi1>
    %74 = vector.broadcast %73 : vector<1x136xi1> to vector<32x136xi1>
    %75 = vector.shape_cast %68 : vector<32x1xf32> to vector<32x1xf32>
    %76 = vector.broadcast %75 : vector<32x1xf32> to vector<32x136xf32>
    %77 = arith.select %74, %76, %58 : vector<32x136xi1>, vector<32x136xf32>
    %78 = vector.shape_cast %70 : vector<1x136xi1> to vector<1x136xi1>
    %79 = vector.broadcast %78 : vector<1x136xi1> to vector<32x136xi1>
    %80 = vector.shape_cast %67 : vector<32x1xf32> to vector<32x1xf32>
    %81 = vector.broadcast %80 : vector<32x1xf32> to vector<32x136xf32>
    %82 = arith.select %79, %81, %77 : vector<32x136xi1>, vector<32x136xf32>
    %c4_i32_20 = arith.constant 4 : i32
    %83 = vector.broadcast %c4_i32_20 : i32 to vector<1x136xi32>
    %84 = arith.cmpi slt, %66, %83 : vector<1x136xi32>
    %c20_i32_21 = arith.constant 20 : i32
    %85 = vector.broadcast %c20_i32_21 : i32 to vector<1x136xi32>
    %86 = arith.cmpi sge, %66, %85 : vector<1x136xi32>
    %87 = vector.shape_cast %86 : vector<1x136xi1> to vector<1x136xi1>
    %88 = vector.broadcast %87 : vector<1x136xi1> to vector<32x136xi1>
    %89 = vector.shape_cast %68 : vector<32x1xf32> to vector<32x1xf32>
    %90 = vector.broadcast %89 : vector<32x1xf32> to vector<32x136xf32>
    %91 = arith.select %88, %90, %65 : vector<32x136xi1>, vector<32x136xf32>
    %92 = vector.shape_cast %84 : vector<1x136xi1> to vector<1x136xi1>
    %93 = vector.broadcast %92 : vector<1x136xi1> to vector<32x136xi1>
    %94 = vector.shape_cast %67 : vector<32x1xf32> to vector<32x1xf32>
    %95 = vector.broadcast %94 : vector<32x1xf32> to vector<32x136xf32>
    %96 = arith.select %93, %95, %91 : vector<32x136xi1>, vector<32x136xf32>
    %cst_22 = arith.constant 0.000000e+00 : f32
    %97 = vector.broadcast %cst_22 : f32 to vector<32x128xf32>
    %98 = vector.extract_strided_slice %82 {offsets = [0, 2], sizes = [32, 128], strides = [1, 1]} : vector<32x136xf32> to vector<32x128xf32>
    %cst_23 = arith.constant 0.00938946381 : f32
    %99 = vector.broadcast %cst_23 : f32 to vector<32x128xf32>
    %100 = arith.mulf %99, %98 : vector<32x128xf32>
    %101 = arith.addf %97, %100 : vector<32x128xf32>
    %102 = vector.extract_strided_slice %96 {offsets = [0, 1], sizes = [32, 128], strides = [1, 1]} : vector<32x136xf32> to vector<32x128xf32>
    %cst_24 = arith.constant 0.00202896656 : f32
    %103 = vector.broadcast %cst_24 : f32 to vector<32x128xf32>
    %104 = arith.mulf %103, %102 : vector<32x128xf32>
    %105 = arith.addf %101, %104 : vector<32x128xf32>
    %106 = vector.extract_strided_slice %82 {offsets = [0, 3], sizes = [32, 128], strides = [1, 1]} : vector<32x136xf32> to vector<32x128xf32>
    %cst_25 = arith.constant -0.0576573759 : f32
    %107 = vector.broadcast %cst_25 : f32 to vector<32x128xf32>
    %108 = arith.mulf %107, %106 : vector<32x128xf32>
    %109 = arith.addf %105, %108 : vector<32x128xf32>
    %110 = vector.extract_strided_slice %96 {offsets = [0, 2], sizes = [32, 128], strides = [1, 1]} : vector<32x136xf32> to vector<32x128xf32>
    %cst_26 = arith.constant -0.0255434643 : f32
    %111 = vector.broadcast %cst_26 : f32 to vector<32x128xf32>
    %112 = arith.mulf %111, %110 : vector<32x128xf32>
    %113 = arith.addf %109, %112 : vector<32x128xf32>
    %114 = vector.extract_strided_slice %82 {offsets = [0, 4], sizes = [32, 128], strides = [1, 1]} : vector<32x136xf32> to vector<32x128xf32>
    %cst_27 = arith.constant 0.443209797 : f32
    %115 = vector.broadcast %cst_27 : f32 to vector<32x128xf32>
    %116 = arith.mulf %115, %114 : vector<32x128xf32>
    %117 = arith.addf %113, %116 : vector<32x128xf32>
    %118 = vector.extract_strided_slice %96 {offsets = [0, 3], sizes = [32, 128], strides = [1, 1]} : vector<32x136xf32> to vector<32x128xf32>
    %cst_28 = arith.constant 0.128572613 : f32
    %119 = vector.broadcast %cst_28 : f32 to vector<32x128xf32>
    %120 = arith.mulf %119, %118 : vector<32x128xf32>
    %121 = arith.addf %117, %120 : vector<32x128xf32>
    %122 = vector.extract_strided_slice %82 {offsets = [0, 5], sizes = [32, 128], strides = [1, 1]} : vector<32x136xf32> to vector<32x128xf32>
    %cst_29 = arith.constant 0.128572613 : f32
    %123 = vector.broadcast %cst_29 : f32 to vector<32x128xf32>
    %124 = arith.mulf %123, %122 : vector<32x128xf32>
    %125 = arith.addf %121, %124 : vector<32x128xf32>
    %126 = vector.extract_strided_slice %96 {offsets = [0, 4], sizes = [32, 128], strides = [1, 1]} : vector<32x136xf32> to vector<32x128xf32>
    %cst_30 = arith.constant 0.443209797 : f32
    %127 = vector.broadcast %cst_30 : f32 to vector<32x128xf32>
    %128 = arith.mulf %127, %126 : vector<32x128xf32>
    %129 = arith.addf %125, %128 : vector<32x128xf32>
    %130 = vector.extract_strided_slice %82 {offsets = [0, 6], sizes = [32, 128], strides = [1, 1]} : vector<32x136xf32> to vector<32x128xf32>
    %cst_31 = arith.constant -0.0255434643 : f32
    %131 = vector.broadcast %cst_31 : f32 to vector<32x128xf32>
    %132 = arith.mulf %131, %130 : vector<32x128xf32>
    %133 = arith.addf %129, %132 : vector<32x128xf32>
    %134 = vector.extract_strided_slice %96 {offsets = [0, 5], sizes = [32, 128], strides = [1, 1]} : vector<32x136xf32> to vector<32x128xf32>
    %cst_32 = arith.constant -0.0576573759 : f32
    %135 = vector.broadcast %cst_32 : f32 to vector<32x128xf32>
    %136 = arith.mulf %135, %134 : vector<32x128xf32>
    %137 = arith.addf %133, %136 : vector<32x128xf32>
    %138 = vector.extract_strided_slice %82 {offsets = [0, 7], sizes = [32, 128], strides = [1, 1]} : vector<32x136xf32> to vector<32x128xf32>
    %cst_33 = arith.constant 0.00202896656 : f32
    %139 = vector.broadcast %cst_33 : f32 to vector<32x128xf32>
    %140 = arith.mulf %139, %138 : vector<32x128xf32>
    %141 = arith.addf %137, %140 : vector<32x128xf32>
    %142 = vector.extract_strided_slice %96 {offsets = [0, 6], sizes = [32, 128], strides = [1, 1]} : vector<32x136xf32> to vector<32x128xf32>
    %cst_34 = arith.constant 0.00938946381 : f32
    %143 = vector.broadcast %cst_34 : f32 to vector<32x128xf32>
    %144 = arith.mulf %143, %142 : vector<32x128xf32>
    %145 = arith.addf %141, %144 : vector<32x128xf32>
    %c0_35 = arith.constant 0 : index
    %c0_36 = arith.constant 0 : index
    %146 = vector.load %arg4[%c0_35, %c0_36] : memref<32x128xf32, #tpu.memory_space<vmem>>, vector<32x128xf32>
    tpu.vector_store %arg4[%c0_35, %c0_36], %145 {strides = array<i32>} : memref<32x128xf32, #tpu.memory_space<vmem>>, vector<32x128xf32>,
    return
  }
  func.func @transform_0(%arg0: i32) -> (i32, i32) {
    %c0_i32 = arith.constant 0 : i32
    %c0_i32_0 = arith.constant 0 : i32
    return %arg0, %c0_i32 : i32, i32
  }
  func.func @transform_1(%arg0: i32) -> (i32, i32) {
    %c0_i32 = arith.constant 0 : i32
    %c0_i32_0 = arith.constant 0 : i32
    return %arg0, %c0_i32 : i32, i32
  }
  func.func @transform_2(%arg0: i32) -> (i32, i32) {
    %c0_i32 = arith.constant 0 : i32
    %c0_i32_0 = arith.constant 0 : i32
    return %arg0, %c0_i32 : i32, i32
  }
  func.func @transform_3(%arg0: i32) -> (i32, i32) {
    %c0_i32 = arith.constant 0 : i32
    %c0_i32_0 = arith.constant 0 : i32
    return %arg0, %c0_i32 : i32, i32
  }
}

</mosaic_0001>

<llo_original>
// kernel: tpu_custom_call.1
$region0: #{tpu_custom_call.1}
  #allocation0 [shape = 'u32[]', space=smem, size = 0x4, offset = 0x4, fixed_abs, tag = 'smem constant byte address 0x4 - core index']
  #allocation1 [shape = 'u32[144,128]{1,0:T(1,128)}', space=vmem, size = 0x12000, scoped, tag = 'internal scratch']
  %s0 = inlined_call_operand.vmem [shape: f32[64,144], index: 0, kind: input, shape index: {}]
  %s1 = inlined_call_operand.vmem [shape: f32[64,1], index: 1, kind: input, shape index: {}]
  %s2 = inlined_call_operand.vmem [shape: f32[64,1], index: 2, kind: input, shape index: {}]
  %s3 = inlined_call_operand.hbm [shape: f32[64,128], index: 3, kind: output, shape index: {}]
  %s4 = sld [smem:[#allocation0]]
  $region45: #{tpu_custom_call.1} parent=0
    _
  %s6 = ssub.s32 1, %s4
  %s7 = scalar_select 0, %s6, %s4
  $region1: #{tpu_custom_call.1} parent=0
    #allocation2 [shape = 'u8[32768]{0}', space=vmem, size = 0x8000, scoped, tag = 'output window, operand 0']
    #allocation3 [shape = 's32[2]{0}', space=sflag, size = 0x8, scoped, tag = 'scoped memory for tpu_custom_call.1']
    %8 = vsyncpa [#allocation3], 0
    %s9 = scalar_lea.sflag [#allocation3], 1
    %10 = vsyncpa %s9, 0
    loop: start=0, step=1, limit=4
    $region2: #{tpu_custom_call.1} parent=1 // loop_pre_header
      _
    $region3: #{tpu_custom_call.1} parent=1 // loop_header
      %s12 = sphi 0, %s16
      %p13 = scmp.ge.s32.totalorder %s12, 4
      %s22 = sphi 0, %s24
      %s25 = sphi 0, %s22
      %s26 = sphi 0, %s25
      %s42 = sphi 0, %s26
      %s48 = sphi 0, %s50
      %s51 = sphi 0, %s48
      %s52 = sphi 0, %s51
      %s68 = sphi 0, %s52
      %s74 = sphi 0, %s76
      %s77 = sphi 0, %s74
      %s78 = sphi 0, %s77
      %s94 = sphi 0, %s78
      %s100 = sphi 0, %s102
      %s103 = sphi 0, %s100
      %s104 = sphi 0, %s103
      %s120 = sphi 0, %s104
    $region4: #{tpu_custom_call.1} parent=1 // loop_header_branch
      %15 = sbr.rel (%p13) target = $region8
    $region5: #{tpu_custom_call.1} parent=1 // loop_body
      %s17 = ssub.s32 %s12, 1
      %s18 = ssub.s32 %s12, 2
      %s19 = sadd.s32 %s12, 1
      %s20 = ssub.s32 %s12, %s19
      %p21 = scmp.eq.s32.totalorder %s20, 0
      %s23 = sadd.s32 %s22, 1
      %s24 = scalar_select %p21, %s22, %s23
      %p27 = pneg %p21
      %p28 = scmp.eq.s32.totalorder %s12, 1
      %p29 = por %p27, %p28
      %p30 = scmp.ne.s32.totalorder %s22, %s25
      %p31 = scmp.eq.s32.totalorder %s12, 0
      %p32 = por %p30, %p31
      %p33 = scmp.ne.s32.totalorder %s22, %s25
      %p34 = scmp.eq.s32.totalorder %s17, 1
      %p35 = por %p33, %p34
      %p36 = scmp.ne.s32.totalorder %s25, %s26
      %p37 = scmp.eq.s32.totalorder %s17, 0
      %p38 = por %p36, %p37
      %p39 = scmp.ne.s32.totalorder %s25, %s26
      %p40 = scmp.eq.s32.totalorder %s18, 1
      %p41 = por %p39, %p40
      %p43 = scmp.ne.s32.totalorder %s26, %s42
      %p44 = scmp.eq.s32.totalorder %s18, 0
      %p45 = por %p43, %p44
      %s46 = ssub.s32 %s12, %s19
      %p47 = scmp.eq.s32.totalorder %s46, 0
      %s49 = sadd.s32 %s48, 1
      %s50 = scalar_select %p47, %s48, %s49
      %p53 = pneg %p47
      %p54 = scmp.eq.s32.totalorder %s12, 1
      %p55 = por %p53, %p54
      %p56 = scmp.ne.s32.totalorder %s48, %s51
      %p57 = scmp.eq.s32.totalorder %s12, 0
      %p58 = por %p56, %p57
      %p59 = scmp.ne.s32.totalorder %s48, %s51
      %p60 = scmp.eq.s32.totalorder %s17, 1
      %p61 = por %p59, %p60
      %p62 = scmp.ne.s32.totalorder %s51, %s52
      %p63 = scmp.eq.s32.totalorder %s17, 0
      %p64 = por %p62, %p63
      %p65 = scmp.ne.s32.totalorder %s51, %s52
      %p66 = scmp.eq.s32.totalorder %s18, 1
      %p67 = por %p65, %p66
      %p69 = scmp.ne.s32.totalorder %s52, %s68
      %p70 = scmp.eq.s32.totalorder %s18, 0
      %p71 = por %p69, %p70
      %s72 = ssub.s32 %s12, %s19
      %p73 = scmp.eq.s32.totalorder %s72, 0
      %s75 = sadd.s32 %s74, 1
      %s76 = scalar_select %p73, %s74, %s75
      %p79 = pneg %p73
      %p80 = scmp.eq.s32.totalorder %s12, 1
      %p81 = por %p79, %p80
      %p82 = scmp.ne.s32.totalorder %s74, %s77
      %p83 = scmp.eq.s32.totalorder %s12, 0
      %p84 = por %p82, %p83
      %p85 = scmp.ne.s32.totalorder %s74, %s77
      %p86 = scmp.eq.s32.totalorder %s17, 1
      %p87 = por %p85, %p86
      %p88 = scmp.ne.s32.totalorder %s77, %s78
      %p89 = scmp.eq.s32.totalorder %s17, 0
      %p90 = por %p88, %p89
      %p91 = scmp.ne.s32.totalorder %s77, %s78
      %p92 = scmp.eq.s32.totalorder %s18, 1
      %p93 = por %p91, %p92
      %p95 = scmp.ne.s32.totalorder %s78, %s94
      %p96 = scmp.eq.s32.totalorder %s18, 0
      %p97 = por %p95, %p96
      %s98 = ssub.s32 %s12, %s19
      %p99 = scmp.eq.s32.totalorder %s98, 0
      %s101 = sadd.s32 %s100, 1
      %s102 = scalar_select %p99, %s100, %s101
      %p105 = pneg %p99
      %p106 = scmp.eq.s32.totalorder %s12, 1
      %p107 = por %p105, %p106
      %p108 = scmp.ne.s32.totalorder %s100, %s103
      %p109 = scmp.eq.s32.totalorder %s12, 0
      %p110 = por %p108, %p109
      %p111 = scmp.ne.s32.totalorder %s100, %s103
      %p112 = scmp.eq.s32.totalorder %s17, 1
      %p113 = por %p111, %p112
      %p114 = scmp.ne.s32.totalorder %s103, %s104
      %p115 = scmp.eq.s32.totalorder %s17, 0
      %p116 = por %p114, %p115
      %p117 = scmp.ne.s32.totalorder %s103, %s104
      %p118 = scmp.eq.s32.totalorder %s18, 1
      %p119 = por %p117, %p118
      %p121 = scmp.ne.s32.totalorder %s104, %s120
      %p122 = scmp.eq.s32.totalorder %s18, 0
      %p123 = por %p121, %p122
      %p124 = scmp.le.s32.totalorder 1, %s12
      %p125 = scmp.lt.s32.totalorder %s12, 3
      %p126 = pnand %p124, %p125
      %p127 = pneg %p126
      // Predicated region
      $region9: #{tpu_custom_call.1} parent=5 // pred_check
        _
      $region10: #{tpu_custom_call.1} parent=5 // pred_check_branch
        %129 = sbr.rel (%p126) target = $region12
      $region11: #{tpu_custom_call.1} parent=5 // pred_region
        %s130 = ssub.s32 %s12, 1
      $region12: #{tpu_custom_call.1} parent=5 // pred_fallthru
        _
      %p131 = scmp.lt.s32.totalorder %s12, 2
      // Predicated region
      $region13: #{tpu_custom_call.1} parent=5 // pred_check
        %p132 = pneg %p131
      $region14: #{tpu_custom_call.1} parent=5 // pred_check_branch
        %134 = sbr.rel (%p132) target = $region16
      $region15: #{tpu_custom_call.1} parent=5 // pred_region
        // Predicated region
        $region17: #{tpu_custom_call.1} parent=15 // pred_check
          %p135 = pneg %p32
        $region18: #{tpu_custom_call.1} parent=15 // pred_check_branch
          %137 = sbr.rel (%p135) target = $region20
        $region19: #{tpu_custom_call.1} parent=15 // pred_region
          %s138 = smul.u32 4, %s12
          %p139 = scmp.lt.s32.totalorder %s138, 7
          %s140 = scalar_select %p139, %s138, 7
          %s141 = smul.addr %s140, 2
          %s142 = smul.addr %s141, 8
          %s143 = scalar_lea.vmem %s0, %s142
          %s144 = smul.u32 4, %s12
        $region20: #{tpu_custom_call.1} parent=15 // pred_fallthru
          _
        // Predicated region
        $region21: #{tpu_custom_call.1} parent=15 // pred_check
          %p145 = pneg %p58
        $region22: #{tpu_custom_call.1} parent=15 // pred_check_branch
          %147 = sbr.rel (%p145) target = $region24
        $region23: #{tpu_custom_call.1} parent=15 // pred_region
          %s148 = smul.u32 4, %s12
          %p149 = scmp.lt.s32.totalorder %s148, 7
          %s150 = scalar_select %p149, %s148, 7
          %s151 = smul.addr %s150, 8
          %s152 = scalar_lea.vmem %s1, %s151
          %s153 = smul.u32 4, %s12
        $region24: #{tpu_custom_call.1} parent=15 // pred_fallthru
          _
        // Predicated region
        $region25: #{tpu_custom_call.1} parent=15 // pred_check
          %p154 = pneg %p84
        $region26: #{tpu_custom_call.1} parent=15 // pred_check_branch
          %156 = sbr.rel (%p154) target = $region28
        $region27: #{tpu_custom_call.1} parent=15 // pred_region
          %s157 = smul.u32 4, %s12
          %p158 = scmp.lt.s32.totalorder %s157, 7
          %s159 = scalar_select %p158, %s157, 7
          %s160 = smul.addr %s159, 8
          %s161 = scalar_lea.vmem %s2, %s160
          %s162 = smul.u32 4, %s12
        $region28: #{tpu_custom_call.1} parent=15 // pred_fallthru
          _
      $region16: #{tpu_custom_call.1} parent=5 // pred_fallthru
        _
      %p163 = scmp.le.s32.totalorder 1, %s12
      %p164 = scmp.lt.s32.totalorder %s12, 3
      %p165 = pnand %p163, %p164
      %p166 = pneg %p165
      // Predicated region
      $region29: #{tpu_custom_call.1} parent=5 // pred_check
        _
      $region30: #{tpu_custom_call.1} parent=5 // pred_check_branch
        %168 = sbr.rel (%p165) target = $region32
      $region31: #{tpu_custom_call.1} parent=5 // pred_region
        %s169 = ssub.s32 %s12, 1
        %s170 = smul.u32 4, %s17
        %p171 = scmp.lt.s32.totalorder %s170, 7
        %s172 = scalar_select %p171, %s170, 7
        %s173 = smul.addr %s172, 2
        %s174 = smul.addr %s173, 8
        %s175 = scalar_lea.vmem %s0, %s174
        %p176 = pneg %p38
        %p177 = pneg %p35
        %s178 = smul.u32 4, %s17
        %p179 = scmp.lt.s32.totalorder %s178, 7
        %s180 = scalar_select %p179, %s178, 7
        %s181 = smul.addr %s180, 8
        %s182 = scalar_lea.vmem %s1, %s181
        %p183 = pneg %p64
        %p184 = pneg %p61
        %s185 = smul.u32 4, %s17
        %p186 = scmp.lt.s32.totalorder %s185, 7
        %s187 = scalar_select %p186, %s185, 7
        %s188 = smul.addr %s187, 8
        %s189 = scalar_lea.vmem %s2, %s188
        %p190 = pneg %p90
        %p191 = pneg %p87
        %p192 = pneg %p116
        %p193 = pneg %p113
        %s194 = sand.u32 %s103, 1
        %s195 = scalar_lea.sflag [#allocation3], %s194
        %s196 = sand.u32 %s103, 1
        %s197 = smul.addr %s196, 32
        %s198 = scalar_lea.vmem [#allocation2], %s197
        %s199 = smul.u32 4, %s17
        %p200 = scmp.lt.s32.totalorder %s199, 7
        %s201 = scalar_select %p200, %s199, 7
        %s202 = smul.addr %s201, 2
        %s203 = smul.addr %s202, 8
        %s204 = scalar_lea.vmem %s0, %s203
        %s205 = smul.u32 4, %s17
        %s206 = smul.u32 4, %s17
        %p207 = scmp.lt.s32.totalorder %s206, 7
        %s208 = scalar_select %p207, %s206, 7
        %s209 = smul.addr %s208, 8
        %s210 = scalar_lea.vmem %s1, %s209
        %s211 = smul.u32 4, %s17
        %s212 = smul.u32 4, %s17
        %p213 = scmp.lt.s32.totalorder %s212, 7
        %s214 = scalar_select %p213, %s212, 7
        %s215 = smul.addr %s214, 8
        %s216 = scalar_lea.vmem %s2, %s215
        %s217 = smul.u32 4, %s17
        %s218 = smul.u32 4, %s17
        %v219 = vld [vmem:[%s204] sm:$0xff]
        %v220 = vld [vmem:[%s204 + $0x8] sm:$0xff]
        %v221 = vld [vmem:[%s204 + $0x10] sm:$0xff]
        %v222 = vld [vmem:[%s204 + $0x18] sm:$0xff]
        %v223 = vld [vmem:[%s204 + $0x20] sm:$0xff]
        %v224 = vld [vmem:[%s204 + $0x28] sm:$0xff]
        %v225 = vld [vmem:[%s204 + $0x30] sm:$0xff]
        %v226 = vld [vmem:[%s204 + $0x38] sm:$0xff]
        %v227 = vld [vmem:[%s210] sm:$0xff]
        %v228 = vld [vmem:[%s210 + $0x8] sm:$0xff]
        %v229 = vld [vmem:[%s210 + $0x10] sm:$0xff]
        %v230 = vld [vmem:[%s210 + $0x18] sm:$0xff]
        %v231 = vld [vmem:[%s216] sm:$0xff]
        %v232 = vld [vmem:[%s216 + $0x8] sm:$0xff]
        %v233 = vld [vmem:[%s216 + $0x10] sm:$0xff]
        %v234 = vld [vmem:[%s216 + $0x18] sm:$0xff]
        %v235 = vadd.f32 %v231, 1e-09
        %v236 = vadd.f32 %v232, 1e-09
        %v237 = vadd.f32 %v233, 1e-09
        %v238 = vadd.f32 %v234, 1e-09
        %v239 = vrcp.pop %v235
        %v240 = vmul.f32 1.0, %v239
        %v241 = vrcp.pop %v236
        %v242 = vmul.f32 1.0, %v241
        %v243 = vrcp.pop %v237
        %v244 = vmul.f32 1.0, %v243
        %v245 = vrcp.pop %v238
        %v246 = vmul.f32 1.0, %v245
        %v247 = vmul.f32 %v219, 0.004057933
        %v248 = vmul.f32 %v220, 0.004057933
        %v249 = vmul.f32 %v221, 0.004057933
        %v250 = vmul.f32 %v222, 0.004057933
        %v251 = vmul.f32 %v223, 0.004057933
        %v252 = vmul.f32 %v224, 0.004057933
        %v253 = vmul.f32 %v225, 0.004057933
        %v254 = vmul.f32 %v226, 0.004057933
        %v255 = vadd.f32 %v247, 0.0
        %v256 = vadd.f32 %v248, 0.0
        %v257 = vadd.f32 %v249, 0.0
        %v258 = vadd.f32 %v250, 0.0
        %v259 = vadd.f32 %v251, 0.0
        %v260 = vadd.f32 %v252, 0.0
        %v261 = vadd.f32 %v253, 0.0
        %v262 = vadd.f32 %v254, 0.0
        %v263 = vmul.f32 %v219, 0.018778928
        %v264 = vmul.f32 %v220, 0.018778928
        %v265 = vmul.f32 %v221, 0.018778928
        %v266 = vmul.f32 %v222, 0.018778928
        %v267 = vmul.f32 %v223, 0.018778928
        %v268 = vmul.f32 %v224, 0.018778928
        %v269 = vmul.f32 %v225, 0.018778928
        %v270 = vmul.f32 %v226, 0.018778928
        %v271 = vadd.f32 %v263, 0.0
        %v272 = vadd.f32 %v264, 0.0
        %v273 = vadd.f32 %v265, 0.0
        %v274 = vadd.f32 %v266, 0.0
        %v275 = vadd.f32 %v267, 0.0
        %v276 = vadd.f32 %v268, 0.0
        %v277 = vadd.f32 %v269, 0.0
        %v278 = vadd.f32 %v270, 0.0
        %v279 = vmul.f32 %v219, -0.05108693
        %v280 = vmul.f32 %v220, -0.05108693
        %v281 = vmul.f32 %v221, -0.05108693
        %v282 = vmul.f32 %v222, -0.05108693
        %v283 = vmul.f32 %v223, -0.05108693
        %v284 = vmul.f32 %v224, -0.05108693
        %v285 = vmul.f32 %v225, -0.05108693
        %v286 = vmul.f32 %v226, -0.05108693
        %295 = vrot.lane.b32.xlu0 %v279, 127
        %v296 = vpop.permute.xlu0 %295
        %297 = vrot.lane.b32.xlu0 %v280, 127
        %v298 = vpop.permute.xlu0 %297
        %299 = vrot.lane.b32.xlu0 %v281, 127
        %v300 = vpop.permute.xlu0 %299
        %301 = vrot.lane.b32.xlu0 %v282, 127
        %v302 = vpop.permute.xlu0 %301
        %303 = vrot.lane.b32.xlu0 %v283, 127
        %v304 = vpop.permute.xlu0 %303
        %305 = vrot.lane.b32.xlu0 %v284, 127
        %v306 = vpop.permute.xlu0 %305
        %307 = vrot.lane.b32.xlu0 %v285, 127
        %v308 = vpop.permute.xlu0 %307
        %309 = vrot.lane.b32.xlu0 %v286, 127
        %v310 = vpop.permute.xlu0 %309
        %vm311 = vcmask 1039360
        %v312 = vsel %vm311, %v296, %v298
        %v313 = vsel %vm311, %v300, %v302
        %v314 = vsel %vm311, %v304, %v306
        %v315 = vsel %vm311, %v308, %v310
        %v324 = vadd.f32 %v255, %v312
        %v325 = vadd.f32 %v256, %v298
        %v326 = vadd.f32 %v257, %v313
        %v327 = vadd.f32 %v258, %v302
        %v328 = vadd.f32 %v259, %v314
        %v329 = vadd.f32 %v260, %v306
        %v330 = vadd.f32 %v261, %v315
        %v331 = vadd.f32 %v262, %v310
        %v332 = vmul.f32 %v219, -0.11531475
        %v333 = vmul.f32 %v220, -0.11531475
        %v334 = vmul.f32 %v221, -0.11531475
        %v335 = vmul.f32 %v222, -0.11531475
        %v336 = vmul.f32 %v223, -0.11531475
        %v337 = vmul.f32 %v224, -0.11531475
        %v338 = vmul.f32 %v225, -0.11531475
        %v339 = vmul.f32 %v226, -0.11531475
        %348 = vrot.lane.b32.xlu0 %v332, 127
        %v349 = vpop.permute.xlu0 %348
        %350 = vrot.lane.b32.xlu0 %v333, 127
        %v351 = vpop.permute.xlu0 %350
        %352 = vrot.lane.b32.xlu0 %v334, 127
        %v353 = vpop.permute.xlu0 %352
        %354 = vrot.lane.b32.xlu0 %v335, 127
        %v355 = vpop.permute.xlu0 %354
        %356 = vrot.lane.b32.xlu0 %v336, 127
        %v357 = vpop.permute.xlu0 %356
        %358 = vrot.lane.b32.xlu0 %v337, 127
        %v359 = vpop.permute.xlu0 %358
        %360 = vrot.lane.b32.xlu0 %v338, 127
        %v361 = vpop.permute.xlu0 %360
        %362 = vrot.lane.b32.xlu0 %v339, 127
        %v363 = vpop.permute.xlu0 %362
        %v364 = vsel %vm311, %v349, %v351
        %v365 = vsel %vm311, %v353, %v355
        %v366 = vsel %vm311, %v357, %v359
        %v367 = vsel %vm311, %v361, %v363
        %v376 = vadd.f32 %v271, %v364
        %v377 = vadd.f32 %v272, %v351
        %v378 = vadd.f32 %v273, %v365
        %v379 = vadd.f32 %v274, %v355
        %v380 = vadd.f32 %v275, %v366
        %v381 = vadd.f32 %v276, %v359
        %v382 = vadd.f32 %v277, %v367
        %v383 = vadd.f32 %v278, %v363
        %v384 = vmul.f32 %v219, 0.25714523
        %v385 = vmul.f32 %v220, 0.25714523
        %v386 = vmul.f32 %v221, 0.25714523
        %v387 = vmul.f32 %v222, 0.25714523
        %v388 = vmul.f32 %v223, 0.25714523
        %v389 = vmul.f32 %v224, 0.25714523
        %v390 = vmul.f32 %v225, 0.25714523
        %v391 = vmul.f32 %v226, 0.25714523
        %400 = vrot.lane.b32.xlu0 %v384, 126
        %v401 = vpop.permute.xlu0 %400
        %402 = vrot.lane.b32.xlu0 %v385, 126
        %v403 = vpop.permute.xlu0 %402
        %404 = vrot.lane.b32.xlu0 %v386, 126
        %v405 = vpop.permute.xlu0 %404
        %406 = vrot.lane.b32.xlu0 %v387, 126
        %v407 = vpop.permute.xlu0 %406
        %408 = vrot.lane.b32.xlu0 %v388, 126
        %v409 = vpop.permute.xlu0 %408
        %410 = vrot.lane.b32.xlu0 %v389, 126
        %v411 = vpop.permute.xlu0 %410
        %412 = vrot.lane.b32.xlu0 %v390, 126
        %v413 = vpop.permute.xlu0 %412
        %414 = vrot.lane.b32.xlu0 %v391, 126
        %v415 = vpop.permute.xlu0 %414
        %vm416 = vcmask 1031168
        %v417 = vsel %vm416, %v401, %v403
        %v418 = vsel %vm416, %v405, %v407
        %v419 = vsel %vm416, %v409, %v411
        %v420 = vsel %vm416, %v413, %v415
        %v429 = vadd.f32 %v324, %v417
        %v430 = vadd.f32 %v325, %v403
        %v431 = vadd.f32 %v326, %v418
        %v432 = vadd.f32 %v327, %v407
        %v433 = vadd.f32 %v328, %v419
        %v434 = vadd.f32 %v329, %v411
        %v435 = vadd.f32 %v330, %v420
        %v436 = vadd.f32 %v331, %v415
        %v437 = vmul.f32 %v219, 0.8864196
        %v438 = vmul.f32 %v220, 0.8864196
        %v439 = vmul.f32 %v221, 0.8864196
        %v440 = vmul.f32 %v222, 0.8864196
        %v441 = vmul.f32 %v223, 0.8864196
        %v442 = vmul.f32 %v224, 0.8864196
        %v443 = vmul.f32 %v225, 0.8864196
        %v444 = vmul.f32 %v226, 0.8864196
        %453 = vrot.lane.b32.xlu0 %v437, 126
        %v454 = vpop.permute.xlu0 %453
        %455 = vrot.lane.b32.xlu0 %v438, 126
        %v456 = vpop.permute.xlu0 %455
        %457 = vrot.lane.b32.xlu0 %v439, 126
        %v458 = vpop.permute.xlu0 %457
        %459 = vrot.lane.b32.xlu0 %v440, 126
        %v460 = vpop.permute.xlu0 %459
        %461 = vrot.lane.b32.xlu0 %v441, 126
        %v462 = vpop.permute.xlu0 %461
        %463 = vrot.lane.b32.xlu0 %v442, 126
        %v464 = vpop.permute.xlu0 %463
        %465 = vrot.lane.b32.xlu0 %v443, 126
        %v466 = vpop.permute.xlu0 %465
        %467 = vrot.lane.b32.xlu0 %v444, 126
        %v468 = vpop.permute.xlu0 %467
        %v469 = vsel %vm416, %v454, %v456
        %v470 = vsel %vm416, %v458, %v460
        %v471 = vsel %vm416, %v462, %v464
        %v472 = vsel %vm416, %v466, %v468
        %v481 = vadd.f32 %v376, %v469
        %v482 = vadd.f32 %v377, %v456
        %v483 = vadd.f32 %v378, %v470
        %v484 = vadd.f32 %v379, %v460
        %v485 = vadd.f32 %v380, %v471
        %v486 = vadd.f32 %v381, %v464
        %v487 = vadd.f32 %v382, %v472
        %v488 = vadd.f32 %v383, %v468
        %489 = vrot.lane.b32.xlu0 %v437, 125
        %v490 = vpop.permute.xlu0 %489
        %491 = vrot.lane.b32.xlu0 %v438, 125
        %v492 = vpop.permute.xlu0 %491
        %493 = vrot.lane.b32.xlu0 %v439, 125
        %v494 = vpop.permute.xlu0 %493
        %495 = vrot.lane.b32.xlu0 %v440, 125
        %v496 = vpop.permute.xlu0 %495
        %497 = vrot.lane.b32.xlu0 %v441, 125
        %v498 = vpop.permute.xlu0 %497
        %499 = vrot.lane.b32.xlu0 %v442, 125
        %v500 = vpop.permute.xlu0 %499
        %501 = vrot.lane.b32.xlu0 %v443, 125
        %v502 = vpop.permute.xlu0 %501
        %503 = vrot.lane.b32.xlu0 %v444, 125
        %v504 = vpop.permute.xlu0 %503
        %vm505 = vcmask 1022976
        %v506 = vsel %vm505, %v490, %v492
        %v507 = vsel %vm505, %v494, %v496
        %v508 = vsel %vm505, %v498, %v500
        %v509 = vsel %vm505, %v502, %v504
        %v518 = vadd.f32 %v429, %v506
        %v519 = vadd.f32 %v430, %v492
        %v520 = vadd.f32 %v431, %v507
        %v521 = vadd.f32 %v432, %v496
        %v522 = vadd.f32 %v433, %v508
        %v523 = vadd.f32 %v434, %v500
        %v524 = vadd.f32 %v435, %v509
        %v525 = vadd.f32 %v436, %v504
        %526 = vrot.lane.b32.xlu0 %v384, 125
        %v527 = vpop.permute.xlu0 %526
        %528 = vrot.lane.b32.xlu0 %v385, 125
        %v529 = vpop.permute.xlu0 %528
        %530 = vrot.lane.b32.xlu0 %v386, 125
        %v531 = vpop.permute.xlu0 %530
        %532 = vrot.lane.b32.xlu0 %v387, 125
        %v533 = vpop.permute.xlu0 %532
        %534 = vrot.lane.b32.xlu0 %v388, 125
        %v535 = vpop.permute.xlu0 %534
        %536 = vrot.lane.b32.xlu0 %v389, 125
        %v537 = vpop.permute.xlu0 %536
        %538 = vrot.lane.b32.xlu0 %v390, 125
        %v539 = vpop.permute.xlu0 %538
        %540 = vrot.lane.b32.xlu0 %v391, 125
        %v541 = vpop.permute.xlu0 %540
        %v542 = vsel %vm505, %v527, %v529
        %v543 = vsel %vm505, %v531, %v533
        %v544 = vsel %vm505, %v535, %v537
        %v545 = vsel %vm505, %v539, %v541
        %v554 = vadd.f32 %v481, %v542
        %v555 = vadd.f32 %v482, %v529
        %v556 = vadd.f32 %v483, %v543
        %v557 = vadd.f32 %v484, %v533
        %v558 = vadd.f32 %v485, %v544
        %v559 = vadd.f32 %v486, %v537
        %v560 = vadd.f32 %v487, %v545
        %v561 = vadd.f32 %v488, %v541
        %562 = vrot.lane.b32.xlu0 %v332, 124
        %v563 = vpop.permute.xlu0 %562
        %564 = vrot.lane.b32.xlu0 %v333, 124
        %v565 = vpop.permute.xlu0 %564
        %566 = vrot.lane.b32.xlu0 %v334, 124
        %v567 = vpop.permute.xlu0 %566
        %568 = vrot.lane.b32.xlu0 %v335, 124
        %v569 = vpop.permute.xlu0 %568
        %570 = vrot.lane.b32.xlu0 %v336, 124
        %v571 = vpop.permute.xlu0 %570
        %572 = vrot.lane.b32.xlu0 %v337, 124
        %v573 = vpop.permute.xlu0 %572
        %574 = vrot.lane.b32.xlu0 %v338, 124
        %v575 = vpop.permute.xlu0 %574
        %576 = vrot.lane.b32.xlu0 %v339, 124
        %v577 = vpop.permute.xlu0 %576
        %vm578 = vcmask 1014784
        %v579 = vsel %vm578, %v563, %v565
        %v580 = vsel %vm578, %v567, %v569
        %v581 = vsel %vm578, %v571, %v573
        %v582 = vsel %vm578, %v575, %v577
        %v591 = vadd.f32 %v518, %v579
        %v592 = vadd.f32 %v519, %v565
        %v593 = vadd.f32 %v520, %v580
        %v594 = vadd.f32 %v521, %v569
        %v595 = vadd.f32 %v522, %v581
        %v596 = vadd.f32 %v523, %v573
        %v597 = vadd.f32 %v524, %v582
        %v598 = vadd.f32 %v525, %v577
        %599 = vrot.lane.b32.xlu0 %v279, 124
        %v600 = vpop.permute.xlu0 %599
        %601 = vrot.lane.b32.xlu0 %v280, 124
        %v602 = vpop.permute.xlu0 %601
        %603 = vrot.lane.b32.xlu0 %v281, 124
        %v604 = vpop.permute.xlu0 %603
        %605 = vrot.lane.b32.xlu0 %v282, 124
        %v606 = vpop.permute.xlu0 %605
        %607 = vrot.lane.b32.xlu0 %v283, 124
        %v608 = vpop.permute.xlu0 %607
        %609 = vrot.lane.b32.xlu0 %v284, 124
        %v610 = vpop.permute.xlu0 %609
        %611 = vrot.lane.b32.xlu0 %v285, 124
        %v612 = vpop.permute.xlu0 %611
        %613 = vrot.lane.b32.xlu0 %v286, 124
        %v614 = vpop.permute.xlu0 %613
        %v615 = vsel %vm578, %v600, %v602
        %v616 = vsel %vm578, %v604, %v606
        %v617 = vsel %vm578, %v608, %v610
        %v618 = vsel %vm578, %v612, %v614
        %v627 = vadd.f32 %v554, %v615
        %v628 = vadd.f32 %v555, %v602
        %v629 = vadd.f32 %v556, %v616
        %v630 = vadd.f32 %v557, %v606
        %v631 = vadd.f32 %v558, %v617
        %v632 = vadd.f32 %v559, %v610
        %v633 = vadd.f32 %v560, %v618
        %v634 = vadd.f32 %v561, %v614
        %643 = vrot.lane.b32.xlu0 %v263, 123
        %v644 = vpop.permute.xlu0 %643
        %645 = vrot.lane.b32.xlu0 %v264, 123
        %v646 = vpop.permute.xlu0 %645
        %647 = vrot.lane.b32.xlu0 %v265, 123
        %v648 = vpop.permute.xlu0 %647
        %649 = vrot.lane.b32.xlu0 %v266, 123
        %v650 = vpop.permute.xlu0 %649
        %651 = vrot.lane.b32.xlu0 %v267, 123
        %v652 = vpop.permute.xlu0 %651
        %653 = vrot.lane.b32.xlu0 %v268, 123
        %v654 = vpop.permute.xlu0 %653
        %655 = vrot.lane.b32.xlu0 %v269, 123
        %v656 = vpop.permute.xlu0 %655
        %657 = vrot.lane.b32.xlu0 %v270, 123
        %v658 = vpop.permute.xlu0 %657
        %vm659 = vcmask 1006592
        %v660 = vsel %vm659, %v644, %v646
        %v661 = vsel %vm659, %v648, %v650
        %v662 = vsel %vm659, %v652, %v654
        %v663 = vsel %vm659, %v656, %v658
        %v672 = vadd.f32 %v591, %v660
        %v673 = vadd.f32 %v592, %v646
        %v674 = vadd.f32 %v593, %v661
        %v675 = vadd.f32 %v594, %v650
        %v676 = vadd.f32 %v595, %v662
        %v677 = vadd.f32 %v596, %v654
        %v678 = vadd.f32 %v597, %v663
        %v679 = vadd.f32 %v598, %v658
        %688 = vrot.lane.b32.xlu0 %v247, 123
        %v689 = vpop.permute.xlu0 %688
        %690 = vrot.lane.b32.xlu0 %v248, 123
        %v691 = vpop.permute.xlu0 %690
        %692 = vrot.lane.b32.xlu0 %v249, 123
        %v693 = vpop.permute.xlu0 %692
        %694 = vrot.lane.b32.xlu0 %v250, 123
        %v695 = vpop.permute.xlu0 %694
        %696 = vrot.lane.b32.xlu0 %v251, 123
        %v697 = vpop.permute.xlu0 %696
        %698 = vrot.lane.b32.xlu0 %v252, 123
        %v699 = vpop.permute.xlu0 %698
        %700 = vrot.lane.b32.xlu0 %v253, 123
        %v701 = vpop.permute.xlu0 %700
        %702 = vrot.lane.b32.xlu0 %v254, 123
        %v703 = vpop.permute.xlu0 %702
        %v704 = vsel %vm659, %v689, %v691
        %v705 = vsel %vm659, %v693, %v695
        %v706 = vsel %vm659, %v697, %v699
        %v707 = vsel %vm659, %v701, %v703
        %v716 = vadd.f32 %v627, %v704
        %v717 = vadd.f32 %v628, %v691
        %v718 = vadd.f32 %v629, %v705
        %v719 = vadd.f32 %v630, %v695
        %v720 = vadd.f32 %v631, %v706
        %v721 = vadd.f32 %v632, %v699
        %v722 = vadd.f32 %v633, %v707
        %v723 = vadd.f32 %v634, %v703
        %725 = vset.pattern.permute.xlu0 0
        %726 = vperm.xlu0 %725, %v227
        %v727 = vpop.permute.xlu0 %726
        %730 = vset.pattern.permute.xlu0 0
        %731 = vperm.xlu0 %730, %v228
        %v732 = vpop.permute.xlu0 %731
        %735 = vset.pattern.permute.xlu0 0
        %736 = vperm.xlu0 %735, %v229
        %v737 = vpop.permute.xlu0 %736
        %740 = vset.pattern.permute.xlu0 0
        %741 = vperm.xlu0 %740, %v230
        %v742 = vpop.permute.xlu0 %741
        %v744 = vmul.f32 %v672, %v727
        %v745 = vmul.f32 %v673, %v727
        %v746 = vmul.f32 %v674, %v732
        %v747 = vmul.f32 %v675, %v732
        %v748 = vmul.f32 %v676, %v737
        %v749 = vmul.f32 %v677, %v737
        %v750 = vmul.f32 %v678, %v742
        %v751 = vmul.f32 %v679, %v742
        %v752 = vand.u32 2147483647, %v744
        %vm753 = vcmp.le.f32.partialorder %v752, 0.7853982
        %vm754 = vcmp.lt.s32.totalorder %v744, 0
        %v755 = vand.u32 %v744, 2139095040
        %v756 = vshrl.u32 %v755, 23
        %v757 = vsub.s32 %v756, 127
        %v758 = vand.u32 2147483647, %v744
        %v759 = vand.u32 %v758, 8388607
        %v760 = vor.u32 %v759, 8388608
        %v761 = vsub.s32 0, %v760
        %v762 = vadd.s32 %v757, 1
        %vm763 = vcmp.gt.s32.totalorder %v762, 0
        %v764 = vsel %vm763, %v762, 0
        %v765 = vshrl.u32 %v764, 5
        %v766 = vand.u32 %v764, 31
        %v767 = vsub.s32 32, %v766
        %v768 = vshrl.u32 683565275, %v767
        %v769 = vshll.u32 683565275, %v766
        %v770 = vshrl.u32 2475754826, %v767
        %v771 = vor.u32 %v769, %v770
        %v772 = vshll.u32 2475754826, %v766
        %v773 = vshrl.u32 2131351028, %v767
        %v774 = vor.u32 %v772, %v773
        %v775 = vshll.u32 2131351028, %v766
        %v776 = vshrl.u32 2102212464, %v767
        %v777 = vor.u32 %v775, %v776
        %v778 = vshll.u32 2102212464, %v766
        %v779 = vshrl.u32 920167782, %v767
        %v780 = vor.u32 %v778, %v779
        %v781 = vshll.u32 920167782, %v766
        %v782 = vshrl.u32 1326507024, %v767
        %v783 = vor.u32 %v781, %v782
        %vm784 = vcmp.lt.s32.totalorder %v765, 1
        %vm785 = vcmp.lt.s32.totalorder %v765, 2
        %vm786 = vcmp.lt.s32.totalorder %v765, 3
        %vm787 = vcmp.lt.s32.totalorder %v765, 4
        %v788 = vsel %vm784, %v768, %v771
        %v789 = vsel %vm787, %v777, 2102212464
        %v790 = vsel %vm786, %v774, %v789
        %v791 = vsel %vm785, %v788, %v790
        %v792 = vsel %vm784, %v771, %v774
        %v793 = vsel %vm787, %v780, 920167782
        %v794 = vsel %vm786, %v777, %v793
        %v795 = vsel %vm785, %v792, %v794
        %v796 = vsel %vm784, %v774, %v777
        %v797 = vsel %vm787, %v783, 1326507024
        %v798 = vsel %vm786, %v780, %v797
        %v799 = vsel %vm785, %v796, %v798
        %v800 = vshll.u32 %v760, 8
        %v801 = vmul.u32.u64.compose %v800, %v799
        %v802 = vextract.low.u32 %v801
        %v803 = vextract.high.u32 %v801
        %v804 = vmul.u32.u64.compose %v800, %v795
        %v805 = vextract.low.u32 %v804
        %v806 = vextract.high.u32 %v804
        %v807 = vmul.u32 %v800, %v791
        %v808 = vadd.s32 %v803, %v805
        %vm809 = vc.u32 %v803, %v805
        %v810 = vadd.s32 %v806, 1
        %v811 = vsel %vm809, %v810, %v806
        %v812 = vadd.s32 %v807, %v811
        %v813 = vadd.s32 %v812, 536870912
        %v814 = vshrl.u32 %v813, 30
        %v815 = vshll.u32 %v814, 30
        %v816 = vsub.s32 %v812, %v815
        %vm817 = vcmp.lt.s32.totalorder %v816, 0
        %v818 = vsub.s32 0, %v816
        %v819 = vsel %vm817, %v818, %v816
        %v820 = vclz %v819
        %v821 = vsub.s32 %v820, 2
        %vm822 = vcmp.gt.s32.totalorder 0, %v821
        %v823 = vsel %vm822, 0, %v821
        %v824 = vsub.s32 32, %v823
        %v825 = vshll.u32 %v816, %v823
        %v826 = vshrl.u32 %v808, %v824
        %v827 = vor.u32 %v825, %v826
        %v828 = vsub.s32 4294967266, %v823
        %v829 = vadd.s32 %v828, 127
        %v830 = vshll.u32 %v829, 23
        %v831 = vor.u32 4788187, %v830
        %v832 = vand.u32 2147483647, %v831
        %v834 = vcvt.s32.f32 %v827
        %v835 = vmul.f32 %v834, %v832
        %v836 = vxor.u32 %v835, 2147483648
        %v837 = vsel %vm754, %v836, %v835
        %v838 = vsub.s32 4, %v814
        %v839 = vsel %vm754, %v838, %v814
        %v840 = vsel %vm753, %v744, %v837
        %v841 = vsel %vm753, 0, %v839
        %v842 = vcosq.f32.pop %v840
        %v843 = vsinq.f32.pop %v840
        %vm844 = vweird.f32 %v744
        %v845 = vadd.s32 %v841, 3
        %v846 = vand.u32 %v845, 3
        %vm847 = vcmp.lt.s32.totalorder %v846, 2
        %vm848 = vcmp.eq.s32.totalorder %v846, 0
        %v849 = vxor.u32 %v843, 2147483648
        %v850 = vsel %vm848, %v842, %v849
        %vm851 = vcmp.eq.s32.totalorder %v846, 2
        %v852 = vxor.u32 %v842, 2147483648
        %v853 = vsel %vm851, %v852, %v843
        %v854 = vsel %vm847, %v850, %v853
        %v855 = vsel %vm844, nan, %v854
        %v856 = vand.u32 2147483647, %v745
        %vm857 = vcmp.le.f32.partialorder %v856, 0.7853982
        %vm858 = vcmp.lt.s32.totalorder %v745, 0
        %v859 = vand.u32 %v745, 2139095040
        %v860 = vshrl.u32 %v859, 23
        %v861 = vsub.s32 %v860, 127
        %v862 = vand.u32 2147483647, %v745
        %v863 = vand.u32 %v862, 8388607
        %v864 = vor.u32 %v863, 8388608
        %v865 = vsub.s32 0, %v864
        %v866 = vadd.s32 %v861, 1
        %vm867 = vcmp.gt.s32.totalorder %v866, 0
        %v868 = vsel %vm867, %v866, 0
        %v869 = vshrl.u32 %v868, 5
        %v870 = vand.u32 %v868, 31
        %v871 = vsub.s32 32, %v870
        %v872 = vshrl.u32 683565275, %v871
        %v873 = vshll.u32 683565275, %v870
        %v874 = vshrl.u32 2475754826, %v871
        %v875 = vor.u32 %v873, %v874
        %v876 = vshll.u32 2475754826, %v870
        %v877 = vshrl.u32 2131351028, %v871
        %v878 = vor.u32 %v876, %v877
        %v879 = vshll.u32 2131351028, %v870
        %v880 = vshrl.u32 2102212464, %v871
        %v881 = vor.u32 %v879, %v880
        %v882 = vshll.u32 2102212464, %v870
        %v883 = vshrl.u32 920167782, %v871
        %v884 = vor.u32 %v882, %v883
        %v885 = vshll.u32 920167782, %v870
        %v886 = vshrl.u32 1326507024, %v871
        %v887 = vor.u32 %v885, %v886
        %vm888 = vcmp.lt.s32.totalorder %v869, 1
        %vm889 = vcmp.lt.s32.totalorder %v869, 2
        %vm890 = vcmp.lt.s32.totalorder %v869, 3
        %vm891 = vcmp.lt.s32.totalorder %v869, 4
        %v892 = vsel %vm888, %v872, %v875
        %v893 = vsel %vm891, %v881, 2102212464
        %v894 = vsel %vm890, %v878, %v893
        %v895 = vsel %vm889, %v892, %v894
        %v896 = vsel %vm888, %v875, %v878
        %v897 = vsel %vm891, %v884, 920167782
        %v898 = vsel %vm890, %v881, %v897
        %v899 = vsel %vm889, %v896, %v898
        %v900 = vsel %vm888, %v878, %v881
        %v901 = vsel %vm891, %v887, 1326507024
        %v902 = vsel %vm890, %v884, %v901
        %v903 = vsel %vm889, %v900, %v902
        %v904 = vshll.u32 %v864, 8
        %v905 = vmul.u32.u64.compose %v904, %v903
        %v906 = vextract.low.u32 %v905
        %v907 = vextract.high.u32 %v905
        %v908 = vmul.u32.u64.compose %v904, %v899
        %v909 = vextract.low.u32 %v908
        %v910 = vextract.high.u32 %v908
        %v911 = vmul.u32 %v904, %v895
        %v912 = vadd.s32 %v907, %v909
        %vm913 = vc.u32 %v907, %v909
        %v914 = vadd.s32 %v910, 1
        %v915 = vsel %vm913, %v914, %v910
        %v916 = vadd.s32 %v911, %v915
        %v917 = vadd.s32 %v916, 536870912
        %v918 = vshrl.u32 %v917, 30
        %v919 = vshll.u32 %v918, 30
        %v920 = vsub.s32 %v916, %v919
        %vm921 = vcmp.lt.s32.totalorder %v920, 0
        %v922 = vsub.s32 0, %v920
        %v923 = vsel %vm921, %v922, %v920
        %v924 = vclz %v923
        %v925 = vsub.s32 %v924, 2
        %vm926 = vcmp.gt.s32.totalorder 0, %v925
        %v927 = vsel %vm926, 0, %v925
        %v928 = vsub.s32 32, %v927
        %v929 = vshll.u32 %v920, %v927
        %v930 = vshrl.u32 %v912, %v928
        %v931 = vor.u32 %v929, %v930
        %v932 = vsub.s32 4294967266, %v927
        %v933 = vadd.s32 %v932, 127
        %v934 = vshll.u32 %v933, 23
        %v935 = vor.u32 4788187, %v934
        %v936 = vand.u32 2147483647, %v935
        %v938 = vcvt.s32.f32 %v931
        %v939 = vmul.f32 %v938, %v936
        %v940 = vxor.u32 %v939, 2147483648
        %v941 = vsel %vm858, %v940, %v939
        %v942 = vsub.s32 4, %v918
        %v943 = vsel %vm858, %v942, %v918
        %v944 = vsel %vm857, %v745, %v941
        %v945 = vsel %vm857, 0, %v943
        %v946 = vcosq.f32.pop %v944
        %v947 = vsinq.f32.pop %v944
        %vm948 = vweird.f32 %v745
        %v949 = vadd.s32 %v945, 3
        %v950 = vand.u32 %v949, 3
        %vm951 = vcmp.lt.s32.totalorder %v950, 2
        %vm952 = vcmp.eq.s32.totalorder %v950, 0
        %v953 = vxor.u32 %v947, 2147483648
        %v954 = vsel %vm952, %v946, %v953
        %vm955 = vcmp.eq.s32.totalorder %v950, 2
        %v956 = vxor.u32 %v946, 2147483648
        %v957 = vsel %vm955, %v956, %v947
        %v958 = vsel %vm951, %v954, %v957
        %v959 = vsel %vm948, nan, %v958
        %v960 = vand.u32 2147483647, %v746
        %vm961 = vcmp.le.f32.partialorder %v960, 0.7853982
        %vm962 = vcmp.lt.s32.totalorder %v746, 0
        %v963 = vand.u32 %v746, 2139095040
        %v964 = vshrl.u32 %v963, 23
        %v965 = vsub.s32 %v964, 127
        %v966 = vand.u32 2147483647, %v746
        %v967 = vand.u32 %v966, 8388607
        %v968 = vor.u32 %v967, 8388608
        %v969 = vsub.s32 0, %v968
        %v970 = vadd.s32 %v965, 1
        %vm971 = vcmp.gt.s32.totalorder %v970, 0
        %v972 = vsel %vm971, %v970, 0
        %v973 = vshrl.u32 %v972, 5
        %v974 = vand.u32 %v972, 31
        %v975 = vsub.s32 32, %v974
        %v976 = vshrl.u32 683565275, %v975
        %v977 = vshll.u32 683565275, %v974
        %v978 = vshrl.u32 2475754826, %v975
        %v979 = vor.u32 %v977, %v978
        %v980 = vshll.u32 2475754826, %v974
        %v981 = vshrl.u32 2131351028, %v975
        %v982 = vor.u32 %v980, %v981
        %v983 = vshll.u32 2131351028, %v974
        %v984 = vshrl.u32 2102212464, %v975
        %v985 = vor.u32 %v983, %v984
        %v986 = vshll.u32 2102212464, %v974
        %v987 = vshrl.u32 920167782, %v975
        %v988 = vor.u32 %v986, %v987
        %v989 = vshll.u32 920167782, %v974
        %v990 = vshrl.u32 1326507024, %v975
        %v991 = vor.u32 %v989, %v990
        %vm992 = vcmp.lt.s32.totalorder %v973, 1
        %vm993 = vcmp.lt.s32.totalorder %v973, 2
        %vm994 = vcmp.lt.s32.totalorder %v973, 3
        %vm995 = vcmp.lt.s32.totalorder %v973, 4
        %v996 = vsel %vm992, %v976, %v979
        %v997 = vsel %vm995, %v985, 2102212464
        %v998 = vsel %vm994, %v982, %v997
        %v999 = vsel %vm993, %v996, %v998
        %v1000 = vsel %vm992, %v979, %v982
        %v1001 = vsel %vm995, %v988, 920167782
        %v1002 = vsel %vm994, %v985, %v1001
        %v1003 = vsel %vm993, %v1000, %v1002
        %v1004 = vsel %vm992, %v982, %v985
        %v1005 = vsel %vm995, %v991, 1326507024
        %v1006 = vsel %vm994, %v988, %v1005
        %v1007 = vsel %vm993, %v1004, %v1006
        %v1008 = vshll.u32 %v968, 8
        %v1009 = vmul.u32.u64.compose %v1008, %v1007
        %v1010 = vextract.low.u32 %v1009
        %v1011 = vextract.high.u32 %v1009
        %v1012 = vmul.u32.u64.compose %v1008, %v1003
        %v1013 = vextract.low.u32 %v1012
        %v1014 = vextract.high.u32 %v1012
        %v1015 = vmul.u32 %v1008, %v999
        %v1016 = vadd.s32 %v1011, %v1013
        %vm1017 = vc.u32 %v1011, %v1013
        %v1018 = vadd.s32 %v1014, 1
        %v1019 = vsel %vm1017, %v1018, %v1014
        %v1020 = vadd.s32 %v1015, %v1019
        %v1021 = vadd.s32 %v1020, 536870912
        %v1022 = vshrl.u32 %v1021, 30
        %v1023 = vshll.u32 %v1022, 30
        %v1024 = vsub.s32 %v1020, %v1023
        %vm1025 = vcmp.lt.s32.totalorder %v1024, 0
        %v1026 = vsub.s32 0, %v1024
        %v1027 = vsel %vm1025, %v1026, %v1024
        %v1028 = vclz %v1027
        %v1029 = vsub.s32 %v1028, 2
        %vm1030 = vcmp.gt.s32.totalorder 0, %v1029
        %v1031 = vsel %vm1030, 0, %v1029
        %v1032 = vsub.s32 32, %v1031
        %v1033 = vshll.u32 %v1024, %v1031
        %v1034 = vshrl.u32 %v1016, %v1032
        %v1035 = vor.u32 %v1033, %v1034
        %v1036 = vsub.s32 4294967266, %v1031
        %v1037 = vadd.s32 %v1036, 127
        %v1038 = vshll.u32 %v1037, 23
        %v1039 = vor.u32 4788187, %v1038
        %v1040 = vand.u32 2147483647, %v1039
        %v1042 = vcvt.s32.f32 %v1035
        %v1043 = vmul.f32 %v1042, %v1040
        %v1044 = vxor.u32 %v1043, 2147483648
        %v1045 = vsel %vm962, %v1044, %v1043
        %v1046 = vsub.s32 4, %v1022
        %v1047 = vsel %vm962, %v1046, %v1022
        %v1048 = vsel %vm961, %v746, %v1045
        %v1049 = vsel %vm961, 0, %v1047
        %v1050 = vcosq.f32.pop %v1048
        %v1051 = vsinq.f32.pop %v1048
        %vm1052 = vweird.f32 %v746
        %v1053 = vadd.s32 %v1049, 3
        %v1054 = vand.u32 %v1053, 3
        %vm1055 = vcmp.lt.s32.totalorder %v1054, 2
        %vm1056 = vcmp.eq.s32.totalorder %v1054, 0
        %v1057 = vxor.u32 %v1051, 2147483648
        %v1058 = vsel %vm1056, %v1050, %v1057
        %vm1059 = vcmp.eq.s32.totalorder %v1054, 2
        %v1060 = vxor.u32 %v1050, 2147483648
        %v1061 = vsel %vm1059, %v1060, %v1051
        %v1062 = vsel %vm1055, %v1058, %v1061
        %v1063 = vsel %vm1052, nan, %v1062
        %v1064 = vand.u32 2147483647, %v747
        %vm1065 = vcmp.le.f32.partialorder %v1064, 0.7853982
        %vm1066 = vcmp.lt.s32.totalorder %v747, 0
        %v1067 = vand.u32 %v747, 2139095040
        %v1068 = vshrl.u32 %v1067, 23
        %v1069 = vsub.s32 %v1068, 127
        %v1070 = vand.u32 2147483647, %v747
        %v1071 = vand.u32 %v1070, 8388607
        %v1072 = vor.u32 %v1071, 8388608
        %v1073 = vsub.s32 0, %v1072
        %v1074 = vadd.s32 %v1069, 1
        %vm1075 = vcmp.gt.s32.totalorder %v1074, 0
        %v1076 = vsel %vm1075, %v1074, 0
        %v1077 = vshrl.u32 %v1076, 5
        %v1078 = vand.u32 %v1076, 31
        %v1079 = vsub.s32 32, %v1078
        %v1080 = vshrl.u32 683565275, %v1079
        %v1081 = vshll.u32 683565275, %v1078
        %v1082 = vshrl.u32 2475754826, %v1079
        %v1083 = vor.u32 %v1081, %v1082
        %v1084 = vshll.u32 2475754826, %v1078
        %v1085 = vshrl.u32 2131351028, %v1079
        %v1086 = vor.u32 %v1084, %v1085
        %v1087 = vshll.u32 2131351028, %v1078
        %v1088 = vshrl.u32 2102212464, %v1079
        %v1089 = vor.u32 %v1087, %v1088
        %v1090 = vshll.u32 2102212464, %v1078
        %v1091 = vshrl.u32 920167782, %v1079
        %v1092 = vor.u32 %v1090, %v1091
        %v1093 = vshll.u32 920167782, %v1078
        %v1094 = vshrl.u32 1326507024, %v1079
        %v1095 = vor.u32 %v1093, %v1094
        %vm1096 = vcmp.lt.s32.totalorder %v1077, 1
        %vm1097 = vcmp.lt.s32.totalorder %v1077, 2
        %vm1098 = vcmp.lt.s32.totalorder %v1077, 3
        %vm1099 = vcmp.lt.s32.totalorder %v1077, 4
        %v1100 = vsel %vm1096, %v1080, %v1083
        %v1101 = vsel %vm1099, %v1089, 2102212464
        %v1102 = vsel %vm1098, %v1086, %v1101
        %v1103 = vsel %vm1097, %v1100, %v1102
        %v1104 = vsel %vm1096, %v1083, %v1086
        %v1105 = vsel %vm1099, %v1092, 920167782
        %v1106 = vsel %vm1098, %v1089, %v1105
        %v1107 = vsel %vm1097, %v1104, %v1106
        %v1108 = vsel %vm1096, %v1086, %v1089
        %v1109 = vsel %vm1099, %v1095, 1326507024
        %v1110 = vsel %vm1098, %v1092, %v1109
        %v1111 = vsel %vm1097, %v1108, %v1110
        %v1112 = vshll.u32 %v1072, 8
        %v1113 = vmul.u32.u64.compose %v1112, %v1111
        %v1114 = vextract.low.u32 %v1113
        %v1115 = vextract.high.u32 %v1113
        %v1116 = vmul.u32.u64.compose %v1112, %v1107
        %v1117 = vextract.low.u32 %v1116
        %v1118 = vextract.high.u32 %v1116
        %v1119 = vmul.u32 %v1112, %v1103
        %v1120 = vadd.s32 %v1115, %v1117
        %vm1121 = vc.u32 %v1115, %v1117
        %v1122 = vadd.s32 %v1118, 1
        %v1123 = vsel %vm1121, %v1122, %v1118
        %v1124 = vadd.s32 %v1119, %v1123
        %v1125 = vadd.s32 %v1124, 536870912
        %v1126 = vshrl.u32 %v1125, 30
        %v1127 = vshll.u32 %v1126, 30
        %v1128 = vsub.s32 %v1124, %v1127
        %vm1129 = vcmp.lt.s32.totalorder %v1128, 0
        %v1130 = vsub.s32 0, %v1128
        %v1131 = vsel %vm1129, %v1130, %v1128
        %v1132 = vclz %v1131
        %v1133 = vsub.s32 %v1132, 2
        %vm1134 = vcmp.gt.s32.totalorder 0, %v1133
        %v1135 = vsel %vm1134, 0, %v1133
        %v1136 = vsub.s32 32, %v1135
        %v1137 = vshll.u32 %v1128, %v1135
        %v1138 = vshrl.u32 %v1120, %v1136
        %v1139 = vor.u32 %v1137, %v1138
        %v1140 = vsub.s32 4294967266, %v1135
        %v1141 = vadd.s32 %v1140, 127
        %v1142 = vshll.u32 %v1141, 23
        %v1143 = vor.u32 4788187, %v1142
        %v1144 = vand.u32 2147483647, %v1143
        %v1146 = vcvt.s32.f32 %v1139
        %v1147 = vmul.f32 %v1146, %v1144
        %v1148 = vxor.u32 %v1147, 2147483648
        %v1149 = vsel %vm1066, %v1148, %v1147
        %v1150 = vsub.s32 4, %v1126
        %v1151 = vsel %vm1066, %v1150, %v1126
        %v1152 = vsel %vm1065, %v747, %v1149
        %v1153 = vsel %vm1065, 0, %v1151
        %v1154 = vcosq.f32.pop %v1152
        %v1155 = vsinq.f32.pop %v1152
        %vm1156 = vweird.f32 %v747
        %v1157 = vadd.s32 %v1153, 3
        %v1158 = vand.u32 %v1157, 3
        %vm1159 = vcmp.lt.s32.totalorder %v1158, 2
        %vm1160 = vcmp.eq.s32.totalorder %v1158, 0
        %v1161 = vxor.u32 %v1155, 2147483648
        %v1162 = vsel %vm1160, %v1154, %v1161
        %vm1163 = vcmp.eq.s32.totalorder %v1158, 2
        %v1164 = vxor.u32 %v1154, 2147483648
        %v1165 = vsel %vm1163, %v1164, %v1155
        %v1166 = vsel %vm1159, %v1162, %v1165
        %v1167 = vsel %vm1156, nan, %v1166
        %v1168 = vand.u32 2147483647, %v748
        %vm1169 = vcmp.le.f32.partialorder %v1168, 0.7853982
        %vm1170 = vcmp.lt.s32.totalorder %v748, 0
        %v1171 = vand.u32 %v748, 2139095040
        %v1172 = vshrl.u32 %v1171, 23
        %v1173 = vsub.s32 %v1172, 127
        %v1174 = vand.u32 2147483647, %v748
        %v1175 = vand.u32 %v1174, 8388607
        %v1176 = vor.u32 %v1175, 8388608
        %v1177 = vsub.s32 0, %v1176
        %v1178 = vadd.s32 %v1173, 1
        %vm1179 = vcmp.gt.s32.totalorder %v1178, 0
        %v1180 = vsel %vm1179, %v1178, 0
        %v1181 = vshrl.u32 %v1180, 5
        %v1182 = vand.u32 %v1180, 31
        %v1183 = vsub.s32 32, %v1182
        %v1184 = vshrl.u32 683565275, %v1183
        %v1185 = vshll.u32 683565275, %v1182
        %v1186 = vshrl.u32 2475754826, %v1183
        %v1187 = vor.u32 %v1185, %v1186
        %v1188 = vshll.u32 2475754826, %v1182
        %v1189 = vshrl.u32 2131351028, %v1183
        %v1190 = vor.u32 %v1188, %v1189
        %v1191 = vshll.u32 2131351028, %v1182
        %v1192 = vshrl.u32 2102212464, %v1183
        %v1193 = vor.u32 %v1191, %v1192
        %v1194 = vshll.u32 2102212464, %v1182
        %v1195 = vshrl.u32 920167782, %v1183
        %v1196 = vor.u32 %v1194, %v1195
        %v1197 = vshll.u32 920167782, %v1182
        %v1198 = vshrl.u32 1326507024, %v1183
        %v1199 = vor.u32 %v1197, %v1198
        %vm1200 = vcmp.lt.s32.totalorder %v1181, 1
        %vm1201 = vcmp.lt.s32.totalorder %v1181, 2
        %vm1202 = vcmp.lt.s32.totalorder %v1181, 3
        %vm1203 = vcmp.lt.s32.totalorder %v1181, 4
        %v1204 = vsel %vm1200, %v1184, %v1187
        %v1205 = vsel %vm1203, %v1193, 2102212464
        %v1206 = vsel %vm1202, %v1190, %v1205
        %v1207 = vsel %vm1201, %v1204, %v1206
        %v1208 = vsel %vm1200, %v1187, %v1190
        %v1209 = vsel %vm1203, %v1196, 920167782
        %v1210 = vsel %vm1202, %v1193, %v1209
        %v1211 = vsel %vm1201, %v1208, %v1210
        %v1212 = vsel %vm1200, %v1190, %v1193
        %v1213 = vsel %vm1203, %v1199, 1326507024
        %v1214 = vsel %vm1202, %v1196, %v1213
        %v1215 = vsel %vm1201, %v1212, %v1214
        %v1216 = vshll.u32 %v1176, 8
        %v1217 = vmul.u32.u64.compose %v1216, %v1215
        %v1218 = vextract.low.u32 %v1217
        %v1219 = vextract.high.u32 %v1217
        %v1220 = vmul.u32.u64.compose %v1216, %v1211
        %v1221 = vextract.low.u32 %v1220
        %v1222 = vextract.high.u32 %v1220
        %v1223 = vmul.u32 %v1216, %v1207
        %v1224 = vadd.s32 %v1219, %v1221
        %vm1225 = vc.u32 %v1219, %v1221
        %v1226 = vadd.s32 %v1222, 1
        %v1227 = vsel %vm1225, %v1226, %v1222
        %v1228 = vadd.s32 %v1223, %v1227
        %v1229 = vadd.s32 %v1228, 536870912
        %v1230 = vshrl.u32 %v1229, 30
        %v1231 = vshll.u32 %v1230, 30
        %v1232 = vsub.s32 %v1228, %v1231
        %vm1233 = vcmp.lt.s32.totalorder %v1232, 0
        %v1234 = vsub.s32 0, %v1232
        %v1235 = vsel %vm1233, %v1234, %v1232
        %v1236 = vclz %v1235
        %v1237 = vsub.s32 %v1236, 2
        %vm1238 = vcmp.gt.s32.totalorder 0, %v1237
        %v1239 = vsel %vm1238, 0, %v1237
        %v1240 = vsub.s32 32, %v1239
        %v1241 = vshll.u32 %v1232, %v1239
        %v1242 = vshrl.u32 %v1224, %v1240
        %v1243 = vor.u32 %v1241, %v1242
        %v1244 = vsub.s32 4294967266, %v1239
        %v1245 = vadd.s32 %v1244, 127
        %v1246 = vshll.u32 %v1245, 23
        %v1247 = vor.u32 4788187, %v1246
        %v1248 = vand.u32 2147483647, %v1247
        %v1250 = vcvt.s32.f32 %v1243
        %v1251 = vmul.f32 %v1250, %v1248
        %v1252 = vxor.u32 %v1251, 2147483648
        %v1253 = vsel %vm1170, %v1252, %v1251
        %v1254 = vsub.s32 4, %v1230
        %v1255 = vsel %vm1170, %v1254, %v1230
        %v1256 = vsel %vm1169, %v748, %v1253
        %v1257 = vsel %vm1169, 0, %v1255
        %v1258 = vcosq.f32.pop %v1256
        %v1259 = vsinq.f32.pop %v1256
        %vm1260 = vweird.f32 %v748
        %v1261 = vadd.s32 %v1257, 3
        %v1262 = vand.u32 %v1261, 3
        %vm1263 = vcmp.lt.s32.totalorder %v1262, 2
        %vm1264 = vcmp.eq.s32.totalorder %v1262, 0
        %v1265 = vxor.u32 %v1259, 2147483648
        %v1266 = vsel %vm1264, %v1258, %v1265
        %vm1267 = vcmp.eq.s32.totalorder %v1262, 2
        %v1268 = vxor.u32 %v1258, 2147483648
        %v1269 = vsel %vm1267, %v1268, %v1259
        %v1270 = vsel %vm1263, %v1266, %v1269
        %v1271 = vsel %vm1260, nan, %v1270
        %v1272 = vand.u32 2147483647, %v749
        %vm1273 = vcmp.le.f32.partialorder %v1272, 0.7853982
        %vm1274 = vcmp.lt.s32.totalorder %v749, 0
        %v1275 = vand.u32 %v749, 2139095040
        %v1276 = vshrl.u32 %v1275, 23
        %v1277 = vsub.s32 %v1276, 127
        %v1278 = vand.u32 2147483647, %v749
        %v1279 = vand.u32 %v1278, 8388607
        %v1280 = vor.u32 %v1279, 8388608
        %v1281 = vsub.s32 0, %v1280
        %v1282 = vadd.s32 %v1277, 1
        %vm1283 = vcmp.gt.s32.totalorder %v1282, 0
        %v1284 = vsel %vm1283, %v1282, 0
        %v1285 = vshrl.u32 %v1284, 5
        %v1286 = vand.u32 %v1284, 31
        %v1287 = vsub.s32 32, %v1286
        %v1288 = vshrl.u32 683565275, %v1287
        %v1289 = vshll.u32 683565275, %v1286
        %v1290 = vshrl.u32 2475754826, %v1287
        %v1291 = vor.u32 %v1289, %v1290
        %v1292 = vshll.u32 2475754826, %v1286
        %v1293 = vshrl.u32 2131351028, %v1287
        %v1294 = vor.u32 %v1292, %v1293
        %v1295 = vshll.u32 2131351028, %v1286
        %v1296 = vshrl.u32 2102212464, %v1287
        %v1297 = vor.u32 %v1295, %v1296
        %v1298 = vshll.u32 2102212464, %v1286
        %v1299 = vshrl.u32 920167782, %v1287
        %v1300 = vor.u32 %v1298, %v1299
        %v1301 = vshll.u32 920167782, %v1286
        %v1302 = vshrl.u32 1326507024, %v1287
        %v1303 = vor.u32 %v1301, %v1302
        %vm1304 = vcmp.lt.s32.totalorder %v1285, 1
        %vm1305 = vcmp.lt.s32.totalorder %v1285, 2
        %vm1306 = vcmp.lt.s32.totalorder %v1285, 3
        %vm1307 = vcmp.lt.s32.totalorder %v1285, 4
        %v1308 = vsel %vm1304, %v1288, %v1291
        %v1309 = vsel %vm1307, %v1297, 2102212464
        %v1310 = vsel %vm1306, %v1294, %v1309
        %v1311 = vsel %vm1305, %v1308, %v1310
        %v1312 = vsel %vm1304, %v1291, %v1294
        %v1313 = vsel %vm1307, %v1300, 920167782
        %v1314 = vsel %vm1306, %v1297, %v1313
        %v1315 = vsel %vm1305, %v1312, %v1314
        %v1316 = vsel %vm1304, %v1294, %v1297
        %v1317 = vsel %vm1307, %v1303, 1326507024
        %v1318 = vsel %vm1306, %v1300, %v1317
        %v1319 = vsel %vm1305, %v1316, %v1318
        %v1320 = vshll.u32 %v1280, 8
        %v1321 = vmul.u32.u64.compose %v1320, %v1319
        %v1322 = vextract.low.u32 %v1321
        %v1323 = vextract.high.u32 %v1321
        %v1324 = vmul.u32.u64.compose %v1320, %v1315
        %v1325 = vextract.low.u32 %v1324
        %v1326 = vextract.high.u32 %v1324
        %v1327 = vmul.u32 %v1320, %v1311
        %v1328 = vadd.s32 %v1323, %v1325
        %vm1329 = vc.u32 %v1323, %v1325
        %v1330 = vadd.s32 %v1326, 1
        %v1331 = vsel %vm1329, %v1330, %v1326
        %v1332 = vadd.s32 %v1327, %v1331
        %v1333 = vadd.s32 %v1332, 536870912
        %v1334 = vshrl.u32 %v1333, 30
        %v1335 = vshll.u32 %v1334, 30
        %v1336 = vsub.s32 %v1332, %v1335
        %vm1337 = vcmp.lt.s32.totalorder %v1336, 0
        %v1338 = vsub.s32 0, %v1336
        %v1339 = vsel %vm1337, %v1338, %v1336
        %v1340 = vclz %v1339
        %v1341 = vsub.s32 %v1340, 2
        %vm1342 = vcmp.gt.s32.totalorder 0, %v1341
        %v1343 = vsel %vm1342, 0, %v1341
        %v1344 = vsub.s32 32, %v1343
        %v1345 = vshll.u32 %v1336, %v1343
        %v1346 = vshrl.u32 %v1328, %v1344
        %v1347 = vor.u32 %v1345, %v1346
        %v1348 = vsub.s32 4294967266, %v1343
        %v1349 = vadd.s32 %v1348, 127
        %v1350 = vshll.u32 %v1349, 23
        %v1351 = vor.u32 4788187, %v1350
        %v1352 = vand.u32 2147483647, %v1351
        %v1354 = vcvt.s32.f32 %v1347
        %v1355 = vmul.f32 %v1354, %v1352
        %v1356 = vxor.u32 %v1355, 2147483648
        %v1357 = vsel %vm1274, %v1356, %v1355
        %v1358 = vsub.s32 4, %v1334
        %v1359 = vsel %vm1274, %v1358, %v1334
        %v1360 = vsel %vm1273, %v749, %v1357
        %v1361 = vsel %vm1273, 0, %v1359
        %v1362 = vcosq.f32.pop %v1360
        %v1363 = vsinq.f32.pop %v1360
        %vm1364 = vweird.f32 %v749
        %v1365 = vadd.s32 %v1361, 3
        %v1366 = vand.u32 %v1365, 3
        %vm1367 = vcmp.lt.s32.totalorder %v1366, 2
        %vm1368 = vcmp.eq.s32.totalorder %v1366, 0
        %v1369 = vxor.u32 %v1363, 2147483648
        %v1370 = vsel %vm1368, %v1362, %v1369
        %vm1371 = vcmp.eq.s32.totalorder %v1366, 2
        %v1372 = vxor.u32 %v1362, 2147483648
        %v1373 = vsel %vm1371, %v1372, %v1363
        %v1374 = vsel %vm1367, %v1370, %v1373
        %v1375 = vsel %vm1364, nan, %v1374
        %v1376 = vand.u32 2147483647, %v750
        %vm1377 = vcmp.le.f32.partialorder %v1376, 0.7853982
        %vm1378 = vcmp.lt.s32.totalorder %v750, 0
        %v1379 = vand.u32 %v750, 2139095040
        %v1380 = vshrl.u32 %v1379, 23
        %v1381 = vsub.s32 %v1380, 127
        %v1382 = vand.u32 2147483647, %v750
        %v1383 = vand.u32 %v1382, 8388607
        %v1384 = vor.u32 %v1383, 8388608
        %v1385 = vsub.s32 0, %v1384
        %v1386 = vadd.s32 %v1381, 1
        %vm1387 = vcmp.gt.s32.totalorder %v1386, 0
        %v1388 = vsel %vm1387, %v1386, 0
        %v1389 = vshrl.u32 %v1388, 5
        %v1390 = vand.u32 %v1388, 31
        %v1391 = vsub.s32 32, %v1390
        %v1392 = vshrl.u32 683565275, %v1391
        %v1393 = vshll.u32 683565275, %v1390
        %v1394 = vshrl.u32 2475754826, %v1391
        %v1395 = vor.u32 %v1393, %v1394
        %v1396 = vshll.u32 2475754826, %v1390
        %v1397 = vshrl.u32 2131351028, %v1391
        %v1398 = vor.u32 %v1396, %v1397
        %v1399 = vshll.u32 2131351028, %v1390
        %v1400 = vshrl.u32 2102212464, %v1391
        %v1401 = vor.u32 %v1399, %v1400
        %v1402 = vshll.u32 2102212464, %v1390
        %v1403 = vshrl.u32 920167782, %v1391
        %v1404 = vor.u32 %v1402, %v1403
        %v1405 = vshll.u32 920167782, %v1390
        %v1406 = vshrl.u32 1326507024, %v1391
        %v1407 = vor.u32 %v1405, %v1406
        %vm1408 = vcmp.lt.s32.totalorder %v1389, 1
        %vm1409 = vcmp.lt.s32.totalorder %v1389, 2
        %vm1410 = vcmp.lt.s32.totalorder %v1389, 3
        %vm1411 = vcmp.lt.s32.totalorder %v1389, 4
        %v1412 = vsel %vm1408, %v1392, %v1395
        %v1413 = vsel %vm1411, %v1401, 2102212464
        %v1414 = vsel %vm1410, %v1398, %v1413
        %v1415 = vsel %vm1409, %v1412, %v1414
        %v1416 = vsel %vm1408, %v1395, %v1398
        %v1417 = vsel %vm1411, %v1404, 920167782
        %v1418 = vsel %vm1410, %v1401, %v1417
        %v1419 = vsel %vm1409, %v1416, %v1418
        %v1420 = vsel %vm1408, %v1398, %v1401
        %v1421 = vsel %vm1411, %v1407, 1326507024
        %v1422 = vsel %vm1410, %v1404, %v1421
        %v1423 = vsel %vm1409, %v1420, %v1422
        %v1424 = vshll.u32 %v1384, 8
        %v1425 = vmul.u32.u64.compose %v1424, %v1423
        %v1426 = vextract.low.u32 %v1425
        %v1427 = vextract.high.u32 %v1425
        %v1428 = vmul.u32.u64.compose %v1424, %v1419
        %v1429 = vextract.low.u32 %v1428
        %v1430 = vextract.high.u32 %v1428
        %v1431 = vmul.u32 %v1424, %v1415
        %v1432 = vadd.s32 %v1427, %v1429
        %vm1433 = vc.u32 %v1427, %v1429
        %v1434 = vadd.s32 %v1430, 1
        %v1435 = vsel %vm1433, %v1434, %v1430
        %v1436 = vadd.s32 %v1431, %v1435
        %v1437 = vadd.s32 %v1436, 536870912
        %v1438 = vshrl.u32 %v1437, 30
        %v1439 = vshll.u32 %v1438, 30
        %v1440 = vsub.s32 %v1436, %v1439
        %vm1441 = vcmp.lt.s32.totalorder %v1440, 0
        %v1442 = vsub.s32 0, %v1440
        %v1443 = vsel %vm1441, %v1442, %v1440
        %v1444 = vclz %v1443
        %v1445 = vsub.s32 %v1444, 2
        %vm1446 = vcmp.gt.s32.totalorder 0, %v1445
        %v1447 = vsel %vm1446, 0, %v1445
        %v1448 = vsub.s32 32, %v1447
        %v1449 = vshll.u32 %v1440, %v1447
        %v1450 = vshrl.u32 %v1432, %v1448
        %v1451 = vor.u32 %v1449, %v1450
        %v1452 = vsub.s32 4294967266, %v1447
        %v1453 = vadd.s32 %v1452, 127
        %v1454 = vshll.u32 %v1453, 23
        %v1455 = vor.u32 4788187, %v1454
        %v1456 = vand.u32 2147483647, %v1455
        %v1458 = vcvt.s32.f32 %v1451
        %v1459 = vmul.f32 %v1458, %v1456
        %v1460 = vxor.u32 %v1459, 2147483648
        %v1461 = vsel %vm1378, %v1460, %v1459
        %v1462 = vsub.s32 4, %v1438
        %v1463 = vsel %vm1378, %v1462, %v1438
        %v1464 = vsel %vm1377, %v750, %v1461
        %v1465 = vsel %vm1377, 0, %v1463
        %v1466 = vcosq.f32.pop %v1464
        %v1467 = vsinq.f32.pop %v1464
        %vm1468 = vweird.f32 %v750
        %v1469 = vadd.s32 %v1465, 3
        %v1470 = vand.u32 %v1469, 3
        %vm1471 = vcmp.lt.s32.totalorder %v1470, 2
        %vm1472 = vcmp.eq.s32.totalorder %v1470, 0
        %v1473 = vxor.u32 %v1467, 2147483648
        %v1474 = vsel %vm1472, %v1466, %v1473
        %vm1475 = vcmp.eq.s32.totalorder %v1470, 2
        %v1476 = vxor.u32 %v1466, 2147483648
        %v1477 = vsel %vm1475, %v1476, %v1467
        %v1478 = vsel %vm1471, %v1474, %v1477
        %v1479 = vsel %vm1468, nan, %v1478
        %v1480 = vand.u32 2147483647, %v751
        %vm1481 = vcmp.le.f32.partialorder %v1480, 0.7853982
        %vm1482 = vcmp.lt.s32.totalorder %v751, 0
        %v1483 = vand.u32 %v751, 2139095040
        %v1484 = vshrl.u32 %v1483, 23
        %v1485 = vsub.s32 %v1484, 127
        %v1486 = vand.u32 2147483647, %v751
        %v1487 = vand.u32 %v1486, 8388607
        %v1488 = vor.u32 %v1487, 8388608
        %v1489 = vsub.s32 0, %v1488
        %v1490 = vadd.s32 %v1485, 1
        %vm1491 = vcmp.gt.s32.totalorder %v1490, 0
        %v1492 = vsel %vm1491, %v1490, 0
        %v1493 = vshrl.u32 %v1492, 5
        %v1494 = vand.u32 %v1492, 31
        %v1495 = vsub.s32 32, %v1494
        %v1496 = vshrl.u32 683565275, %v1495
        %v1497 = vshll.u32 683565275, %v1494
        %v1498 = vshrl.u32 2475754826, %v1495
        %v1499 = vor.u32 %v1497, %v1498
        %v1500 = vshll.u32 2475754826, %v1494
        %v1501 = vshrl.u32 2131351028, %v1495
        %v1502 = vor.u32 %v1500, %v1501
        %v1503 = vshll.u32 2131351028, %v1494
        %v1504 = vshrl.u32 2102212464, %v1495
        %v1505 = vor.u32 %v1503, %v1504
        %v1506 = vshll.u32 2102212464, %v1494
        %v1507 = vshrl.u32 920167782, %v1495
        %v1508 = vor.u32 %v1506, %v1507
        %v1509 = vshll.u32 920167782, %v1494
        %v1510 = vshrl.u32 1326507024, %v1495
        %v1511 = vor.u32 %v1509, %v1510
        %vm1512 = vcmp.lt.s32.totalorder %v1493, 1
        %vm1513 = vcmp.lt.s32.totalorder %v1493, 2
        %vm1514 = vcmp.lt.s32.totalorder %v1493, 3
        %vm1515 = vcmp.lt.s32.totalorder %v1493, 4
        %v1516 = vsel %vm1512, %v1496, %v1499
        %v1517 = vsel %vm1515, %v1505, 2102212464
        %v1518 = vsel %vm1514, %v1502, %v1517
        %v1519 = vsel %vm1513, %v1516, %v1518
        %v1520 = vsel %vm1512, %v1499, %v1502
        %v1521 = vsel %vm1515, %v1508, 920167782
        %v1522 = vsel %vm1514, %v1505, %v1521
        %v1523 = vsel %vm1513, %v1520, %v1522
        %v1524 = vsel %vm1512, %v1502, %v1505
        %v1525 = vsel %vm1515, %v1511, 1326507024
        %v1526 = vsel %vm1514, %v1508, %v1525
        %v1527 = vsel %vm1513, %v1524, %v1526
        %v1528 = vshll.u32 %v1488, 8
        %v1529 = vmul.u32.u64.compose %v1528, %v1527
        %v1530 = vextract.low.u32 %v1529
        %v1531 = vextract.high.u32 %v1529
        %v1532 = vmul.u32.u64.compose %v1528, %v1523
        %v1533 = vextract.low.u32 %v1532
        %v1534 = vextract.high.u32 %v1532
        %v1535 = vmul.u32 %v1528, %v1519
        %v1536 = vadd.s32 %v1531, %v1533
        %vm1537 = vc.u32 %v1531, %v1533
        %v1538 = vadd.s32 %v1534, 1
        %v1539 = vsel %vm1537, %v1538, %v1534
        %v1540 = vadd.s32 %v1535, %v1539
        %v1541 = vadd.s32 %v1540, 536870912
        %v1542 = vshrl.u32 %v1541, 30
        %v1543 = vshll.u32 %v1542, 30
        %v1544 = vsub.s32 %v1540, %v1543
        %vm1545 = vcmp.lt.s32.totalorder %v1544, 0
        %v1546 = vsub.s32 0, %v1544
        %v1547 = vsel %vm1545, %v1546, %v1544
        %v1548 = vclz %v1547
        %v1549 = vsub.s32 %v1548, 2
        %vm1550 = vcmp.gt.s32.totalorder 0, %v1549
        %v1551 = vsel %vm1550, 0, %v1549
        %v1552 = vsub.s32 32, %v1551
        %v1553 = vshll.u32 %v1544, %v1551
        %v1554 = vshrl.u32 %v1536, %v1552
        %v1555 = vor.u32 %v1553, %v1554
        %v1556 = vsub.s32 4294967266, %v1551
        %v1557 = vadd.s32 %v1556, 127
        %v1558 = vshll.u32 %v1557, 23
        %v1559 = vor.u32 4788187, %v1558
        %v1560 = vand.u32 2147483647, %v1559
        %v1562 = vcvt.s32.f32 %v1555
        %v1563 = vmul.f32 %v1562, %v1560
        %v1564 = vxor.u32 %v1563, 2147483648
        %v1565 = vsel %vm1482, %v1564, %v1563
        %v1566 = vsub.s32 4, %v1542
        %v1567 = vsel %vm1482, %v1566, %v1542
        %v1568 = vsel %vm1481, %v751, %v1565
        %v1569 = vsel %vm1481, 0, %v1567
        %v1570 = vcosq.f32.pop %v1568
        %v1571 = vsinq.f32.pop %v1568
        %vm1572 = vweird.f32 %v751
        %v1573 = vadd.s32 %v1569, 3
        %v1574 = vand.u32 %v1573, 3
        %vm1575 = vcmp.lt.s32.totalorder %v1574, 2
        %vm1576 = vcmp.eq.s32.totalorder %v1574, 0
        %v1577 = vxor.u32 %v1571, 2147483648
        %v1578 = vsel %vm1576, %v1570, %v1577
        %vm1579 = vcmp.eq.s32.totalorder %v1574, 2
        %v1580 = vxor.u32 %v1570, 2147483648
        %v1581 = vsel %vm1579, %v1580, %v1571
        %v1582 = vsel %vm1575, %v1578, %v1581
        %v1583 = vsel %vm1572, nan, %v1582
        %v1584 = vmul.f32 %v855, %v855
        %v1585 = vmul.f32 %v959, %v959
        %v1586 = vmul.f32 %v1063, %v1063
        %v1587 = vmul.f32 %v1167, %v1167
        %v1588 = vmul.f32 %v1271, %v1271
        %v1589 = vmul.f32 %v1375, %v1375
        %v1590 = vmul.f32 %v1479, %v1479
        %v1591 = vmul.f32 %v1583, %v1583
        %1593 = vset.pattern.permute.xlu0 0
        %1594 = vperm.xlu0 %1593, %v240
        %v1595 = vpop.permute.xlu0 %1594
        %1598 = vset.pattern.permute.xlu0 0
        %1599 = vperm.xlu0 %1598, %v242
        %v1600 = vpop.permute.xlu0 %1599
        %1603 = vset.pattern.permute.xlu0 0
        %1604 = vperm.xlu0 %1603, %v244
        %v1605 = vpop.permute.xlu0 %1604
        %1608 = vset.pattern.permute.xlu0 0
        %1609 = vperm.xlu0 %1608, %v246
        %v1610 = vpop.permute.xlu0 %1609
        %v1612 = vmul.f32 %v1595, %v1584
        %v1613 = vmul.f32 %v1595, %v1585
        %v1614 = vmul.f32 %v1600, %v1586
        %v1615 = vmul.f32 %v1600, %v1587
        %v1616 = vmul.f32 %v1605, %v1588
        %v1617 = vmul.f32 %v1605, %v1589
        %v1618 = vmul.f32 %v1610, %v1590
        %v1619 = vmul.f32 %v1610, %v1591
        %v1620 = vadd.f32 %v672, %v1612
        %v1621 = vadd.f32 %v673, %v1613
        %v1622 = vadd.f32 %v674, %v1614
        %v1623 = vadd.f32 %v675, %v1615
        %v1624 = vadd.f32 %v676, %v1616
        %v1625 = vadd.f32 %v677, %v1617
        %v1626 = vadd.f32 %v678, %v1618
        %v1627 = vadd.f32 %v679, %v1619
        %v1628 = vmul.f32 %v716, %v727
        %v1629 = vmul.f32 %v717, %v727
        %v1630 = vmul.f32 %v718, %v732
        %v1631 = vmul.f32 %v719, %v732
        %v1632 = vmul.f32 %v720, %v737
        %v1633 = vmul.f32 %v721, %v737
        %v1634 = vmul.f32 %v722, %v742
        %v1635 = vmul.f32 %v723, %v742
        %v1636 = vand.u32 2147483647, %v1628
        %vm1637 = vcmp.le.f32.partialorder %v1636, 0.7853982
        %vm1638 = vcmp.lt.s32.totalorder %v1628, 0
        %v1639 = vand.u32 %v1628, 2139095040
        %v1640 = vshrl.u32 %v1639, 23
        %v1641 = vsub.s32 %v1640, 127
        %v1642 = vand.u32 2147483647, %v1628
        %v1643 = vand.u32 %v1642, 8388607
        %v1644 = vor.u32 %v1643, 8388608
        %v1645 = vsub.s32 0, %v1644
        %v1646 = vadd.s32 %v1641, 1
        %vm1647 = vcmp.gt.s32.totalorder %v1646, 0
        %v1648 = vsel %vm1647, %v1646, 0
        %v1649 = vshrl.u32 %v1648, 5
        %v1650 = vand.u32 %v1648, 31
        %v1651 = vsub.s32 32, %v1650
        %v1652 = vshrl.u32 683565275, %v1651
        %v1653 = vshll.u32 683565275, %v1650
        %v1654 = vshrl.u32 2475754826, %v1651
        %v1655 = vor.u32 %v1653, %v1654
        %v1656 = vshll.u32 2475754826, %v1650
        %v1657 = vshrl.u32 2131351028, %v1651
        %v1658 = vor.u32 %v1656, %v1657
        %v1659 = vshll.u32 2131351028, %v1650
        %v1660 = vshrl.u32 2102212464, %v1651
        %v1661 = vor.u32 %v1659, %v1660
        %v1662 = vshll.u32 2102212464, %v1650
        %v1663 = vshrl.u32 920167782, %v1651
        %v1664 = vor.u32 %v1662, %v1663
        %v1665 = vshll.u32 920167782, %v1650
        %v1666 = vshrl.u32 1326507024, %v1651
        %v1667 = vor.u32 %v1665, %v1666
        %vm1668 = vcmp.lt.s32.totalorder %v1649, 1
        %vm1669 = vcmp.lt.s32.totalorder %v1649, 2
        %vm1670 = vcmp.lt.s32.totalorder %v1649, 3
        %vm1671 = vcmp.lt.s32.totalorder %v1649, 4
        %v1672 = vsel %vm1668, %v1652, %v1655
        %v1673 = vsel %vm1671, %v1661, 2102212464
        %v1674 = vsel %vm1670, %v1658, %v1673
        %v1675 = vsel %vm1669, %v1672, %v1674
        %v1676 = vsel %vm1668, %v1655, %v1658
        %v1677 = vsel %vm1671, %v1664, 920167782
        %v1678 = vsel %vm1670, %v1661, %v1677
        %v1679 = vsel %vm1669, %v1676, %v1678
        %v1680 = vsel %vm1668, %v1658, %v1661
        %v1681 = vsel %vm1671, %v1667, 1326507024
        %v1682 = vsel %vm1670, %v1664, %v1681
        %v1683 = vsel %vm1669, %v1680, %v1682
        %v1684 = vshll.u32 %v1644, 8
        %v1685 = vmul.u32.u64.compose %v1684, %v1683
        %v1686 = vextract.low.u32 %v1685
        %v1687 = vextract.high.u32 %v1685
        %v1688 = vmul.u32.u64.compose %v1684, %v1679
        %v1689 = vextract.low.u32 %v1688
        %v1690 = vextract.high.u32 %v1688
        %v1691 = vmul.u32 %v1684, %v1675
        %v1692 = vadd.s32 %v1687, %v1689
        %vm1693 = vc.u32 %v1687, %v1689
        %v1694 = vadd.s32 %v1690, 1
        %v1695 = vsel %vm1693, %v1694, %v1690
        %v1696 = vadd.s32 %v1691, %v1695
        %v1697 = vadd.s32 %v1696, 536870912
        %v1698 = vshrl.u32 %v1697, 30
        %v1699 = vshll.u32 %v1698, 30
        %v1700 = vsub.s32 %v1696, %v1699
        %vm1701 = vcmp.lt.s32.totalorder %v1700, 0
        %v1702 = vsub.s32 0, %v1700
        %v1703 = vsel %vm1701, %v1702, %v1700
        %v1704 = vclz %v1703
        %v1705 = vsub.s32 %v1704, 2
        %vm1706 = vcmp.gt.s32.totalorder 0, %v1705
        %v1707 = vsel %vm1706, 0, %v1705
        %v1708 = vsub.s32 32, %v1707
        %v1709 = vshll.u32 %v1700, %v1707
        %v1710 = vshrl.u32 %v1692, %v1708
        %v1711 = vor.u32 %v1709, %v1710
        %v1712 = vsub.s32 4294967266, %v1707
        %v1713 = vadd.s32 %v1712, 127
        %v1714 = vshll.u32 %v1713, 23
        %v1715 = vor.u32 4788187, %v1714
        %v1716 = vand.u32 2147483647, %v1715
        %v1718 = vcvt.s32.f32 %v1711
        %v1719 = vmul.f32 %v1718, %v1716
        %v1720 = vxor.u32 %v1719, 2147483648
        %v1721 = vsel %vm1638, %v1720, %v1719
        %v1722 = vsub.s32 4, %v1698
        %v1723 = vsel %vm1638, %v1722, %v1698
        %v1724 = vsel %vm1637, %v1628, %v1721
        %v1725 = vsel %vm1637, 0, %v1723
        %v1726 = vcosq.f32.pop %v1724
        %v1727 = vsinq.f32.pop %v1724
        %vm1728 = vweird.f32 %v1628
        %v1729 = vadd.s32 %v1725, 3
        %v1730 = vand.u32 %v1729, 3
        %vm1731 = vcmp.lt.s32.totalorder %v1730, 2
        %vm1732 = vcmp.eq.s32.totalorder %v1730, 0
        %v1733 = vxor.u32 %v1727, 2147483648
        %v1734 = vsel %vm1732, %v1726, %v1733
        %vm1735 = vcmp.eq.s32.totalorder %v1730, 2
        %v1736 = vxor.u32 %v1726, 2147483648
        %v1737 = vsel %vm1735, %v1736, %v1727
        %v1738 = vsel %vm1731, %v1734, %v1737
        %v1739 = vsel %vm1728, nan, %v1738
        %v1740 = vand.u32 2147483647, %v1629
        %vm1741 = vcmp.le.f32.partialorder %v1740, 0.7853982
        %vm1742 = vcmp.lt.s32.totalorder %v1629, 0
        %v1743 = vand.u32 %v1629, 2139095040
        %v1744 = vshrl.u32 %v1743, 23
        %v1745 = vsub.s32 %v1744, 127
        %v1746 = vand.u32 2147483647, %v1629
        %v1747 = vand.u32 %v1746, 8388607
        %v1748 = vor.u32 %v1747, 8388608
        %v1749 = vsub.s32 0, %v1748
        %v1750 = vadd.s32 %v1745, 1
        %vm1751 = vcmp.gt.s32.totalorder %v1750, 0
        %v1752 = vsel %vm1751, %v1750, 0
        %v1753 = vshrl.u32 %v1752, 5
        %v1754 = vand.u32 %v1752, 31
        %v1755 = vsub.s32 32, %v1754
        %v1756 = vshrl.u32 683565275, %v1755
        %v1757 = vshll.u32 683565275, %v1754
        %v1758 = vshrl.u32 2475754826, %v1755
        %v1759 = vor.u32 %v1757, %v1758
        %v1760 = vshll.u32 2475754826, %v1754
        %v1761 = vshrl.u32 2131351028, %v1755
        %v1762 = vor.u32 %v1760, %v1761
        %v1763 = vshll.u32 2131351028, %v1754
        %v1764 = vshrl.u32 2102212464, %v1755
        %v1765 = vor.u32 %v1763, %v1764
        %v1766 = vshll.u32 2102212464, %v1754
        %v1767 = vshrl.u32 920167782, %v1755
        %v1768 = vor.u32 %v1766, %v1767
        %v1769 = vshll.u32 920167782, %v1754
        %v1770 = vshrl.u32 1326507024, %v1755
        %v1771 = vor.u32 %v1769, %v1770
        %vm1772 = vcmp.lt.s32.totalorder %v1753, 1
        %vm1773 = vcmp.lt.s32.totalorder %v1753, 2
        %vm1774 = vcmp.lt.s32.totalorder %v1753, 3
        %vm1775 = vcmp.lt.s32.totalorder %v1753, 4
        %v1776 = vsel %vm1772, %v1756, %v1759
        %v1777 = vsel %vm1775, %v1765, 2102212464
        %v1778 = vsel %vm1774, %v1762, %v1777
        %v1779 = vsel %vm1773, %v1776, %v1778
        %v1780 = vsel %vm1772, %v1759, %v1762
        %v1781 = vsel %vm1775, %v1768, 920167782
        %v1782 = vsel %vm1774, %v1765, %v1781
        %v1783 = vsel %vm1773, %v1780, %v1782
        %v1784 = vsel %vm1772, %v1762, %v1765
        %v1785 = vsel %vm1775, %v1771, 1326507024
        %v1786 = vsel %vm1774, %v1768, %v1785
        %v1787 = vsel %vm1773, %v1784, %v1786
        %v1788 = vshll.u32 %v1748, 8
        %v1789 = vmul.u32.u64.compose %v1788, %v1787
        %v1790 = vextract.low.u32 %v1789
        %v1791 = vextract.high.u32 %v1789
        %v1792 = vmul.u32.u64.compose %v1788, %v1783
        %v1793 = vextract.low.u32 %v1792
        %v1794 = vextract.high.u32 %v1792
        %v1795 = vmul.u32 %v1788, %v1779
        %v1796 = vadd.s32 %v1791, %v1793
        %vm1797 = vc.u32 %v1791, %v1793
        %v1798 = vadd.s32 %v1794, 1
        %v1799 = vsel %vm1797, %v1798, %v1794
        %v1800 = vadd.s32 %v1795, %v1799
        %v1801 = vadd.s32 %v1800, 536870912
        %v1802 = vshrl.u32 %v1801, 30
        %v1803 = vshll.u32 %v1802, 30
        %v1804 = vsub.s32 %v1800, %v1803
        %vm1805 = vcmp.lt.s32.totalorder %v1804, 0
        %v1806 = vsub.s32 0, %v1804
        %v1807 = vsel %vm1805, %v1806, %v1804
        %v1808 = vclz %v1807
        %v1809 = vsub.s32 %v1808, 2
        %vm1810 = vcmp.gt.s32.totalorder 0, %v1809
        %v1811 = vsel %vm1810, 0, %v1809
        %v1812 = vsub.s32 32, %v1811
        %v1813 = vshll.u32 %v1804, %v1811
        %v1814 = vshrl.u32 %v1796, %v1812
        %v1815 = vor.u32 %v1813, %v1814
        %v1816 = vsub.s32 4294967266, %v1811
        %v1817 = vadd.s32 %v1816, 127
        %v1818 = vshll.u32 %v1817, 23
        %v1819 = vor.u32 4788187, %v1818
        %v1820 = vand.u32 2147483647, %v1819
        %v1822 = vcvt.s32.f32 %v1815
        %v1823 = vmul.f32 %v1822, %v1820
        %v1824 = vxor.u32 %v1823, 2147483648
        %v1825 = vsel %vm1742, %v1824, %v1823
        %v1826 = vsub.s32 4, %v1802
        %v1827 = vsel %vm1742, %v1826, %v1802
        %v1828 = vsel %vm1741, %v1629, %v1825
        %v1829 = vsel %vm1741, 0, %v1827
        %v1830 = vcosq.f32.pop %v1828
        %v1831 = vsinq.f32.pop %v1828
        %vm1832 = vweird.f32 %v1629
        %v1833 = vadd.s32 %v1829, 3
        %v1834 = vand.u32 %v1833, 3
        %vm1835 = vcmp.lt.s32.totalorder %v1834, 2
        %vm1836 = vcmp.eq.s32.totalorder %v1834, 0
        %v1837 = vxor.u32 %v1831, 2147483648
        %v1838 = vsel %vm1836, %v1830, %v1837
        %vm1839 = vcmp.eq.s32.totalorder %v1834, 2
        %v1840 = vxor.u32 %v1830, 2147483648
        %v1841 = vsel %vm1839, %v1840, %v1831
        %v1842 = vsel %vm1835, %v1838, %v1841
        %v1843 = vsel %vm1832, nan, %v1842
        %v1844 = vand.u32 2147483647, %v1630
        %vm1845 = vcmp.le.f32.partialorder %v1844, 0.7853982
        %vm1846 = vcmp.lt.s32.totalorder %v1630, 0
        %v1847 = vand.u32 %v1630, 2139095040
        %v1848 = vshrl.u32 %v1847, 23
        %v1849 = vsub.s32 %v1848, 127
        %v1850 = vand.u32 2147483647, %v1630
        %v1851 = vand.u32 %v1850, 8388607
        %v1852 = vor.u32 %v1851, 8388608
        %v1853 = vsub.s32 0, %v1852
        %v1854 = vadd.s32 %v1849, 1
        %vm1855 = vcmp.gt.s32.totalorder %v1854, 0
        %v1856 = vsel %vm1855, %v1854, 0
        %v1857 = vshrl.u32 %v1856, 5
        %v1858 = vand.u32 %v1856, 31
        %v1859 = vsub.s32 32, %v1858
        %v1860 = vshrl.u32 683565275, %v1859
        %v1861 = vshll.u32 683565275, %v1858
        %v1862 = vshrl.u32 2475754826, %v1859
        %v1863 = vor.u32 %v1861, %v1862
        %v1864 = vshll.u32 2475754826, %v1858
        %v1865 = vshrl.u32 2131351028, %v1859
        %v1866 = vor.u32 %v1864, %v1865
        %v1867 = vshll.u32 2131351028, %v1858
        %v1868 = vshrl.u32 2102212464, %v1859
        %v1869 = vor.u32 %v1867, %v1868
        %v1870 = vshll.u32 2102212464, %v1858
        %v1871 = vshrl.u32 920167782, %v1859
        %v1872 = vor.u32 %v1870, %v1871
        %v1873 = vshll.u32 920167782, %v1858
        %v1874 = vshrl.u32 1326507024, %v1859
        %v1875 = vor.u32 %v1873, %v1874
        %vm1876 = vcmp.lt.s32.totalorder %v1857, 1
        %vm1877 = vcmp.lt.s32.totalorder %v1857, 2
        %vm1878 = vcmp.lt.s32.totalorder %v1857, 3
        %vm1879 = vcmp.lt.s32.totalorder %v1857, 4
        %v1880 = vsel %vm1876, %v1860, %v1863
        %v1881 = vsel %vm1879, %v1869, 2102212464
        %v1882 = vsel %vm1878, %v1866, %v1881
        %v1883 = vsel %vm1877, %v1880, %v1882
        %v1884 = vsel %vm1876, %v1863, %v1866
        %v1885 = vsel %vm1879, %v1872, 920167782
        %v1886 = vsel %vm1878, %v1869, %v1885
        %v1887 = vsel %vm1877, %v1884, %v1886
        %v1888 = vsel %vm1876, %v1866, %v1869
        %v1889 = vsel %vm1879, %v1875, 1326507024
        %v1890 = vsel %vm1878, %v1872, %v1889
        %v1891 = vsel %vm1877, %v1888, %v1890
        %v1892 = vshll.u32 %v1852, 8
        %v1893 = vmul.u32.u64.compose %v1892, %v1891
        %v1894 = vextract.low.u32 %v1893
        %v1895 = vextract.high.u32 %v1893
        %v1896 = vmul.u32.u64.compose %v1892, %v1887
        %v1897 = vextract.low.u32 %v1896
        %v1898 = vextract.high.u32 %v1896
        %v1899 = vmul.u32 %v1892, %v1883
        %v1900 = vadd.s32 %v1895, %v1897
        %vm1901 = vc.u32 %v1895, %v1897
        %v1902 = vadd.s32 %v1898, 1
        %v1903 = vsel %vm1901, %v1902, %v1898
        %v1904 = vadd.s32 %v1899, %v1903
        %v1905 = vadd.s32 %v1904, 536870912
        %v1906 = vshrl.u32 %v1905, 30
        %v1907 = vshll.u32 %v1906, 30
        %v1908 = vsub.s32 %v1904, %v1907
        %vm1909 = vcmp.lt.s32.totalorder %v1908, 0
        %v1910 = vsub.s32 0, %v1908
        %v1911 = vsel %vm1909, %v1910, %v1908
        %v1912 = vclz %v1911
        %v1913 = vsub.s32 %v1912, 2
        %vm1914 = vcmp.gt.s32.totalorder 0, %v1913
        %v1915 = vsel %vm1914, 0, %v1913
        %v1916 = vsub.s32 32, %v1915
        %v1917 = vshll.u32 %v1908, %v1915
        %v1918 = vshrl.u32 %v1900, %v1916
        %v1919 = vor.u32 %v1917, %v1918
        %v1920 = vsub.s32 4294967266, %v1915
        %v1921 = vadd.s32 %v1920, 127
        %v1922 = vshll.u32 %v1921, 23
        %v1923 = vor.u32 4788187, %v1922
        %v1924 = vand.u32 2147483647, %v1923
        %v1926 = vcvt.s32.f32 %v1919
        %v1927 = vmul.f32 %v1926, %v1924
        %v1928 = vxor.u32 %v1927, 2147483648
        %v1929 = vsel %vm1846, %v1928, %v1927
        %v1930 = vsub.s32 4, %v1906
        %v1931 = vsel %vm1846, %v1930, %v1906
        %v1932 = vsel %vm1845, %v1630, %v1929
        %v1933 = vsel %vm1845, 0, %v1931
        %v1934 = vcosq.f32.pop %v1932
        %v1935 = vsinq.f32.pop %v1932
        %vm1936 = vweird.f32 %v1630
        %v1937 = vadd.s32 %v1933, 3
        %v1938 = vand.u32 %v1937, 3
        %vm1939 = vcmp.lt.s32.totalorder %v1938, 2
        %vm1940 = vcmp.eq.s32.totalorder %v1938, 0
        %v1941 = vxor.u32 %v1935, 2147483648
        %v1942 = vsel %vm1940, %v1934, %v1941
        %vm1943 = vcmp.eq.s32.totalorder %v1938, 2
        %v1944 = vxor.u32 %v1934, 2147483648
        %v1945 = vsel %vm1943, %v1944, %v1935
        %v1946 = vsel %vm1939, %v1942, %v1945
        %v1947 = vsel %vm1936, nan, %v1946
        %v1948 = vand.u32 2147483647, %v1631
        %vm1949 = vcmp.le.f32.partialorder %v1948, 0.7853982
        %vm1950 = vcmp.lt.s32.totalorder %v1631, 0
        %v1951 = vand.u32 %v1631, 2139095040
        %v1952 = vshrl.u32 %v1951, 23
        %v1953 = vsub.s32 %v1952, 127
        %v1954 = vand.u32 2147483647, %v1631
        %v1955 = vand.u32 %v1954, 8388607
        %v1956 = vor.u32 %v1955, 8388608
        %v1957 = vsub.s32 0, %v1956
        %v1958 = vadd.s32 %v1953, 1
        %vm1959 = vcmp.gt.s32.totalorder %v1958, 0
        %v1960 = vsel %vm1959, %v1958, 0
        %v1961 = vshrl.u32 %v1960, 5
        %v1962 = vand.u32 %v1960, 31
        %v1963 = vsub.s32 32, %v1962
        %v1964 = vshrl.u32 683565275, %v1963
        %v1965 = vshll.u32 683565275, %v1962
        %v1966 = vshrl.u32 2475754826, %v1963
        %v1967 = vor.u32 %v1965, %v1966
        %v1968 = vshll.u32 2475754826, %v1962
        %v1969 = vshrl.u32 2131351028, %v1963
        %v1970 = vor.u32 %v1968, %v1969
        %v1971 = vshll.u32 2131351028, %v1962
        %v1972 = vshrl.u32 2102212464, %v1963
        %v1973 = vor.u32 %v1971, %v1972
        %v1974 = vshll.u32 2102212464, %v1962
        %v1975 = vshrl.u32 920167782, %v1963
        %v1976 = vor.u32 %v1974, %v1975
        %v1977 = vshll.u32 920167782, %v1962
        %v1978 = vshrl.u32 1326507024, %v1963
        %v1979 = vor.u32 %v1977, %v1978
        %vm1980 = vcmp.lt.s32.totalorder %v1961, 1
        %vm1981 = vcmp.lt.s32.totalorder %v1961, 2
        %vm1982 = vcmp.lt.s32.totalorder %v1961, 3
        %vm1983 = vcmp.lt.s32.totalorder %v1961, 4
        %v1984 = vsel %vm1980, %v1964, %v1967
        %v1985 = vsel %vm1983, %v1973, 2102212464
        %v1986 = vsel %vm1982, %v1970, %v1985
        %v1987 = vsel %vm1981, %v1984, %v1986
        %v1988 = vsel %vm1980, %v1967, %v1970
        %v1989 = vsel %vm1983, %v1976, 920167782
        %v1990 = vsel %vm1982, %v1973, %v1989
        %v1991 = vsel %vm1981, %v1988, %v1990
        %v1992 = vsel %vm1980, %v1970, %v1973
        %v1993 = vsel %vm1983, %v1979, 1326507024
        %v1994 = vsel %vm1982, %v1976, %v1993
        %v1995 = vsel %vm1981, %v1992, %v1994
        %v1996 = vshll.u32 %v1956, 8
        %v1997 = vmul.u32.u64.compose %v1996, %v1995
        %v1998 = vextract.low.u32 %v1997
        %v1999 = vextract.high.u32 %v1997
        %v2000 = vmul.u32.u64.compose %v1996, %v1991
        %v2001 = vextract.low.u32 %v2000
        %v2002 = vextract.high.u32 %v2000
        %v2003 = vmul.u32 %v1996, %v1987
        %v2004 = vadd.s32 %v1999, %v2001
        %vm2005 = vc.u32 %v1999, %v2001
        %v2006 = vadd.s32 %v2002, 1
        %v2007 = vsel %vm2005, %v2006, %v2002
        %v2008 = vadd.s32 %v2003, %v2007
        %v2009 = vadd.s32 %v2008, 536870912
        %v2010 = vshrl.u32 %v2009, 30
        %v2011 = vshll.u32 %v2010, 30
        %v2012 = vsub.s32 %v2008, %v2011
        %vm2013 = vcmp.lt.s32.totalorder %v2012, 0
        %v2014 = vsub.s32 0, %v2012
        %v2015 = vsel %vm2013, %v2014, %v2012
        %v2016 = vclz %v2015
        %v2017 = vsub.s32 %v2016, 2
        %vm2018 = vcmp.gt.s32.totalorder 0, %v2017
        %v2019 = vsel %vm2018, 0, %v2017
        %v2020 = vsub.s32 32, %v2019
        %v2021 = vshll.u32 %v2012, %v2019
        %v2022 = vshrl.u32 %v2004, %v2020
        %v2023 = vor.u32 %v2021, %v2022
        %v2024 = vsub.s32 4294967266, %v2019
        %v2025 = vadd.s32 %v2024, 127
        %v2026 = vshll.u32 %v2025, 23
        %v2027 = vor.u32 4788187, %v2026
        %v2028 = vand.u32 2147483647, %v2027
        %v2030 = vcvt.s32.f32 %v2023
        %v2031 = vmul.f32 %v2030, %v2028
        %v2032 = vxor.u32 %v2031, 2147483648
        %v2033 = vsel %vm1950, %v2032, %v2031
        %v2034 = vsub.s32 4, %v2010
        %v2035 = vsel %vm1950, %v2034, %v2010
        %v2036 = vsel %vm1949, %v1631, %v2033
        %v2037 = vsel %vm1949, 0, %v2035
        %v2038 = vcosq.f32.pop %v2036
        %v2039 = vsinq.f32.pop %v2036
        %vm2040 = vweird.f32 %v1631
        %v2041 = vadd.s32 %v2037, 3
        %v2042 = vand.u32 %v2041, 3
        %vm2043 = vcmp.lt.s32.totalorder %v2042, 2
        %vm2044 = vcmp.eq.s32.totalorder %v2042, 0
        %v2045 = vxor.u32 %v2039, 2147483648
        %v2046 = vsel %vm2044, %v2038, %v2045
        %vm2047 = vcmp.eq.s32.totalorder %v2042, 2
        %v2048 = vxor.u32 %v2038, 2147483648
        %v2049 = vsel %vm2047, %v2048, %v2039
        %v2050 = vsel %vm2043, %v2046, %v2049
        %v2051 = vsel %vm2040, nan, %v2050
        %v2052 = vand.u32 2147483647, %v1632
        %vm2053 = vcmp.le.f32.partialorder %v2052, 0.7853982
        %vm2054 = vcmp.lt.s32.totalorder %v1632, 0
        %v2055 = vand.u32 %v1632, 2139095040
        %v2056 = vshrl.u32 %v2055, 23
        %v2057 = vsub.s32 %v2056, 127
        %v2058 = vand.u32 2147483647, %v1632
        %v2059 = vand.u32 %v2058, 8388607
        %v2060 = vor.u32 %v2059, 8388608
        %v2061 = vsub.s32 0, %v2060
        %v2062 = vadd.s32 %v2057, 1
        %vm2063 = vcmp.gt.s32.totalorder %v2062, 0
        %v2064 = vsel %vm2063, %v2062, 0
        %v2065 = vshrl.u32 %v2064, 5
        %v2066 = vand.u32 %v2064, 31
        %v2067 = vsub.s32 32, %v2066
        %v2068 = vshrl.u32 683565275, %v2067
        %v2069 = vshll.u32 683565275, %v2066
        %v2070 = vshrl.u32 2475754826, %v2067
        %v2071 = vor.u32 %v2069, %v2070
        %v2072 = vshll.u32 2475754826, %v2066
        %v2073 = vshrl.u32 2131351028, %v2067
        %v2074 = vor.u32 %v2072, %v2073
        %v2075 = vshll.u32 2131351028, %v2066
        %v2076 = vshrl.u32 2102212464, %v2067
        %v2077 = vor.u32 %v2075, %v2076
        %v2078 = vshll.u32 2102212464, %v2066
        %v2079 = vshrl.u32 920167782, %v2067
        %v2080 = vor.u32 %v2078, %v2079
        %v2081 = vshll.u32 920167782, %v2066
        %v2082 = vshrl.u32 1326507024, %v2067
        %v2083 = vor.u32 %v2081, %v2082
        %vm2084 = vcmp.lt.s32.totalorder %v2065, 1
        %vm2085 = vcmp.lt.s32.totalorder %v2065, 2
        %vm2086 = vcmp.lt.s32.totalorder %v2065, 3
        %vm2087 = vcmp.lt.s32.totalorder %v2065, 4
        %v2088 = vsel %vm2084, %v2068, %v2071
        %v2089 = vsel %vm2087, %v2077, 2102212464
        %v2090 = vsel %vm2086, %v2074, %v2089
        %v2091 = vsel %vm2085, %v2088, %v2090
        %v2092 = vsel %vm2084, %v2071, %v2074
        %v2093 = vsel %vm2087, %v2080, 920167782
        %v2094 = vsel %vm2086, %v2077, %v2093
        %v2095 = vsel %vm2085, %v2092, %v2094
        %v2096 = vsel %vm2084, %v2074, %v2077
        %v2097 = vsel %vm2087, %v2083, 1326507024
        %v2098 = vsel %vm2086, %v2080, %v2097
        %v2099 = vsel %vm2085, %v2096, %v2098
        %v2100 = vshll.u32 %v2060, 8
        %v2101 = vmul.u32.u64.compose %v2100, %v2099
        %v2102 = vextract.low.u32 %v2101
        %v2103 = vextract.high.u32 %v2101
        %v2104 = vmul.u32.u64.compose %v2100, %v2095
        %v2105 = vextract.low.u32 %v2104
        %v2106 = vextract.high.u32 %v2104
        %v2107 = vmul.u32 %v2100, %v2091
        %v2108 = vadd.s32 %v2103, %v2105
        %vm2109 = vc.u32 %v2103, %v2105
        %v2110 = vadd.s32 %v2106, 1
        %v2111 = vsel %vm2109, %v2110, %v2106
        %v2112 = vadd.s32 %v2107, %v2111
        %v2113 = vadd.s32 %v2112, 536870912
        %v2114 = vshrl.u32 %v2113, 30
        %v2115 = vshll.u32 %v2114, 30
        %v2116 = vsub.s32 %v2112, %v2115
        %vm2117 = vcmp.lt.s32.totalorder %v2116, 0
        %v2118 = vsub.s32 0, %v2116
        %v2119 = vsel %vm2117, %v2118, %v2116
        %v2120 = vclz %v2119
        %v2121 = vsub.s32 %v2120, 2
        %vm2122 = vcmp.gt.s32.totalorder 0, %v2121
        %v2123 = vsel %vm2122, 0, %v2121
        %v2124 = vsub.s32 32, %v2123
        %v2125 = vshll.u32 %v2116, %v2123
        %v2126 = vshrl.u32 %v2108, %v2124
        %v2127 = vor.u32 %v2125, %v2126
        %v2128 = vsub.s32 4294967266, %v2123
        %v2129 = vadd.s32 %v2128, 127
        %v2130 = vshll.u32 %v2129, 23
        %v2131 = vor.u32 4788187, %v2130
        %v2132 = vand.u32 2147483647, %v2131
        %v2134 = vcvt.s32.f32 %v2127
        %v2135 = vmul.f32 %v2134, %v2132
        %v2136 = vxor.u32 %v2135, 2147483648
        %v2137 = vsel %vm2054, %v2136, %v2135
        %v2138 = vsub.s32 4, %v2114
        %v2139 = vsel %vm2054, %v2138, %v2114
        %v2140 = vsel %vm2053, %v1632, %v2137
        %v2141 = vsel %vm2053, 0, %v2139
        %v2142 = vcosq.f32.pop %v2140
        %v2143 = vsinq.f32.pop %v2140
        %vm2144 = vweird.f32 %v1632
        %v2145 = vadd.s32 %v2141, 3
        %v2146 = vand.u32 %v2145, 3
        %vm2147 = vcmp.lt.s32.totalorder %v2146, 2
        %vm2148 = vcmp.eq.s32.totalorder %v2146, 0
        %v2149 = vxor.u32 %v2143, 2147483648
        %v2150 = vsel %vm2148, %v2142, %v2149
        %vm2151 = vcmp.eq.s32.totalorder %v2146, 2
        %v2152 = vxor.u32 %v2142, 2147483648
        %v2153 = vsel %vm2151, %v2152, %v2143
        %v2154 = vsel %vm2147, %v2150, %v2153
        %v2155 = vsel %vm2144, nan, %v2154
        %v2156 = vand.u32 2147483647, %v1633
        %vm2157 = vcmp.le.f32.partialorder %v2156, 0.7853982
        %vm2158 = vcmp.lt.s32.totalorder %v1633, 0
        %v2159 = vand.u32 %v1633, 2139095040
        %v2160 = vshrl.u32 %v2159, 23
        %v2161 = vsub.s32 %v2160, 127
        %v2162 = vand.u32 2147483647, %v1633
        %v2163 = vand.u32 %v2162, 8388607
        %v2164 = vor.u32 %v2163, 8388608
        %v2165 = vsub.s32 0, %v2164
        %v2166 = vadd.s32 %v2161, 1
        %vm2167 = vcmp.gt.s32.totalorder %v2166, 0
        %v2168 = vsel %vm2167, %v2166, 0
        %v2169 = vshrl.u32 %v2168, 5
        %v2170 = vand.u32 %v2168, 31
        %v2171 = vsub.s32 32, %v2170
        %v2172 = vshrl.u32 683565275, %v2171
        %v2173 = vshll.u32 683565275, %v2170
        %v2174 = vshrl.u32 2475754826, %v2171
        %v2175 = vor.u32 %v2173, %v2174
        %v2176 = vshll.u32 2475754826, %v2170
        %v2177 = vshrl.u32 2131351028, %v2171
        %v2178 = vor.u32 %v2176, %v2177
        %v2179 = vshll.u32 2131351028, %v2170
        %v2180 = vshrl.u32 2102212464, %v2171
        %v2181 = vor.u32 %v2179, %v2180
        %v2182 = vshll.u32 2102212464, %v2170
        %v2183 = vshrl.u32 920167782, %v2171
        %v2184 = vor.u32 %v2182, %v2183
        %v2185 = vshll.u32 920167782, %v2170
        %v2186 = vshrl.u32 1326507024, %v2171
        %v2187 = vor.u32 %v2185, %v2186
        %vm2188 = vcmp.lt.s32.totalorder %v2169, 1
        %vm2189 = vcmp.lt.s32.totalorder %v2169, 2
        %vm2190 = vcmp.lt.s32.totalorder %v2169, 3
        %vm2191 = vcmp.lt.s32.totalorder %v2169, 4
        %v2192 = vsel %vm2188, %v2172, %v2175
        %v2193 = vsel %vm2191, %v2181, 2102212464
        %v2194 = vsel %vm2190, %v2178, %v2193
        %v2195 = vsel %vm2189, %v2192, %v2194
        %v2196 = vsel %vm2188, %v2175, %v2178
        %v2197 = vsel %vm2191, %v2184, 920167782
        %v2198 = vsel %vm2190, %v2181, %v2197
        %v2199 = vsel %vm2189, %v2196, %v2198
        %v2200 = vsel %vm2188, %v2178, %v2181
        %v2201 = vsel %vm2191, %v2187, 1326507024
        %v2202 = vsel %vm2190, %v2184, %v2201
        %v2203 = vsel %vm2189, %v2200, %v2202
        %v2204 = vshll.u32 %v2164, 8
        %v2205 = vmul.u32.u64.compose %v2204, %v2203
        %v2206 = vextract.low.u32 %v2205
        %v2207 = vextract.high.u32 %v2205
        %v2208 = vmul.u32.u64.compose %v2204, %v2199
        %v2209 = vextract.low.u32 %v2208
        %v2210 = vextract.high.u32 %v2208
        %v2211 = vmul.u32 %v2204, %v2195
        %v2212 = vadd.s32 %v2207, %v2209
        %vm2213 = vc.u32 %v2207, %v2209
        %v2214 = vadd.s32 %v2210, 1
        %v2215 = vsel %vm2213, %v2214, %v2210
        %v2216 = vadd.s32 %v2211, %v2215
        %v2217 = vadd.s32 %v2216, 536870912
        %v2218 = vshrl.u32 %v2217, 30
        %v2219 = vshll.u32 %v2218, 30
        %v2220 = vsub.s32 %v2216, %v2219
        %vm2221 = vcmp.lt.s32.totalorder %v2220, 0
        %v2222 = vsub.s32 0, %v2220
        %v2223 = vsel %vm2221, %v2222, %v2220
        %v2224 = vclz %v2223
        %v2225 = vsub.s32 %v2224, 2
        %vm2226 = vcmp.gt.s32.totalorder 0, %v2225
        %v2227 = vsel %vm2226, 0, %v2225
        %v2228 = vsub.s32 32, %v2227
        %v2229 = vshll.u32 %v2220, %v2227
        %v2230 = vshrl.u32 %v2212, %v2228
        %v2231 = vor.u32 %v2229, %v2230
        %v2232 = vsub.s32 4294967266, %v2227
        %v2233 = vadd.s32 %v2232, 127
        %v2234 = vshll.u32 %v2233, 23
        %v2235 = vor.u32 4788187, %v2234
        %v2236 = vand.u32 2147483647, %v2235
        %v2238 = vcvt.s32.f32 %v2231
        %v2239 = vmul.f32 %v2238, %v2236
        %v2240 = vxor.u32 %v2239, 2147483648
        %v2241 = vsel %vm2158, %v2240, %v2239
        %v2242 = vsub.s32 4, %v2218
        %v2243 = vsel %vm2158, %v2242, %v2218
        %v2244 = vsel %vm2157, %v1633, %v2241
        %v2245 = vsel %vm2157, 0, %v2243
        %v2246 = vcosq.f32.pop %v2244
        %v2247 = vsinq.f32.pop %v2244
        %vm2248 = vweird.f32 %v1633
        %v2249 = vadd.s32 %v2245, 3
        %v2250 = vand.u32 %v2249, 3
        %vm2251 = vcmp.lt.s32.totalorder %v2250, 2
        %vm2252 = vcmp.eq.s32.totalorder %v2250, 0
        %v2253 = vxor.u32 %v2247, 2147483648
        %v2254 = vsel %vm2252, %v2246, %v2253
        %vm2255 = vcmp.eq.s32.totalorder %v2250, 2
        %v2256 = vxor.u32 %v2246, 2147483648
        %v2257 = vsel %vm2255, %v2256, %v2247
        %v2258 = vsel %vm2251, %v2254, %v2257
        %v2259 = vsel %vm2248, nan, %v2258
        %v2260 = vand.u32 2147483647, %v1634
        %vm2261 = vcmp.le.f32.partialorder %v2260, 0.7853982
        %vm2262 = vcmp.lt.s32.totalorder %v1634, 0
        %v2263 = vand.u32 %v1634, 2139095040
        %v2264 = vshrl.u32 %v2263, 23
        %v2265 = vsub.s32 %v2264, 127
        %v2266 = vand.u32 2147483647, %v1634
        %v2267 = vand.u32 %v2266, 8388607
        %v2268 = vor.u32 %v2267, 8388608
        %v2269 = vsub.s32 0, %v2268
        %v2270 = vadd.s32 %v2265, 1
        %vm2271 = vcmp.gt.s32.totalorder %v2270, 0
        %v2272 = vsel %vm2271, %v2270, 0
        %v2273 = vshrl.u32 %v2272, 5
        %v2274 = vand.u32 %v2272, 31
        %v2275 = vsub.s32 32, %v2274
        %v2276 = vshrl.u32 683565275, %v2275
        %v2277 = vshll.u32 683565275, %v2274
        %v2278 = vshrl.u32 2475754826, %v2275
        %v2279 = vor.u32 %v2277, %v2278
        %v2280 = vshll.u32 2475754826, %v2274
        %v2281 = vshrl.u32 2131351028, %v2275
        %v2282 = vor.u32 %v2280, %v2281
        %v2283 = vshll.u32 2131351028, %v2274
        %v2284 = vshrl.u32 2102212464, %v2275
        %v2285 = vor.u32 %v2283, %v2284
        %v2286 = vshll.u32 2102212464, %v2274
        %v2287 = vshrl.u32 920167782, %v2275
        %v2288 = vor.u32 %v2286, %v2287
        %v2289 = vshll.u32 920167782, %v2274
        %v2290 = vshrl.u32 1326507024, %v2275
        %v2291 = vor.u32 %v2289, %v2290
        %vm2292 = vcmp.lt.s32.totalorder %v2273, 1
        %vm2293 = vcmp.lt.s32.totalorder %v2273, 2
        %vm2294 = vcmp.lt.s32.totalorder %v2273, 3
        %vm2295 = vcmp.lt.s32.totalorder %v2273, 4
        %v2296 = vsel %vm2292, %v2276, %v2279
        %v2297 = vsel %vm2295, %v2285, 2102212464
        %v2298 = vsel %vm2294, %v2282, %v2297
        %v2299 = vsel %vm2293, %v2296, %v2298
        %v2300 = vsel %vm2292, %v2279, %v2282
        %v2301 = vsel %vm2295, %v2288, 920167782
        %v2302 = vsel %vm2294, %v2285, %v2301
        %v2303 = vsel %vm2293, %v2300, %v2302
        %v2304 = vsel %vm2292, %v2282, %v2285
        %v2305 = vsel %vm2295, %v2291, 1326507024
        %v2306 = vsel %vm2294, %v2288, %v2305
        %v2307 = vsel %vm2293, %v2304, %v2306
        %v2308 = vshll.u32 %v2268, 8
        %v2309 = vmul.u32.u64.compose %v2308, %v2307
        %v2310 = vextract.low.u32 %v2309
        %v2311 = vextract.high.u32 %v2309
        %v2312 = vmul.u32.u64.compose %v2308, %v2303
        %v2313 = vextract.low.u32 %v2312
        %v2314 = vextract.high.u32 %v2312
        %v2315 = vmul.u32 %v2308, %v2299
        %v2316 = vadd.s32 %v2311, %v2313
        %vm2317 = vc.u32 %v2311, %v2313
        %v2318 = vadd.s32 %v2314, 1
        %v2319 = vsel %vm2317, %v2318, %v2314
        %v2320 = vadd.s32 %v2315, %v2319
        %v2321 = vadd.s32 %v2320, 536870912
        %v2322 = vshrl.u32 %v2321, 30
        %v2323 = vshll.u32 %v2322, 30
        %v2324 = vsub.s32 %v2320, %v2323
        %vm2325 = vcmp.lt.s32.totalorder %v2324, 0
        %v2326 = vsub.s32 0, %v2324
        %v2327 = vsel %vm2325, %v2326, %v2324
        %v2328 = vclz %v2327
        %v2329 = vsub.s32 %v2328, 2
        %vm2330 = vcmp.gt.s32.totalorder 0, %v2329
        %v2331 = vsel %vm2330, 0, %v2329
        %v2332 = vsub.s32 32, %v2331
        %v2333 = vshll.u32 %v2324, %v2331
        %v2334 = vshrl.u32 %v2316, %v2332
        %v2335 = vor.u32 %v2333, %v2334
        %v2336 = vsub.s32 4294967266, %v2331
        %v2337 = vadd.s32 %v2336, 127
        %v2338 = vshll.u32 %v2337, 23
        %v2339 = vor.u32 4788187, %v2338
        %v2340 = vand.u32 2147483647, %v2339
        %v2342 = vcvt.s32.f32 %v2335
        %v2343 = vmul.f32 %v2342, %v2340
        %v2344 = vxor.u32 %v2343, 2147483648
        %v2345 = vsel %vm2262, %v2344, %v2343
        %v2346 = vsub.s32 4, %v2322
        %v2347 = vsel %vm2262, %v2346, %v2322
        %v2348 = vsel %vm2261, %v1634, %v2345
        %v2349 = vsel %vm2261, 0, %v2347
        %v2350 = vcosq.f32.pop %v2348
        %v2351 = vsinq.f32.pop %v2348
        %vm2352 = vweird.f32 %v1634
        %v2353 = vadd.s32 %v2349, 3
        %v2354 = vand.u32 %v2353, 3
        %vm2355 = vcmp.lt.s32.totalorder %v2354, 2
        %vm2356 = vcmp.eq.s32.totalorder %v2354, 0
        %v2357 = vxor.u32 %v2351, 2147483648
        %v2358 = vsel %vm2356, %v2350, %v2357
        %vm2359 = vcmp.eq.s32.totalorder %v2354, 2
        %v2360 = vxor.u32 %v2350, 2147483648
        %v2361 = vsel %vm2359, %v2360, %v2351
        %v2362 = vsel %vm2355, %v2358, %v2361
        %v2363 = vsel %vm2352, nan, %v2362
        %v2364 = vand.u32 2147483647, %v1635
        %vm2365 = vcmp.le.f32.partialorder %v2364, 0.7853982
        %vm2366 = vcmp.lt.s32.totalorder %v1635, 0
        %v2367 = vand.u32 %v1635, 2139095040
        %v2368 = vshrl.u32 %v2367, 23
        %v2369 = vsub.s32 %v2368, 127
        %v2370 = vand.u32 2147483647, %v1635
        %v2371 = vand.u32 %v2370, 8388607
        %v2372 = vor.u32 %v2371, 8388608
        %v2373 = vsub.s32 0, %v2372
        %v2374 = vadd.s32 %v2369, 1
        %vm2375 = vcmp.gt.s32.totalorder %v2374, 0
        %v2376 = vsel %vm2375, %v2374, 0
        %v2377 = vshrl.u32 %v2376, 5
        %v2378 = vand.u32 %v2376, 31
        %v2379 = vsub.s32 32, %v2378
        %v2380 = vshrl.u32 683565275, %v2379
        %v2381 = vshll.u32 683565275, %v2378
        %v2382 = vshrl.u32 2475754826, %v2379
        %v2383 = vor.u32 %v2381, %v2382
        %v2384 = vshll.u32 2475754826, %v2378
        %v2385 = vshrl.u32 2131351028, %v2379
        %v2386 = vor.u32 %v2384, %v2385
        %v2387 = vshll.u32 2131351028, %v2378
        %v2388 = vshrl.u32 2102212464, %v2379
        %v2389 = vor.u32 %v2387, %v2388
        %v2390 = vshll.u32 2102212464, %v2378
        %v2391 = vshrl.u32 920167782, %v2379
        %v2392 = vor.u32 %v2390, %v2391
        %v2393 = vshll.u32 920167782, %v2378
        %v2394 = vshrl.u32 1326507024, %v2379
        %v2395 = vor.u32 %v2393, %v2394
        %vm2396 = vcmp.lt.s32.totalorder %v2377, 1
        %vm2397 = vcmp.lt.s32.totalorder %v2377, 2
        %vm2398 = vcmp.lt.s32.totalorder %v2377, 3
        %vm2399 = vcmp.lt.s32.totalorder %v2377, 4
        %v2400 = vsel %vm2396, %v2380, %v2383
        %v2401 = vsel %vm2399, %v2389, 2102212464
        %v2402 = vsel %vm2398, %v2386, %v2401
        %v2403 = vsel %vm2397, %v2400, %v2402
        %v2404 = vsel %vm2396, %v2383, %v2386
        %v2405 = vsel %vm2399, %v2392, 920167782
        %v2406 = vsel %vm2398, %v2389, %v2405
        %v2407 = vsel %vm2397, %v2404, %v2406
        %v2408 = vsel %vm2396, %v2386, %v2389
        %v2409 = vsel %vm2399, %v2395, 1326507024
        %v2410 = vsel %vm2398, %v2392, %v2409
        %v2411 = vsel %vm2397, %v2408, %v2410
        %v2412 = vshll.u32 %v2372, 8
        %v2413 = vmul.u32.u64.compose %v2412, %v2411
        %v2414 = vextract.low.u32 %v2413
        %v2415 = vextract.high.u32 %v2413
        %v2416 = vmul.u32.u64.compose %v2412, %v2407
        %v2417 = vextract.low.u32 %v2416
        %v2418 = vextract.high.u32 %v2416
        %v2419 = vmul.u32 %v2412, %v2403
        %v2420 = vadd.s32 %v2415, %v2417
        %vm2421 = vc.u32 %v2415, %v2417
        %v2422 = vadd.s32 %v2418, 1
        %v2423 = vsel %vm2421, %v2422, %v2418
        %v2424 = vadd.s32 %v2419, %v2423
        %v2425 = vadd.s32 %v2424, 536870912
        %v2426 = vshrl.u32 %v2425, 30
        %v2427 = vshll.u32 %v2426, 30
        %v2428 = vsub.s32 %v2424, %v2427
        %vm2429 = vcmp.lt.s32.totalorder %v2428, 0
        %v2430 = vsub.s32 0, %v2428
        %v2431 = vsel %vm2429, %v2430, %v2428
        %v2432 = vclz %v2431
        %v2433 = vsub.s32 %v2432, 2
        %vm2434 = vcmp.gt.s32.totalorder 0, %v2433
        %v2435 = vsel %vm2434, 0, %v2433
        %v2436 = vsub.s32 32, %v2435
        %v2437 = vshll.u32 %v2428, %v2435
        %v2438 = vshrl.u32 %v2420, %v2436
        %v2439 = vor.u32 %v2437, %v2438
        %v2440 = vsub.s32 4294967266, %v2435
        %v2441 = vadd.s32 %v2440, 127
        %v2442 = vshll.u32 %v2441, 23
        %v2443 = vor.u32 4788187, %v2442
        %v2444 = vand.u32 2147483647, %v2443
        %v2446 = vcvt.s32.f32 %v2439
        %v2447 = vmul.f32 %v2446, %v2444
        %v2448 = vxor.u32 %v2447, 2147483648
        %v2449 = vsel %vm2366, %v2448, %v2447
        %v2450 = vsub.s32 4, %v2426
        %v2451 = vsel %vm2366, %v2450, %v2426
        %v2452 = vsel %vm2365, %v1635, %v2449
        %v2453 = vsel %vm2365, 0, %v2451
        %v2454 = vcosq.f32.pop %v2452
        %v2455 = vsinq.f32.pop %v2452
        %vm2456 = vweird.f32 %v1635
        %v2457 = vadd.s32 %v2453, 3
        %v2458 = vand.u32 %v2457, 3
        %vm2459 = vcmp.lt.s32.totalorder %v2458, 2
        %vm2460 = vcmp.eq.s32.totalorder %v2458, 0
        %v2461 = vxor.u32 %v2455, 2147483648
        %v2462 = vsel %vm2460, %v2454, %v2461
        %vm2463 = vcmp.eq.s32.totalorder %v2458, 2
        %v2464 = vxor.u32 %v2454, 2147483648
        %v2465 = vsel %vm2463, %v2464, %v2455
        %v2466 = vsel %vm2459, %v2462, %v2465
        %v2467 = vsel %vm2456, nan, %v2466
        %v2468 = vmul.f32 %v1739, %v1739
        %v2469 = vmul.f32 %v1843, %v1843
        %v2470 = vmul.f32 %v1947, %v1947
        %v2471 = vmul.f32 %v2051, %v2051
        %v2472 = vmul.f32 %v2155, %v2155
        %v2473 = vmul.f32 %v2259, %v2259
        %v2474 = vmul.f32 %v2363, %v2363
        %v2475 = vmul.f32 %v2467, %v2467
        %v2476 = vmul.f32 %v1595, %v2468
        %v2477 = vmul.f32 %v1595, %v2469
        %v2478 = vmul.f32 %v1600, %v2470
        %v2479 = vmul.f32 %v1600, %v2471
        %v2480 = vmul.f32 %v1605, %v2472
        %v2481 = vmul.f32 %v1605, %v2473
        %v2482 = vmul.f32 %v1610, %v2474
        %v2483 = vmul.f32 %v1610, %v2475
        %v2484 = vadd.f32 %v716, %v2476
        %v2485 = vadd.f32 %v717, %v2477
        %v2486 = vadd.f32 %v718, %v2478
        %v2487 = vadd.f32 %v719, %v2479
        %v2488 = vadd.f32 %v720, %v2480
        %v2489 = vadd.f32 %v721, %v2481
        %v2490 = vadd.f32 %v722, %v2482
        %v2491 = vadd.f32 %v723, %v2483
        %v2492 = vlaneseq
        %v2493 = vand.u32 %v2492, 127
        %v2494 = vadd.s32 %v2493, 128
        %vm2495 = vcmp.lt.s32.totalorder %v2493, 4
        %vm2496 = vcmp.lt.s32.totalorder %v2494, 4
        %vm2497 = vcmp.ge.s32.totalorder %v2493, 20
        %vm2498 = vcmp.ge.s32.totalorder %v2494, 20
        %v2499 = vsel %vm2497, 1, 0
        %v2500 = vsel %vm2498, 1, 0
        %vm2501 = vcmp.eq.s32.totalorder %v2499, 1
        %vm2502 = vcmp.eq.s32.totalorder %v2500, 1
        %2504 = vset.pattern.permute.xlu0 21
        %2505 = vperm.xlu0 %2504, %v2484
        %v2506 = vpop.permute.xlu0 %2505
        %2509 = vset.pattern.permute.xlu0 21
        %2510 = vperm.xlu0 %2509, %v2486
        %v2511 = vpop.permute.xlu0 %2510
        %2514 = vset.pattern.permute.xlu0 21
        %2515 = vperm.xlu0 %2514, %v2488
        %v2516 = vpop.permute.xlu0 %2515
        %2519 = vset.pattern.permute.xlu0 21
        %2520 = vperm.xlu0 %2519, %v2490
        %v2521 = vpop.permute.xlu0 %2520
        %2531 = vrot.lane.b32.xlu0 %v1620, 127
        %v2532 = vpop.permute.xlu0 %2531
        %2533 = vrot.lane.b32.xlu0 %v1621, 127
        %v2534 = vpop.permute.xlu0 %2533
        %2535 = vrot.lane.b32.xlu0 %v1622, 127
        %v2536 = vpop.permute.xlu0 %2535
        %2537 = vrot.lane.b32.xlu0 %v1623, 127
        %v2538 = vpop.permute.xlu0 %2537
        %2539 = vrot.lane.b32.xlu0 %v1624, 127
        %v2540 = vpop.permute.xlu0 %2539
        %2541 = vrot.lane.b32.xlu0 %v1625, 127
        %v2542 = vpop.permute.xlu0 %2541
        %2543 = vrot.lane.b32.xlu0 %v1626, 127
        %v2544 = vpop.permute.xlu0 %2543
        %2545 = vrot.lane.b32.xlu0 %v1627, 127
        %v2546 = vpop.permute.xlu0 %2545
        %v2547 = vsel %vm311, %v2532, %v2534
        %v2548 = vsel %vm311, %v2536, %v2538
        %v2549 = vsel %vm311, %v2540, %v2542
        %v2550 = vsel %vm311, %v2544, %v2546
        %v2559 = vsel %vm2501, %v2506, %v2547
        %v2560 = vsel %vm2502, %v2506, %v2534
        %v2561 = vsel %vm2501, %v2511, %v2548
        %v2562 = vsel %vm2502, %v2511, %v2538
        %v2563 = vsel %vm2501, %v2516, %v2549
        %v2564 = vsel %vm2502, %v2516, %v2542
        %v2565 = vsel %vm2501, %v2521, %v2550
        %v2566 = vsel %vm2502, %v2521, %v2546
        %v2567 = vsel %vm2495, 1, 0
        %v2568 = vsel %vm2496, 1, 0
        %vm2569 = vcmp.eq.s32.totalorder %v2567, 1
        %vm2570 = vcmp.eq.s32.totalorder %v2568, 1
        %2571 = vset.pattern.permute.xlu0 5
        %2572 = vperm.xlu0 %2571, %v1620
        %v2573 = vpop.permute.xlu0 %2572
        %2575 = vset.pattern.permute.xlu0 5
        %2576 = vperm.xlu0 %2575, %v1622
        %v2577 = vpop.permute.xlu0 %2576
        %2579 = vset.pattern.permute.xlu0 5
        %2580 = vperm.xlu0 %2579, %v1624
        %v2581 = vpop.permute.xlu0 %2580
        %2583 = vset.pattern.permute.xlu0 5
        %2584 = vperm.xlu0 %2583, %v1626
        %v2585 = vpop.permute.xlu0 %2584
        %v2587 = vsel %vm2569, %v2573, %v2559
        %v2588 = vsel %vm2570, %v2573, %v2560
        %v2589 = vsel %vm2569, %v2577, %v2561
        %v2590 = vsel %vm2570, %v2577, %v2562
        %v2591 = vsel %vm2569, %v2581, %v2563
        %v2592 = vsel %vm2570, %v2581, %v2564
        %v2593 = vsel %vm2569, %v2585, %v2565
        %v2594 = vsel %vm2570, %v2585, %v2566
        %2599 = vrot.lane.b32.xlu0 %v2484, 126
        %v2600 = vpop.permute.xlu0 %2599
        %2601 = vrot.lane.b32.xlu0 %v2485, 126
        %v2602 = vpop.permute.xlu0 %2601
        %2603 = vrot.lane.b32.xlu0 %v2486, 126
        %v2604 = vpop.permute.xlu0 %2603
        %2605 = vrot.lane.b32.xlu0 %v2487, 126
        %v2606 = vpop.permute.xlu0 %2605
        %2607 = vrot.lane.b32.xlu0 %v2488, 126
        %v2608 = vpop.permute.xlu0 %2607
        %2609 = vrot.lane.b32.xlu0 %v2489, 126
        %v2610 = vpop.permute.xlu0 %2609
        %2611 = vrot.lane.b32.xlu0 %v2490, 126
        %v2612 = vpop.permute.xlu0 %2611
        %2613 = vrot.lane.b32.xlu0 %v2491, 126
        %v2614 = vpop.permute.xlu0 %2613
        %v2615 = vsel %vm416, %v2600, %v2602
        %v2616 = vsel %vm416, %v2604, %v2606
        %v2617 = vsel %vm416, %v2608, %v2610
        %v2618 = vsel %vm416, %v2612, %v2614
        %v2627 = vsel %vm2501, %v2506, %v2615
        %v2628 = vsel %vm2502, %v2506, %v2602
        %v2629 = vsel %vm2501, %v2511, %v2616
        %v2630 = vsel %vm2502, %v2511, %v2606
        %v2631 = vsel %vm2501, %v2516, %v2617
        %v2632 = vsel %vm2502, %v2516, %v2610
        %v2633 = vsel %vm2501, %v2521, %v2618
        %v2634 = vsel %vm2502, %v2521, %v2614
        %v2635 = vsel %vm2569, %v2573, %v2627
        %v2636 = vsel %vm2570, %v2573, %v2628
        %v2637 = vsel %vm2569, %v2577, %v2629
        %v2638 = vsel %vm2570, %v2577, %v2630
        %v2639 = vsel %vm2569, %v2581, %v2631
        %v2640 = vsel %vm2570, %v2581, %v2632
        %v2641 = vsel %vm2569, %v2585, %v2633
        %v2642 = vsel %vm2570, %v2585, %v2634
        %v2643 = vmul.f32 %v2587, 0.009389464
        %v2644 = vmul.f32 %v2588, 0.009389464
        %v2645 = vmul.f32 %v2589, 0.009389464
        %v2646 = vmul.f32 %v2590, 0.009389464
        %v2647 = vmul.f32 %v2591, 0.009389464
        %v2648 = vmul.f32 %v2592, 0.009389464
        %v2649 = vmul.f32 %v2593, 0.009389464
        %v2650 = vmul.f32 %v2594, 0.009389464
        %v2651 = vadd.f32 %v2643, 0.0
        %v2652 = vadd.f32 %v2644, 0.0
        %v2653 = vadd.f32 %v2645, 0.0
        %v2654 = vadd.f32 %v2646, 0.0
        %v2655 = vadd.f32 %v2647, 0.0
        %v2656 = vadd.f32 %v2648, 0.0
        %v2657 = vadd.f32 %v2649, 0.0
        %v2658 = vadd.f32 %v2650, 0.0
        %v2659 = vmul.f32 %v2635, 0.0020289666
        %v2660 = vmul.f32 %v2636, 0.0020289666
        %v2661 = vmul.f32 %v2637, 0.0020289666
        %v2662 = vmul.f32 %v2638, 0.0020289666
        %v2663 = vmul.f32 %v2639, 0.0020289666
        %v2664 = vmul.f32 %v2640, 0.0020289666
        %v2665 = vmul.f32 %v2641, 0.0020289666
        %v2666 = vmul.f32 %v2642, 0.0020289666
        %2675 = vrot.lane.b32.xlu0 %v2659, 1
        %v2676 = vpop.permute.xlu0 %2675
        %2677 = vrot.lane.b32.xlu0 %v2660, 1
        %v2678 = vpop.permute.xlu0 %2677
        %2679 = vrot.lane.b32.xlu0 %v2661, 1
        %v2680 = vpop.permute.xlu0 %2679
        %2681 = vrot.lane.b32.xlu0 %v2662, 1
        %v2682 = vpop.permute.xlu0 %2681
        %2683 = vrot.lane.b32.xlu0 %v2663, 1
        %v2684 = vpop.permute.xlu0 %2683
        %2685 = vrot.lane.b32.xlu0 %v2664, 1
        %v2686 = vpop.permute.xlu0 %2685
        %2687 = vrot.lane.b32.xlu0 %v2665, 1
        %v2688 = vpop.permute.xlu0 %2687
        %2689 = vrot.lane.b32.xlu0 %v2666, 1
        %v2690 = vpop.permute.xlu0 %2689
        %vm2691 = vcmask 7168
        %v2692 = vsel %vm2691, %v2676, %v2678
        %v2693 = vsel %vm2691, %v2680, %v2682
        %v2694 = vsel %vm2691, %v2684, %v2686
        %v2695 = vsel %vm2691, %v2688, %v2690
        %v2704 = vadd.f32 %v2651, %v2676
        %v2705 = vadd.f32 %v2652, %v2692
        %v2706 = vadd.f32 %v2653, %v2680
        %v2707 = vadd.f32 %v2654, %v2693
        %v2708 = vadd.f32 %v2655, %v2684
        %v2709 = vadd.f32 %v2656, %v2694
        %v2710 = vadd.f32 %v2657, %v2688
        %v2711 = vadd.f32 %v2658, %v2695
        %v2712 = vmul.f32 %v2587, -0.057657376
        %v2713 = vmul.f32 %v2588, -0.057657376
        %v2714 = vmul.f32 %v2589, -0.057657376
        %v2715 = vmul.f32 %v2590, -0.057657376
        %v2716 = vmul.f32 %v2591, -0.057657376
        %v2717 = vmul.f32 %v2592, -0.057657376
        %v2718 = vmul.f32 %v2593, -0.057657376
        %v2719 = vmul.f32 %v2594, -0.057657376
        %2728 = vrot.lane.b32.xlu0 %v2712, 127
        %v2729 = vpop.permute.xlu0 %2728
        %2730 = vrot.lane.b32.xlu0 %v2713, 127
        %v2731 = vpop.permute.xlu0 %2730
        %2732 = vrot.lane.b32.xlu0 %v2714, 127
        %v2733 = vpop.permute.xlu0 %2732
        %2734 = vrot.lane.b32.xlu0 %v2715, 127
        %v2735 = vpop.permute.xlu0 %2734
        %2736 = vrot.lane.b32.xlu0 %v2716, 127
        %v2737 = vpop.permute.xlu0 %2736
        %2738 = vrot.lane.b32.xlu0 %v2717, 127
        %v2739 = vpop.permute.xlu0 %2738
        %2740 = vrot.lane.b32.xlu0 %v2718, 127
        %v2741 = vpop.permute.xlu0 %2740
        %2742 = vrot.lane.b32.xlu0 %v2719, 127
        %v2743 = vpop.permute.xlu0 %2742
        %v2744 = vsel %vm311, %v2729, %v2731
        %v2745 = vsel %vm311, %v2733, %v2735
        %v2746 = vsel %vm311, %v2737, %v2739
        %v2747 = vsel %vm311, %v2741, %v2743
        %v2756 = vadd.f32 %v2704, %v2744
        %v2757 = vadd.f32 %v2705, %v2731
        %v2758 = vadd.f32 %v2706, %v2745
        %v2759 = vadd.f32 %v2707, %v2735
        %v2760 = vadd.f32 %v2708, %v2746
        %v2761 = vadd.f32 %v2709, %v2739
        %v2762 = vadd.f32 %v2710, %v2747
        %v2763 = vadd.f32 %v2711, %v2743
        %v2764 = vmul.f32 %v2635, -0.025543464
        %v2765 = vmul.f32 %v2636, -0.025543464
        %v2766 = vmul.f32 %v2637, -0.025543464
        %v2767 = vmul.f32 %v2638, -0.025543464
        %v2768 = vmul.f32 %v2639, -0.025543464
        %v2769 = vmul.f32 %v2640, -0.025543464
        %v2770 = vmul.f32 %v2641, -0.025543464
        %v2771 = vmul.f32 %v2642, -0.025543464
        %v2772 = vadd.f32 %v2756, %v2764
        %v2773 = vadd.f32 %v2757, %v2765
        %v2774 = vadd.f32 %v2758, %v2766
        %v2775 = vadd.f32 %v2759, %v2767
        %v2776 = vadd.f32 %v2760, %v2768
        %v2777 = vadd.f32 %v2761, %v2769
        %v2778 = vadd.f32 %v2762, %v2770
        %v2779 = vadd.f32 %v2763, %v2771
        %v2780 = vmul.f32 %v2587, 0.4432098
        %v2781 = vmul.f32 %v2588, 0.4432098
        %v2782 = vmul.f32 %v2589, 0.4432098
        %v2783 = vmul.f32 %v2590, 0.4432098
        %v2784 = vmul.f32 %v2591, 0.4432098
        %v2785 = vmul.f32 %v2592, 0.4432098
        %v2786 = vmul.f32 %v2593, 0.4432098
        %v2787 = vmul.f32 %v2594, 0.4432098
        %2796 = vrot.lane.b32.xlu0 %v2780, 126
        %v2797 = vpop.permute.xlu0 %2796
        %2798 = vrot.lane.b32.xlu0 %v2781, 126
        %v2799 = vpop.permute.xlu0 %2798
        %2800 = vrot.lane.b32.xlu0 %v2782, 126
        %v2801 = vpop.permute.xlu0 %2800
        %2802 = vrot.lane.b32.xlu0 %v2783, 126
        %v2803 = vpop.permute.xlu0 %2802
        %2804 = vrot.lane.b32.xlu0 %v2784, 126
        %v2805 = vpop.permute.xlu0 %2804
        %2806 = vrot.lane.b32.xlu0 %v2785, 126
        %v2807 = vpop.permute.xlu0 %2806
        %2808 = vrot.lane.b32.xlu0 %v2786, 126
        %v2809 = vpop.permute.xlu0 %2808
        %2810 = vrot.lane.b32.xlu0 %v2787, 126
        %v2811 = vpop.permute.xlu0 %2810
        %v2812 = vsel %vm416, %v2797, %v2799
        %v2813 = vsel %vm416, %v2801, %v2803
        %v2814 = vsel %vm416, %v2805, %v2807
        %v2815 = vsel %vm416, %v2809, %v2811
        %v2824 = vadd.f32 %v2772, %v2812
        %v2825 = vadd.f32 %v2773, %v2799
        %v2826 = vadd.f32 %v2774, %v2813
        %v2827 = vadd.f32 %v2775, %v2803
        %v2828 = vadd.f32 %v2776, %v2814
        %v2829 = vadd.f32 %v2777, %v2807
        %v2830 = vadd.f32 %v2778, %v2815
        %v2831 = vadd.f32 %v2779, %v2811
        %v2832 = vmul.f32 %v2635, 0.12857261
        %v2833 = vmul.f32 %v2636, 0.12857261
        %v2834 = vmul.f32 %v2637, 0.12857261
        %v2835 = vmul.f32 %v2638, 0.12857261
        %v2836 = vmul.f32 %v2639, 0.12857261
        %v2837 = vmul.f32 %v2640, 0.12857261
        %v2838 = vmul.f32 %v2641, 0.12857261
        %v2839 = vmul.f32 %v2642, 0.12857261
        %2848 = vrot.lane.b32.xlu0 %v2832, 127
        %v2849 = vpop.permute.xlu0 %2848
        %2850 = vrot.lane.b32.xlu0 %v2833, 127
        %v2851 = vpop.permute.xlu0 %2850
        %2852 = vrot.lane.b32.xlu0 %v2834, 127
        %v2853 = vpop.permute.xlu0 %2852
        %2854 = vrot.lane.b32.xlu0 %v2835, 127
        %v2855 = vpop.permute.xlu0 %2854
        %2856 = vrot.lane.b32.xlu0 %v2836, 127
        %v2857 = vpop.permute.xlu0 %2856
        %2858 = vrot.lane.b32.xlu0 %v2837, 127
        %v2859 = vpop.permute.xlu0 %2858
        %2860 = vrot.lane.b32.xlu0 %v2838, 127
        %v2861 = vpop.permute.xlu0 %2860
        %2862 = vrot.lane.b32.xlu0 %v2839, 127
        %v2863 = vpop.permute.xlu0 %2862
        %v2864 = vsel %vm311, %v2849, %v2851
        %v2865 = vsel %vm311, %v2853, %v2855
        %v2866 = vsel %vm311, %v2857, %v2859
        %v2867 = vsel %vm311, %v2861, %v2863
        %v2876 = vadd.f32 %v2824, %v2864
        %v2877 = vadd.f32 %v2825, %v2851
        %v2878 = vadd.f32 %v2826, %v2865
        %v2879 = vadd.f32 %v2827, %v2855
        %v2880 = vadd.f32 %v2828, %v2866
        %v2881 = vadd.f32 %v2829, %v2859
        %v2882 = vadd.f32 %v2830, %v2867
        %v2883 = vadd.f32 %v2831, %v2863
        %v2884 = vmul.f32 %v2587, 0.12857261
        %v2885 = vmul.f32 %v2588, 0.12857261
        %v2886 = vmul.f32 %v2589, 0.12857261
        %v2887 = vmul.f32 %v2590, 0.12857261
        %v2888 = vmul.f32 %v2591, 0.12857261
        %v2889 = vmul.f32 %v2592, 0.12857261
        %v2890 = vmul.f32 %v2593, 0.12857261
        %v2891 = vmul.f32 %v2594, 0.12857261
        %2900 = vrot.lane.b32.xlu0 %v2884, 125
        %v2901 = vpop.permute.xlu0 %2900
        %2902 = vrot.lane.b32.xlu0 %v2885, 125
        %v2903 = vpop.permute.xlu0 %2902
        %2904 = vrot.lane.b32.xlu0 %v2886, 125
        %v2905 = vpop.permute.xlu0 %2904
        %2906 = vrot.lane.b32.xlu0 %v2887, 125
        %v2907 = vpop.permute.xlu0 %2906
        %2908 = vrot.lane.b32.xlu0 %v2888, 125
        %v2909 = vpop.permute.xlu0 %2908
        %2910 = vrot.lane.b32.xlu0 %v2889, 125
        %v2911 = vpop.permute.xlu0 %2910
        %2912 = vrot.lane.b32.xlu0 %v2890, 125
        %v2913 = vpop.permute.xlu0 %2912
        %2914 = vrot.lane.b32.xlu0 %v2891, 125
        %v2915 = vpop.permute.xlu0 %2914
        %v2916 = vsel %vm505, %v2901, %v2903
        %v2917 = vsel %vm505, %v2905, %v2907
        %v2918 = vsel %vm505, %v2909, %v2911
        %v2919 = vsel %vm505, %v2913, %v2915
        %v2928 = vadd.f32 %v2876, %v2916
        %v2929 = vadd.f32 %v2877, %v2903
        %v2930 = vadd.f32 %v2878, %v2917
        %v2931 = vadd.f32 %v2879, %v2907
        %v2932 = vadd.f32 %v2880, %v2918
        %v2933 = vadd.f32 %v2881, %v2911
        %v2934 = vadd.f32 %v2882, %v2919
        %v2935 = vadd.f32 %v2883, %v2915
        %v2936 = vmul.f32 %v2635, 0.4432098
        %v2937 = vmul.f32 %v2636, 0.4432098
        %v2938 = vmul.f32 %v2637, 0.4432098
        %v2939 = vmul.f32 %v2638, 0.4432098
        %v2940 = vmul.f32 %v2639, 0.4432098
        %v2941 = vmul.f32 %v2640, 0.4432098
        %v2942 = vmul.f32 %v2641, 0.4432098
        %v2943 = vmul.f32 %v2642, 0.4432098
        %2952 = vrot.lane.b32.xlu0 %v2936, 126
        %v2953 = vpop.permute.xlu0 %2952
        %2954 = vrot.lane.b32.xlu0 %v2937, 126
        %v2955 = vpop.permute.xlu0 %2954
        %2956 = vrot.lane.b32.xlu0 %v2938, 126
        %v2957 = vpop.permute.xlu0 %2956
        %2958 = vrot.lane.b32.xlu0 %v2939, 126
        %v2959 = vpop.permute.xlu0 %2958
        %2960 = vrot.lane.b32.xlu0 %v2940, 126
        %v2961 = vpop.permute.xlu0 %2960
        %2962 = vrot.lane.b32.xlu0 %v2941, 126
        %v2963 = vpop.permute.xlu0 %2962
        %2964 = vrot.lane.b32.xlu0 %v2942, 126
        %v2965 = vpop.permute.xlu0 %2964
        %2966 = vrot.lane.b32.xlu0 %v2943, 126
        %v2967 = vpop.permute.xlu0 %2966
        %v2968 = vsel %vm416, %v2953, %v2955
        %v2969 = vsel %vm416, %v2957, %v2959
        %v2970 = vsel %vm416, %v2961, %v2963
        %v2971 = vsel %vm416, %v2965, %v2967
        %v2980 = vadd.f32 %v2928, %v2968
        %v2981 = vadd.f32 %v2929, %v2955
        %v2982 = vadd.f32 %v2930, %v2969
        %v2983 = vadd.f32 %v2931, %v2959
        %v2984 = vadd.f32 %v2932, %v2970
        %v2985 = vadd.f32 %v2933, %v2963
        %v2986 = vadd.f32 %v2934, %v2971
        %v2987 = vadd.f32 %v2935, %v2967
        %v2988 = vmul.f32 %v2587, -0.025543464
        %v2989 = vmul.f32 %v2588, -0.025543464
        %v2990 = vmul.f32 %v2589, -0.025543464
        %v2991 = vmul.f32 %v2590, -0.025543464
        %v2992 = vmul.f32 %v2591, -0.025543464
        %v2993 = vmul.f32 %v2592, -0.025543464
        %v2994 = vmul.f32 %v2593, -0.025543464
        %v2995 = vmul.f32 %v2594, -0.025543464
        %3004 = vrot.lane.b32.xlu0 %v2988, 124
        %v3005 = vpop.permute.xlu0 %3004
        %3006 = vrot.lane.b32.xlu0 %v2989, 124
        %v3007 = vpop.permute.xlu0 %3006
        %3008 = vrot.lane.b32.xlu0 %v2990, 124
        %v3009 = vpop.permute.xlu0 %3008
        %3010 = vrot.lane.b32.xlu0 %v2991, 124
        %v3011 = vpop.permute.xlu0 %3010
        %3012 = vrot.lane.b32.xlu0 %v2992, 124
        %v3013 = vpop.permute.xlu0 %3012
        %3014 = vrot.lane.b32.xlu0 %v2993, 124
        %v3015 = vpop.permute.xlu0 %3014
        %3016 = vrot.lane.b32.xlu0 %v2994, 124
        %v3017 = vpop.permute.xlu0 %3016
        %3018 = vrot.lane.b32.xlu0 %v2995, 124
        %v3019 = vpop.permute.xlu0 %3018
        %v3020 = vsel %vm578, %v3005, %v3007
        %v3021 = vsel %vm578, %v3009, %v3011
        %v3022 = vsel %vm578, %v3013, %v3015
        %v3023 = vsel %vm578, %v3017, %v3019
        %v3032 = vadd.f32 %v2980, %v3020
        %v3033 = vadd.f32 %v2981, %v3007
        %v3034 = vadd.f32 %v2982, %v3021
        %v3035 = vadd.f32 %v2983, %v3011
        %v3036 = vadd.f32 %v2984, %v3022
        %v3037 = vadd.f32 %v2985, %v3015
        %v3038 = vadd.f32 %v2986, %v3023
        %v3039 = vadd.f32 %v2987, %v3019
        %v3040 = vmul.f32 %v2635, -0.057657376
        %v3041 = vmul.f32 %v2636, -0.057657376
        %v3042 = vmul.f32 %v2637, -0.057657376
        %v3043 = vmul.f32 %v2638, -0.057657376
        %v3044 = vmul.f32 %v2639, -0.057657376
        %v3045 = vmul.f32 %v2640, -0.057657376
        %v3046 = vmul.f32 %v2641, -0.057657376
        %v3047 = vmul.f32 %v2642, -0.057657376
        %3056 = vrot.lane.b32.xlu0 %v3040, 125
        %v3057 = vpop.permute.xlu0 %3056
        %3058 = vrot.lane.b32.xlu0 %v3041, 125
        %v3059 = vpop.permute.xlu0 %3058
        %3060 = vrot.lane.b32.xlu0 %v3042, 125
        %v3061 = vpop.permute.xlu0 %3060
        %3062 = vrot.lane.b32.xlu0 %v3043, 125
        %v3063 = vpop.permute.xlu0 %3062
        %3064 = vrot.lane.b32.xlu0 %v3044, 125
        %v3065 = vpop.permute.xlu0 %3064
        %3066 = vrot.lane.b32.xlu0 %v3045, 125
        %v3067 = vpop.permute.xlu0 %3066
        %3068 = vrot.lane.b32.xlu0 %v3046, 125
        %v3069 = vpop.permute.xlu0 %3068
        %3070 = vrot.lane.b32.xlu0 %v3047, 125
        %v3071 = vpop.permute.xlu0 %3070
        %v3072 = vsel %vm505, %v3057, %v3059
        %v3073 = vsel %vm505, %v3061, %v3063
        %v3074 = vsel %vm505, %v3065, %v3067
        %v3075 = vsel %vm505, %v3069, %v3071
        %v3084 = vadd.f32 %v3032, %v3072
        %v3085 = vadd.f32 %v3033, %v3059
        %v3086 = vadd.f32 %v3034, %v3073
        %v3087 = vadd.f32 %v3035, %v3063
        %v3088 = vadd.f32 %v3036, %v3074
        %v3089 = vadd.f32 %v3037, %v3067
        %v3090 = vadd.f32 %v3038, %v3075
        %v3091 = vadd.f32 %v3039, %v3071
        %v3092 = vmul.f32 %v2587, 0.0020289666
        %v3093 = vmul.f32 %v2588, 0.0020289666
        %v3094 = vmul.f32 %v2589, 0.0020289666
        %v3095 = vmul.f32 %v2590, 0.0020289666
        %v3096 = vmul.f32 %v2591, 0.0020289666
        %v3097 = vmul.f32 %v2592, 0.0020289666
        %v3098 = vmul.f32 %v2593, 0.0020289666
        %v3099 = vmul.f32 %v2594, 0.0020289666
        %3108 = vrot.lane.b32.xlu0 %v3092, 123
        %v3109 = vpop.permute.xlu0 %3108
        %3110 = vrot.lane.b32.xlu0 %v3093, 123
        %v3111 = vpop.permute.xlu0 %3110
        %3112 = vrot.lane.b32.xlu0 %v3094, 123
        %v3113 = vpop.permute.xlu0 %3112
        %3114 = vrot.lane.b32.xlu0 %v3095, 123
        %v3115 = vpop.permute.xlu0 %3114
        %3116 = vrot.lane.b32.xlu0 %v3096, 123
        %v3117 = vpop.permute.xlu0 %3116
        %3118 = vrot.lane.b32.xlu0 %v3097, 123
        %v3119 = vpop.permute.xlu0 %3118
        %3120 = vrot.lane.b32.xlu0 %v3098, 123
        %v3121 = vpop.permute.xlu0 %3120
        %3122 = vrot.lane.b32.xlu0 %v3099, 123
        %v3123 = vpop.permute.xlu0 %3122
        %v3124 = vsel %vm659, %v3109, %v3111
        %v3125 = vsel %vm659, %v3113, %v3115
        %v3126 = vsel %vm659, %v3117, %v3119
        %v3127 = vsel %vm659, %v3121, %v3123
        %v3136 = vadd.f32 %v3084, %v3124
        %v3137 = vadd.f32 %v3085, %v3111
        %v3138 = vadd.f32 %v3086, %v3125
        %v3139 = vadd.f32 %v3087, %v3115
        %v3140 = vadd.f32 %v3088, %v3126
        %v3141 = vadd.f32 %v3089, %v3119
        %v3142 = vadd.f32 %v3090, %v3127
        %v3143 = vadd.f32 %v3091, %v3123
        %v3144 = vmul.f32 %v2635, 0.009389464
        %v3145 = vmul.f32 %v2636, 0.009389464
        %v3146 = vmul.f32 %v2637, 0.009389464
        %v3147 = vmul.f32 %v2638, 0.009389464
        %v3148 = vmul.f32 %v2639, 0.009389464
        %v3149 = vmul.f32 %v2640, 0.009389464
        %v3150 = vmul.f32 %v2641, 0.009389464
        %v3151 = vmul.f32 %v2642, 0.009389464
        %3160 = vrot.lane.b32.xlu0 %v3144, 124
        %v3161 = vpop.permute.xlu0 %3160
        %3162 = vrot.lane.b32.xlu0 %v3145, 124
        %v3163 = vpop.permute.xlu0 %3162
        %3164 = vrot.lane.b32.xlu0 %v3146, 124
        %v3165 = vpop.permute.xlu0 %3164
        %3166 = vrot.lane.b32.xlu0 %v3147, 124
        %v3167 = vpop.permute.xlu0 %3166
        %3168 = vrot.lane.b32.xlu0 %v3148, 124
        %v3169 = vpop.permute.xlu0 %3168
        %3170 = vrot.lane.b32.xlu0 %v3149, 124
        %v3171 = vpop.permute.xlu0 %3170
        %3172 = vrot.lane.b32.xlu0 %v3150, 124
        %v3173 = vpop.permute.xlu0 %3172
        %3174 = vrot.lane.b32.xlu0 %v3151, 124
        %v3175 = vpop.permute.xlu0 %3174
        %v3176 = vsel %vm578, %v3161, %v3163
        %v3177 = vsel %vm578, %v3165, %v3167
        %v3178 = vsel %vm578, %v3169, %v3171
        %v3179 = vsel %vm578, %v3173, %v3175
        %v3188 = vadd.f32 %v3136, %v3176
        %v3189 = vadd.f32 %v3137, %v3163
        %v3190 = vadd.f32 %v3138, %v3177
        %v3191 = vadd.f32 %v3139, %v3167
        %v3192 = vadd.f32 %v3140, %v3178
        %v3193 = vadd.f32 %v3141, %v3171
        %v3194 = vadd.f32 %v3142, %v3179
        %v3195 = vadd.f32 %v3143, %v3175
        %3204 = vrot.lane.b32.xlu0 %v3188, 126
        %v3205 = vpop.permute.xlu0 %3204
        %3206 = vrot.lane.b32.xlu0 %v3189, 126
        %v3207 = vpop.permute.xlu0 %3206
        %3208 = vrot.lane.b32.xlu0 %v3190, 126
        %v3209 = vpop.permute.xlu0 %3208
        %3210 = vrot.lane.b32.xlu0 %v3191, 126
        %v3211 = vpop.permute.xlu0 %3210
        %3212 = vrot.lane.b32.xlu0 %v3192, 126
        %v3213 = vpop.permute.xlu0 %3212
        %3214 = vrot.lane.b32.xlu0 %v3193, 126
        %v3215 = vpop.permute.xlu0 %3214
        %3216 = vrot.lane.b32.xlu0 %v3194, 126
        %v3217 = vpop.permute.xlu0 %3216
        %3218 = vrot.lane.b32.xlu0 %v3195, 126
        %v3219 = vpop.permute.xlu0 %3218
        %v3220 = vsel %vm416, %v3205, %v3207
        %v3221 = vsel %vm416, %v3209, %v3211
        %v3222 = vsel %vm416, %v3213, %v3215
        %v3223 = vsel %vm416, %v3217, %v3219
        %3228 = vst [vmem:[%s198] sm:$0xff] %v3220
        %3229 = vst [vmem:[%s198 + $0x8] sm:$0xff] %v3221
        %3230 = vst [vmem:[%s198 + $0x10] sm:$0xff] %v3222
        %3231 = vst [vmem:[%s198 + $0x18] sm:$0xff] %v3223
        %s3232 = sand.u32 %s103, 1
        %s3233 = scalar_lea.sflag [#allocation3], %s3232
        %s3234 = sand.u32 %s103, 1
        %s3235 = smul.addr %s3234, 32
        %s3236 = scalar_lea.vmem [#allocation2], %s3235
        // Predicated region
        $region33: #{tpu_custom_call.1} parent=31 // pred_check
          %p3237 = pneg %p113
        $region34: #{tpu_custom_call.1} parent=31 // pred_check_branch
          %3239 = sbr.rel (%p3237) target = $region36
        $region35: #{tpu_custom_call.1} parent=31 // pred_region
          %s3240 = smul.u32 4, %s17
          %s3242 = ssub.s32 512, 512
          %3243 = vsyncadd %s3233, %s3242
          %s3244 = smul.addr %s3240, 128
          %s3245 = scalar_lea.hbm %s3, %s3244
          %s3246 = sshll.u32 %s3236, 4
          %s3247 = int_to_ptr.vmem [resolvable:$true] %s3246
          %3252 = dma.vmem_to_hbm [thread:$0]  %s3247, 512, %s3245, %s3233, 128, 128, 8
        $region36: #{tpu_custom_call.1} parent=31 // pred_fallthru
          _
      $region32: #{tpu_custom_call.1} parent=5 // pred_fallthru
        _
      %p3253 = scmp.le.s32.totalorder 2, %s12
      // Predicated region
      $region37: #{tpu_custom_call.1} parent=5 // pred_check
        %p3254 = pneg %p3253
      $region38: #{tpu_custom_call.1} parent=5 // pred_check_branch
        %3256 = sbr.rel (%p3254) target = $region40
      $region39: #{tpu_custom_call.1} parent=5 // pred_region
        %s3257 = ssub.s32 %s12, 2
        // Predicated region
        $region41: #{tpu_custom_call.1} parent=39 // pred_check
          %p3258 = pneg %p119
        $region42: #{tpu_custom_call.1} parent=39 // pred_check_branch
          %3260 = sbr.rel (%p3258) target = $region44
        $region43: #{tpu_custom_call.1} parent=39 // pred_region
          %s3261 = sand.u32 %s104, 1
          %s3262 = scalar_lea.sflag [#allocation3], %s3261
          %s3263 = sand.u32 %s104, 1
          %s3264 = smul.addr %s3263, 32
          %s3265 = scalar_lea.vmem [#allocation2], %s3264
          %3266 = dma.done %s3262, 512
        $region44: #{tpu_custom_call.1} parent=39 // pred_fallthru
          _
      $region40: #{tpu_custom_call.1} parent=5 // pred_fallthru
        _
    $region6: #{tpu_custom_call.1} parent=1 // loop_footer
      %s16 = sadd.s32 1, %s12
    $region7: #{tpu_custom_call.1} parent=1 // loop_footer_branch
      %11 = sbr.rel target = $region3
    $region8: #{tpu_custom_call.1} parent=1 // loop_exit
      _
    %3267 = vsyncpa [#allocation3], 1
    %s3268 = scalar_lea.sflag [#allocation3], 1
    %3269 = vsyncpa %s3268, 1

</llo_original>
